<compile_context>
chip_gen: v7x
topology: tpu7x:2x2x1
jax: 0.10.0
libtpu: 0.0.40
codegen_flags: <defaults>
</compile_context>

<pallas_src>
import math
import functools

import numpy as np
import jax
import jax.numpy as jnp
from jax.experimental import pallas as pl
from jax.experimental.pallas import tpu as pltpu


# Row indices inside the packed per-layer bias slab (b64) and weight slab (wdd).
_BO, _A1B1, _A1B2, _LN1G, _LN1B, _FFB2, _A2B1, _A2B2, _LN2G, _LN2B = range(10)
_WO, _A1W1, _A1W2, _A2W1, _A2W2 = range(5)


# ------------------------------ fused kernel --------------------------------

def _fused_model_kernel(x_ref, pe_ref,
                        wqkv_ref, bqkv_ref, wdd_ref,
                        ffw1_ref, ffb1_ref, ffw2_ref,
                        b64_ref, fcw_ref, fcb_ref,
                        out_ref,
                        *, nhead, num_layers, eps):
    """Whole forward pass for one block of batch rows, fully VMEM-resident.

    x_ref  : (Bblk, S, D)        pe_ref : (1, S, D)
    wqkv   : (L, D, 3D) bf16     bqkv   : (L, 1, 3D) f32
    wdd    : (L*5, D, D) bf16    -- [wo, a1w1p, a1w2p, a2w1p, a2w2p] per layer
    ffw1   : (L, D, F) bf16      ffb1   : (L, 1, F) f32
    ffw2   : (L, F, D) bf16
    b64    : (L, 10, D) f32      -- [bo,a1b1p,a1b2,ln1g,ln1b,ffb2,a2b1p,a2b2,ln2g,ln2b]
    fcw    : (C, S, D) f32       fcb    : (1, C) f32
    out_ref: (Bblk, 1, C)
    """
    Bblk, S, D = x_ref.shape
    H = nhead
    Dh = D // H
    C = fcb_ref.shape[-1]
    scale = 1.0 / math.sqrt(Dh)
    f32, bf16 = jnp.float32, jnp.bfloat16

    def mm(a, w, b=None):
        r = jnp.dot(a.astype(bf16), w, preferred_element_type=f32)
        return r if b is None else r + b

    def layernorm(z, g, b):
        mu = jnp.mean(z, axis=-1, keepdims=True)
        var = jnp.mean((z - mu) ** 2, axis=-1, keepdims=True)
        return (z - mu) * jax.lax.rsqrt(var + eps) * g + b

    def gelu(z):
        # tanh-form GELU -> EUP slot (otherwise idle); deviation from the exact
        # erf GELU is far below the test tolerance at these magnitudes.
        return jax.nn.gelu(z, approximate=True)

    # --- positional encoding add (dropout = identity in eval mode) ---
    # Pack all batch rows of this block into one (Bblk*S, D) activation slab so
    # every big matmul is lane/sublane dense; heads/layers statically unrolled.
    pe = pe_ref[0].astype(f32)                                        # (S, D)
    rows = [x_ref[b].astype(f32) + pe for b in range(Bblk)]
    h = rows[0] if Bblk == 1 else jnp.concatenate(rows, axis=0)       # (BS, D)

    for l in range(num_layers):
        bl = b64_ref[l]                                               # (10, D)

        # ---- fused QKV projection: one lane-dense matmul for all heads ----
        qkv = mm(h, wqkv_ref[l], bqkv_ref[l])                         # (BS, 3D)

        # ---- per-head attention (tiny, mutually independent matmuls) ----
        attn_parts = []
        for b in range(Bblk):
            qkv_b = qkv[b * S:(b + 1) * S]                            # (S, 3D)
            heads = []
            for hh in range(H):
                q = qkv_b[:, hh * Dh:(hh + 1) * Dh] * scale
                k = qkv_b[:, D + hh * Dh:D + (hh + 1) * Dh]
                v = qkv_b[:, 2 * D + hh * Dh:2 * D + (hh + 1) * Dh]
                sc = jax.lax.dot_general(
                    q.astype(bf16), k.astype(bf16),
                    (((1,), (1,)), ((), ())),
                    preferred_element_type=f32)                       # (S, S)
                sc = sc - jnp.max(sc, axis=-1, keepdims=True)
                p = jnp.exp(sc)
                p = p * pl.reciprocal(jnp.sum(p, axis=-1, keepdims=True),
                                      approx=True)
                heads.append(jnp.dot(p.astype(bf16), v.astype(bf16),
                                     preferred_element_type=f32))     # (S, Dh)
            attn_parts.append(jnp.concatenate(heads, axis=1))         # (S, D)
        attn_cat = (attn_parts[0] if Bblk == 1
                    else jnp.concatenate(attn_parts, axis=0))         # (BS, D)

        # ---- single lane-dense output projection ----
        attn = mm(attn_cat, wdd_ref[5 * l + _WO], bl[_BO:_BO + 1])

        # ---- adapter1: attn + W2(gelu(W1 attn)) (weights zero-padded to DxD;
        #      exact because gelu(0) == 0 and padded W2 rows are zero) ----
        z = gelu(mm(attn, wdd_ref[5 * l + _A1W1], bl[_A1B1:_A1B1 + 1]))
        src2 = attn + mm(z, wdd_ref[5 * l + _A1W2], bl[_A1B2:_A1B2 + 1])
        h = layernorm(h + src2, bl[_LN1G:_LN1G + 1], bl[_LN1B:_LN1B + 1])

        # ---- feed-forward (GELU activation) ----
        f = gelu(mm(h, ffw1_ref[l], ffb1_ref[l]))
        f = mm(f, ffw2_ref[l], bl[_FFB2:_FFB2 + 1])

        # ---- adapter2 ----
        z = gelu(mm(f, wdd_ref[5 * l + _A2W1], bl[_A2B1:_A2B1 + 1]))
        src2 = f + mm(z, wdd_ref[5 * l + _A2W2], bl[_A2B2:_A2B2 + 1])
        h = layernorm(h + src2, bl[_LN2G:_LN2G + 1], bl[_LN2B:_LN2B + 1])

    # ---- classifier: VPU multiply + reduce per class (no lane-sparse matmul) --
    fcb = fcb_ref[...].astype(f32)                                    # (1, C)
    for b in range(Bblk):
        hb = h[b * S:(b + 1) * S]                                     # (S, D)
        cls = []
        for c in range(C):
            prod = hb * fcw_ref[c]                                    # (S, D)
            red = jnp.sum(jnp.sum(prod, axis=1, keepdims=True),
                          axis=0, keepdims=True)                      # (1, 1)
            cls.append(red)
        logits = fcb + jnp.concatenate(cls, axis=1)                   # (1, C)
        out_ref[b] = logits.astype(out_ref.dtype)


# -------------------------------- wrapper ------------------------------------

def model_forward(x, params):
    B, S, D = x.shape
    H = int(params["nhead"])
    L = int(params["num_layers"])
    C = params["fcb"].shape[-1]
    A = params["a1w1"].shape[-1]
    bf16 = jnp.bfloat16

    # ---- pack weights into a few dense, bf16 slabs (layout-only transform) ----
    wqkv = jnp.concatenate([params["wq"], params["wk"], params["wv"]],
                           axis=-1).astype(bf16)                      # (L, D, 3D)
    bqkv = jnp.concatenate([params["bq"], params["bk"], params["bv"]],
                           axis=-1)[:, None, :]                       # (L, 1, 3D)

    pad_w_in = lambda w: jnp.pad(w, ((0, 0), (0, 0), (0, D - A)))     # (L,D,A)->(L,D,D)
    pad_w_out = lambda w: jnp.pad(w, ((0, 0), (0, D - A), (0, 0)))    # (L,A,D)->(L,D,D)
    pad_b = lambda b: jnp.pad(b, ((0, 0), (0, D - A)))                # (L,A)->(L,D)

    wdd = jnp.stack([params["wo"],
                     pad_w_in(params["a1w1"]), pad_w_out(params["a1w2"]),
                     pad_w_in(params["a2w1"]), pad_w_out(params["a2w2"])],
                    axis=1).reshape(L * 5, D, D).astype(bf16)         # (L*5, D, D)
    b64 = jnp.stack([params["bo"], pad_b(params["a1b1"]), params["a1b2"],
                     params["ln1g"], params["ln1b"], params["ffb2"],
                     pad_b(params["a2b1"]), params["a2b2"],
                     params["ln2g"], params["ln2b"]], axis=1)         # (L, 10, D)

    ffw1 = params["ffw1"].astype(bf16)                                # (L, D, F)
    ffb1 = params["ffb1"][:, None, :]                                 # (L, 1, F)
    ffw2 = params["ffw2"].astype(bf16)                                # (L, F, D)

    # classifier weights -> (C, S, D), preserving the (s, d) row-major flatten
    # order so logits match h.reshape(B, S*D) @ fcw.
    fcw_t = params["fcw"].reshape(S, D, C).transpose(2, 0, 1)         # (C, S, D)
    fcb = params["fcb"].reshape(1, C)

    # ---- batch strategy per TPU generation ----
    kind = ""
    try:
        kind = (jax.devices()[0].device_kind or "").lower()
    except Exception:
        pass
    single_tc = any(t in kind for t in ("v5e", "v6e", "lite"))
    bb = B if single_tc else 1          # fold batch on single-TC chips
    grid = (B // bb,)

    def const_spec(a):
        # full-array block, constant block index -> weight stays VMEM-resident.
        return pl.BlockSpec(a.shape, lambda i, n=a.ndim: (0,) * n)

    weights = (wqkv, bqkv, wdd, ffw1, ffb1, ffw2, b64, fcw_t, fcb)
    in_specs = ([pl.BlockSpec((bb, S, D), lambda i: (i, 0, 0)),        # x
                 pl.BlockSpec((1, S, D), lambda i: (0, 0, 0))]         # pe[:, :S, :]
                + [const_spec(w) for w in weights])

    kernel = functools.partial(_fused_model_kernel,
                               nhead=H, num_layers=L, eps=1e-5)

    out = pl.pallas_call(
        kernel,
        grid=grid,
        in_specs=in_specs,
        out_specs=pl.BlockSpec((bb, 1, C), lambda i: (i, 0, 0)),
        out_shape=jax.ShapeDtypeStruct((B, 1, C), x.dtype),
        compiler_params=pltpu.CompilerParams(
            dimension_semantics=("parallel",)),  # batch across cores on v7x
    )(x, params["pe"], *weights)
    return out.reshape(B, C)


# --------------------------- pure-JAX reference -------------------------------

def reference_forward(x, params):
    B, S, D = x.shape
    H = int(params["nhead"])
    L = int(params["num_layers"])
    Dh = D // H
    scale = 1.0 / math.sqrt(Dh)

    def ln(z, g, b):
        mu = jnp.mean(z, axis=-1, keepdims=True)
        var = jnp.mean((z - mu) ** 2, axis=-1, keepdims=True)
        return (z - mu) * jax.lax.rsqrt(var + 1e-5) * g + b

    def split_heads(t):
        return t.reshape(B, S, H, Dh).transpose(0, 2, 1, 3)

    h = x + params["pe"][:, :S, :]
    for l in range(L):
        q = split_heads(h @ params["wq"][l] + params["bq"][l]) * scale
        k = split_heads(h @ params["wk"][l] + params["bk"][l])
        v = split_heads(h @ params["wv"][l] + params["bv"][l])
        s = jnp.einsum("bhqd,bhkd->bhqk", q, k)
        p = jax.nn.softmax(s, axis=-1)
        o = jnp.einsum("bhqk,bhkd->bhqd", p, v)
        attn = (o.transpose(0, 2, 1, 3).reshape(B, S, D) @ params["wo"][l]
                + params["bo"][l])
        z = jax.nn.gelu(attn @ params["a1w1"][l] + params["a1b1"][l],
                        approximate=False)
        src2 = attn + z @ params["a1w2"][l] + params["a1b2"][l]
        h = ln(h + src2, params["ln1g"][l], params["ln1b"][l])
        f = jax.nn.gelu(h @ params["ffw1"][l] + params["ffb1"][l],
                        approximate=False)
        f = f @ params["ffw2"][l] + params["ffb2"][l]
        z = jax.nn.gelu(f @ params["a2w1"][l] + params["a2b1"][l],
                        approximate=False)
        src2 = f + z @ params["a2w2"][l] + params["a2b2"][l]
        h = ln(h + src2, params["ln2g"][l], params["ln2b"][l])
    flat = h.reshape(B, S * D)
    return flat @ params["fcw"] + params["fcb"]


# ------------------------------ initialization -------------------------------

def make_positional_encoding(d_model, max_len):
    position = jnp.arange(max_len, dtype=jnp.float32)[:, None]
    div_term = jnp.exp(jnp.arange(0, d_model, 2, dtype=jnp.float32)
                       * (-math.log(10000.0) / d_model))
    pe = jnp.zeros((max_len, d_model), dtype=jnp.float32)
    pe = pe.at[:, 0::2].set(jnp.sin(position * div_term))
    pe = pe.at[:, 1::2].set(jnp.cos(position * div_term))
    return pe[None, :, :]                                 # (1, max_len, d_model)


def init_params(key, *, dim, nhead, dim_ff, adapter_size, num_layers, seq_len,
                num_classes=2, max_len=64):
    def dense(k, din, dout):
        kw, kb = jax.random.split(k)
        w = jax.random.normal(kw, (din, dout), jnp.float32) * 0.02
        b = jax.random.normal(kb, (dout,), jnp.float32) * 0.02
        return w, b

    names = ("wq", "bq", "wk", "bk", "wv", "bv", "wo", "bo",
             "a1w1", "a1b1", "a1w2", "a1b2", "ln1g", "ln1b",
             "ffw1", "ffb1", "ffw2", "ffb2",
             "a2w1", "a2b1", "a2w2", "a2b2", "ln2g", "ln2b")
    acc = {n: [] for n in names}
    for _ in range(num_layers):
        key, *ks = jax.random.split(key, 11)
        layer_defs = (
            ("wq", "bq", ks[0], dim, dim), ("wk", "bk", ks[1], dim, dim),
            ("wv", "bv", ks[2], dim, dim), ("wo", "bo", ks[3], dim, dim),
            ("a1w1", "a1b1", ks[4], dim, adapter_size),
            ("a1w2", "a1b2", ks[5], adapter_size, dim),
            ("ffw1", "ffb1", ks[6], dim, dim_ff),
            ("ffw2", "ffb2", ks[7], dim_ff, dim),
            ("a2w1", "a2b1", ks[8], dim, adapter_size),
            ("a2w2", "a2b2", ks[9], adapter_size, dim))
        for nm_w, nm_b, kk, din, dout in layer_defs:
            w, b = dense(kk, din, dout)
            acc[nm_w].append(w)
            acc[nm_b].append(b)
        # LayerNorm affine params: PyTorch inits to ones/zeros; perturb slightly
        # so the test exercises the gamma/beta application path.
        key, kg1, kb1, kg2, kb2 = jax.random.split(key, 5)
        acc["ln1g"].append(1.0 + 0.02 * jax.random.normal(kg1, (dim,), jnp.float32))
        acc["ln1b"].append(0.02 * jax.random.normal(kb1, (dim,), jnp.float32))
        acc["ln2g"].append(1.0 + 0.02 * jax.random.normal(kg2, (dim,), jnp.float32))
        acc["ln2b"].append(0.02 * jax.random.normal(kb2, (dim,), jnp.float32))

    params = {n: jnp.stack(v, axis=0) for n, v in acc.items()}
    params["nhead"] = nhead
    params["num_layers"] = num_layers
    params["pe"] = make_positional_encoding(dim, max_len)
    key, kfc = jax.random.split(key)
    fcw, fcb = dense(kfc, dim * seq_len, num_classes)
    params["fcw"] = fcw                                   # (S*D, C)
    params["fcb"] = fcb                                   # (C,)
    return params


# ---------------------------------- main -------------------------------------

if __name__ == "__main__":
    # Small shapes consistent with the module: batch=2, seq(window_size)=8,
    # d_model=64, nhead=8 (head_dim=8), dim_feedforward=128, adapter_size=32,
    # num_layers=2.  Dropout layers are identity (eval mode).
    B, S, D = 2, 8, 64
    NHEAD, DIM_FF, ADAPTER, LAYERS = 8, 128, 32, 2

    key = jax.random.PRNGKey(0)
    key, kx, kp = jax.random.split(key, 3)
    x = jax.random.normal(kx, (B, S, D), jnp.float32)
    params = init_params(
        kp, dim=D, nhead=NHEAD, dim_ff=DIM_FF, adapter_size=ADAPTER,
        num_layers=LAYERS, seq_len=S, num_classes=2, max_len=64,
    )

    out = jax.block_until_ready(model_forward(x, params))
    assert out.shape == (B, 2), out.shape
    assert bool(jnp.all(jnp.isfinite(out)))

    # Correctness check against a pure-JAX f32 reference (tolerance covers bf16
    # matmuls, tanh-GELU, and the approx-EUP softmax reciprocal).
    ref = jax.block_until_ready(reference_forward(x, params))
    np.testing.assert_allclose(np.asarray(out), np.asarray(ref),
                               rtol=3e-2, atol=3e-2)

    print("KERNEL_OK")
</pallas_src>

<mosaic_0001>
module attributes {stable_mosaic.version = 11 : i64} {
  func.func @_fused_model_kernel(%arg0: i32, %arg1: memref<1x8x64xf32, #tpu.memory_space<vmem>>, %arg2: memref<1x8x64xf32, #tpu.memory_space<vmem>>, %arg3: memref<2x64x192xbf16, #tpu.memory_space<vmem>>, %arg4: memref<2x1x192xf32, #tpu.memory_space<vmem>>, %arg5: memref<10x64x64xbf16, #tpu.memory_space<vmem>>, %arg6: memref<2x64x128xbf16, #tpu.memory_space<vmem>>, %arg7: memref<2x1x128xf32, #tpu.memory_space<vmem>>, %arg8: memref<2x128x64xbf16, #tpu.memory_space<vmem>>, %arg9: memref<2x10x64xf32, #tpu.memory_space<vmem>>, %arg10: memref<2x8x64xf32, #tpu.memory_space<vmem>>, %arg11: memref<1x2xf32, #tpu.memory_space<vmem>>, %arg12: memref<1x1x2xf32, #tpu.memory_space<vmem>>) attributes {dimension_semantics = [#tpu.dimension_semantics<parallel>], iteration_bounds = array<i64: 2>, scalar_prefetch = 0 : i64, scratch_operands = 0 : i64, tpu.core_type = #tpu.core_type<tc>, window_params = [{transform_indices = @transform_0, window_bounds = array<i64: 1, 8, 64>}, {transform_indices = @transform_1, window_bounds = array<i64: 1, 8, 64>}, {pipeline_mode = #tpu.pipeline_mode<synchronous>, transform_indices = @transform_2, window_bounds = array<i64: 2, 64, 192>}, {pipeline_mode = #tpu.pipeline_mode<synchronous>, transform_indices = @transform_3, window_bounds = array<i64: 2, 1, 192>}, {pipeline_mode = #tpu.pipeline_mode<synchronous>, transform_indices = @transform_4, window_bounds = array<i64: 10, 64, 64>}, {pipeline_mode = #tpu.pipeline_mode<synchronous>, transform_indices = @transform_5, window_bounds = array<i64: 2, 64, 128>}, {pipeline_mode = #tpu.pipeline_mode<synchronous>, transform_indices = @transform_6, window_bounds = array<i64: 2, 1, 128>}, {pipeline_mode = #tpu.pipeline_mode<synchronous>, transform_indices = @transform_7, window_bounds = array<i64: 2, 128, 64>}, {pipeline_mode = #tpu.pipeline_mode<synchronous>, transform_indices = @transform_8, window_bounds = array<i64: 2, 10, 64>}, {pipeline_mode = #tpu.pipeline_mode<synchronous>, transform_indices = @transform_9, window_bounds = array<i64: 2, 8, 64>}, {pipeline_mode = #tpu.pipeline_mode<synchronous>, transform_indices = @transform_10, window_bounds = array<i64: 1, 2>}, {transform_indices = @transform_11, window_bounds = array<i64: 1, 1, 2>}]} {
    %c0 = arith.constant 0 : index
    %c0_0 = arith.constant 0 : index
    %c0_1 = arith.constant 0 : index
    %0 = vector.load %arg2[%c0, %c0_0, %c0_1] : memref<1x8x64xf32, #tpu.memory_space<vmem>>, vector<1x8x64xf32>
    %1 = vector.shape_cast %0 : vector<1x8x64xf32> to vector<8x64xf32>
    %c0_2 = arith.constant 0 : index
    %c0_3 = arith.constant 0 : index
    %c0_4 = arith.constant 0 : index
    %2 = vector.load %arg1[%c0_2, %c0_3, %c0_4] : memref<1x8x64xf32, #tpu.memory_space<vmem>>, vector<1x8x64xf32>
    %3 = vector.shape_cast %2 : vector<1x8x64xf32> to vector<8x64xf32>
    %4 = arith.addf %3, %1 : vector<8x64xf32>
    %c0_5 = arith.constant 0 : index
    %c0_6 = arith.constant 0 : index
    %c0_7 = arith.constant 0 : index
    %5 = vector.load %arg9[%c0_5, %c0_6, %c0_7] : memref<2x10x64xf32, #tpu.memory_space<vmem>>, vector<1x10x64xf32>
    %6 = vector.shape_cast %5 : vector<1x10x64xf32> to vector<10x64xf32>
    %c0_8 = arith.constant 0 : index
    %c0_9 = arith.constant 0 : index
    %c0_10 = arith.constant 0 : index
    %7 = vector.load %arg3[%c0_8, %c0_9, %c0_10] : memref<2x64x192xbf16, #tpu.memory_space<vmem>>, vector<1x64x192xbf16>
    %8 = vector.shape_cast %7 : vector<1x64x192xbf16> to vector<64x192xbf16>
    %c0_11 = arith.constant 0 : index
    %c0_12 = arith.constant 0 : index
    %c0_13 = arith.constant 0 : index
    %9 = vector.load %arg4[%c0_11, %c0_12, %c0_13] : memref<2x1x192xf32, #tpu.memory_space<vmem>>, vector<1x1x192xf32>
    %10 = vector.shape_cast %9 : vector<1x1x192xf32> to vector<1x192xf32>
    %11 = arith.truncf %4 : vector<8x64xf32> to vector<8x64xbf16>
    %cst = arith.constant dense<0.000000e+00> : vector<8x192xf32>
    %12 = tpu.matmul %11, %8, %cst {dimension_numbers = #tpu.dot_dimension_numbers<[1], [0], [0], [1], [0, 0, 1, 1], [], []>} : vector<8x64xbf16>, vector<64x192xbf16>, vector<8x192xf32> -> vector<8x192xf32>
    %13 = vector.broadcast %10 : vector<1x192xf32> to vector<8x192xf32>
    %14 = arith.addf %12, %13 : vector<8x192xf32>
    %15 = vector.extract_strided_slice %14 {offsets = [0, 0], sizes = [8, 8], strides = [1, 1]} : vector<8x192xf32> to vector<8x8xf32>
    %cst_14 = arith.constant 0.353553385 : f32
    %16 = vector.broadcast %cst_14 : f32 to vector<8x8xf32>
    %17 = arith.mulf %15, %16 : vector<8x8xf32>
    %18 = vector.extract_strided_slice %14 {offsets = [0, 64], sizes = [8, 8], strides = [1, 1]} : vector<8x192xf32> to vector<8x8xf32>
    %19 = vector.extract_strided_slice %14 {offsets = [0, 128], sizes = [8, 8], strides = [1, 1]} : vector<8x192xf32> to vector<8x8xf32>
    %20 = arith.truncf %17 : vector<8x8xf32> to vector<8x8xbf16>
    %21 = arith.truncf %18 : vector<8x8xf32> to vector<8x8xbf16>
    %cst_15 = arith.constant dense<0.000000e+00> : vector<8x8xf32>
    %22 = tpu.matmul %20, %21, %cst_15 {dimension_numbers = #tpu.dot_dimension_numbers<[1], [1], [0], [0], [0, 0, 1, 0], [], []>} : vector<8x8xbf16>, vector<8x8xbf16>, vector<8x8xf32> -> vector<8x8xf32>
    %cst_16 = arith.constant dense<0xFF800000> : vector<8xf32>
    %23 = vector.multi_reduction <maximumf>, %22, %cst_16 [1] : vector<8x8xf32> to vector<8xf32>
    %24 = vector.shape_cast %23 : vector<8xf32> to vector<8x1xf32>
    %25 = vector.broadcast %24 : vector<8x1xf32> to vector<8x8xf32>
    %26 = arith.subf %22, %25 : vector<8x8xf32>
    %27 = math.exp %26 : vector<8x8xf32>
    %cst_17 = arith.constant dense<0.000000e+00> : vector<8xf32>
    %28 = vector.multi_reduction <add>, %27, %cst_17 [1] : vector<8x8xf32> to vector<8xf32>
    %29 = vector.shape_cast %28 : vector<8xf32> to vector<8x1xf32>
    %30 = tpu.reciprocal %29 {approx = true} : vector<8x1xf32> -> vector<8x1xf32>
    %31 = vector.broadcast %30 : vector<8x1xf32> to vector<8x8xf32>
    %32 = arith.mulf %27, %31 : vector<8x8xf32>
    %33 = arith.truncf %32 : vector<8x8xf32> to vector<8x8xbf16>
    %34 = arith.truncf %19 : vector<8x8xf32> to vector<8x8xbf16>
    %cst_18 = arith.constant dense<0.000000e+00> : vector<8x8xf32>
    %35 = tpu.matmul %33, %34, %cst_18 {dimension_numbers = #tpu.dot_dimension_numbers<[1], [0], [0], [1], [0, 0, 1, 1], [], []>} : vector<8x8xbf16>, vector<8x8xbf16>, vector<8x8xf32> -> vector<8x8xf32>
    %36 = vector.extract_strided_slice %14 {offsets = [0, 8], sizes = [8, 8], strides = [1, 1]} : vector<8x192xf32> to vector<8x8xf32>
    %cst_19 = arith.constant 0.353553385 : f32
    %37 = vector.broadcast %cst_19 : f32 to vector<8x8xf32>
    %38 = arith.mulf %36, %37 : vector<8x8xf32>
    %39 = vector.extract_strided_slice %14 {offsets = [0, 72], sizes = [8, 8], strides = [1, 1]} : vector<8x192xf32> to vector<8x8xf32>
    %40 = vector.extract_strided_slice %14 {offsets = [0, 136], sizes = [8, 8], strides = [1, 1]} : vector<8x192xf32> to vector<8x8xf32>
    %41 = arith.truncf %38 : vector<8x8xf32> to vector<8x8xbf16>
    %42 = arith.truncf %39 : vector<8x8xf32> to vector<8x8xbf16>
    %cst_20 = arith.constant dense<0.000000e+00> : vector<8x8xf32>
    %43 = tpu.matmul %41, %42, %cst_20 {dimension_numbers = #tpu.dot_dimension_numbers<[1], [1], [0], [0], [0, 0, 1, 0], [], []>} : vector<8x8xbf16>, vector<8x8xbf16>, vector<8x8xf32> -> vector<8x8xf32>
    %cst_21 = arith.constant dense<0xFF800000> : vector<8xf32>
    %44 = vector.multi_reduction <maximumf>, %43, %cst_21 [1] : vector<8x8xf32> to vector<8xf32>
    %45 = vector.shape_cast %44 : vector<8xf32> to vector<8x1xf32>
    %46 = vector.broadcast %45 : vector<8x1xf32> to vector<8x8xf32>
    %47 = arith.subf %43, %46 : vector<8x8xf32>
    %48 = math.exp %47 : vector<8x8xf32>
    %cst_22 = arith.constant dense<0.000000e+00> : vector<8xf32>
    %49 = vector.multi_reduction <add>, %48, %cst_22 [1] : vector<8x8xf32> to vector<8xf32>
    %50 = vector.shape_cast %49 : vector<8xf32> to vector<8x1xf32>
    %51 = tpu.reciprocal %50 {approx = true} : vector<8x1xf32> -> vector<8x1xf32>
    %52 = vector.broadcast %51 : vector<8x1xf32> to vector<8x8xf32>
    %53 = arith.mulf %48, %52 : vector<8x8xf32>
    %54 = arith.truncf %53 : vector<8x8xf32> to vector<8x8xbf16>
    %55 = arith.truncf %40 : vector<8x8xf32> to vector<8x8xbf16>
    %cst_23 = arith.constant dense<0.000000e+00> : vector<8x8xf32>
    %56 = tpu.matmul %54, %55, %cst_23 {dimension_numbers = #tpu.dot_dimension_numbers<[1], [0], [0], [1], [0, 0, 1, 1], [], []>} : vector<8x8xbf16>, vector<8x8xbf16>, vector<8x8xf32> -> vector<8x8xf32>
    %57 = vector.extract_strided_slice %14 {offsets = [0, 16], sizes = [8, 8], strides = [1, 1]} : vector<8x192xf32> to vector<8x8xf32>
    %cst_24 = arith.constant 0.353553385 : f32
    %58 = vector.broadcast %cst_24 : f32 to vector<8x8xf32>
    %59 = arith.mulf %57, %58 : vector<8x8xf32>
    %60 = vector.extract_strided_slice %14 {offsets = [0, 80], sizes = [8, 8], strides = [1, 1]} : vector<8x192xf32> to vector<8x8xf32>
    %61 = vector.extract_strided_slice %14 {offsets = [0, 144], sizes = [8, 8], strides = [1, 1]} : vector<8x192xf32> to vector<8x8xf32>
    %62 = arith.truncf %59 : vector<8x8xf32> to vector<8x8xbf16>
    %63 = arith.truncf %60 : vector<8x8xf32> to vector<8x8xbf16>
    %cst_25 = arith.constant dense<0.000000e+00> : vector<8x8xf32>
    %64 = tpu.matmul %62, %63, %cst_25 {dimension_numbers = #tpu.dot_dimension_numbers<[1], [1], [0], [0], [0, 0, 1, 0], [], []>} : vector<8x8xbf16>, vector<8x8xbf16>, vector<8x8xf32> -> vector<8x8xf32>
    %cst_26 = arith.constant dense<0xFF800000> : vector<8xf32>
    %65 = vector.multi_reduction <maximumf>, %64, %cst_26 [1] : vector<8x8xf32> to vector<8xf32>
    %66 = vector.shape_cast %65 : vector<8xf32> to vector<8x1xf32>
    %67 = vector.broadcast %66 : vector<8x1xf32> to vector<8x8xf32>
    %68 = arith.subf %64, %67 : vector<8x8xf32>
    %69 = math.exp %68 : vector<8x8xf32>
    %cst_27 = arith.constant dense<0.000000e+00> : vector<8xf32>
    %70 = vector.multi_reduction <add>, %69, %cst_27 [1] : vector<8x8xf32> to vector<8xf32>
    %71 = vector.shape_cast %70 : vector<8xf32> to vector<8x1xf32>
    %72 = tpu.reciprocal %71 {approx = true} : vector<8x1xf32> -> vector<8x1xf32>
    %73 = vector.broadcast %72 : vector<8x1xf32> to vector<8x8xf32>
    %74 = arith.mulf %69, %73 : vector<8x8xf32>
    %75 = arith.truncf %74 : vector<8x8xf32> to vector<8x8xbf16>
    %76 = arith.truncf %61 : vector<8x8xf32> to vector<8x8xbf16>
    %cst_28 = arith.constant dense<0.000000e+00> : vector<8x8xf32>
    %77 = tpu.matmul %75, %76, %cst_28 {dimension_numbers = #tpu.dot_dimension_numbers<[1], [0], [0], [1], [0, 0, 1, 1], [], []>} : vector<8x8xbf16>, vector<8x8xbf16>, vector<8x8xf32> -> vector<8x8xf32>
    %78 = vector.extract_strided_slice %14 {offsets = [0, 24], sizes = [8, 8], strides = [1, 1]} : vector<8x192xf32> to vector<8x8xf32>
    %cst_29 = arith.constant 0.353553385 : f32
    %79 = vector.broadcast %cst_29 : f32 to vector<8x8xf32>
    %80 = arith.mulf %78, %79 : vector<8x8xf32>
    %81 = vector.extract_strided_slice %14 {offsets = [0, 88], sizes = [8, 8], strides = [1, 1]} : vector<8x192xf32> to vector<8x8xf32>
    %82 = vector.extract_strided_slice %14 {offsets = [0, 152], sizes = [8, 8], strides = [1, 1]} : vector<8x192xf32> to vector<8x8xf32>
    %83 = arith.truncf %80 : vector<8x8xf32> to vector<8x8xbf16>
    %84 = arith.truncf %81 : vector<8x8xf32> to vector<8x8xbf16>
    %cst_30 = arith.constant dense<0.000000e+00> : vector<8x8xf32>
    %85 = tpu.matmul %83, %84, %cst_30 {dimension_numbers = #tpu.dot_dimension_numbers<[1], [1], [0], [0], [0, 0, 1, 0], [], []>} : vector<8x8xbf16>, vector<8x8xbf16>, vector<8x8xf32> -> vector<8x8xf32>
    %cst_31 = arith.constant dense<0xFF800000> : vector<8xf32>
    %86 = vector.multi_reduction <maximumf>, %85, %cst_31 [1] : vector<8x8xf32> to vector<8xf32>
    %87 = vector.shape_cast %86 : vector<8xf32> to vector<8x1xf32>
    %88 = vector.broadcast %87 : vector<8x1xf32> to vector<8x8xf32>
    %89 = arith.subf %85, %88 : vector<8x8xf32>
    %90 = math.exp %89 : vector<8x8xf32>
    %cst_32 = arith.constant dense<0.000000e+00> : vector<8xf32>
    %91 = vector.multi_reduction <add>, %90, %cst_32 [1] : vector<8x8xf32> to vector<8xf32>
    %92 = vector.shape_cast %91 : vector<8xf32> to vector<8x1xf32>
    %93 = tpu.reciprocal %92 {approx = true} : vector<8x1xf32> -> vector<8x1xf32>
    %94 = vector.broadcast %93 : vector<8x1xf32> to vector<8x8xf32>
    %95 = arith.mulf %90, %94 : vector<8x8xf32>
    %96 = arith.truncf %95 : vector<8x8xf32> to vector<8x8xbf16>
    %97 = arith.truncf %82 : vector<8x8xf32> to vector<8x8xbf16>
    %cst_33 = arith.constant dense<0.000000e+00> : vector<8x8xf32>
    %98 = tpu.matmul %96, %97, %cst_33 {dimension_numbers = #tpu.dot_dimension_numbers<[1], [0], [0], [1], [0, 0, 1, 1], [], []>} : vector<8x8xbf16>, vector<8x8xbf16>, vector<8x8xf32> -> vector<8x8xf32>
    %99 = vector.extract_strided_slice %14 {offsets = [0, 32], sizes = [8, 8], strides = [1, 1]} : vector<8x192xf32> to vector<8x8xf32>
    %cst_34 = arith.constant 0.353553385 : f32
    %100 = vector.broadcast %cst_34 : f32 to vector<8x8xf32>
    %101 = arith.mulf %99, %100 : vector<8x8xf32>
    %102 = vector.extract_strided_slice %14 {offsets = [0, 96], sizes = [8, 8], strides = [1, 1]} : vector<8x192xf32> to vector<8x8xf32>
    %103 = vector.extract_strided_slice %14 {offsets = [0, 160], sizes = [8, 8], strides = [1, 1]} : vector<8x192xf32> to vector<8x8xf32>
    %104 = arith.truncf %101 : vector<8x8xf32> to vector<8x8xbf16>
    %105 = arith.truncf %102 : vector<8x8xf32> to vector<8x8xbf16>
    %cst_35 = arith.constant dense<0.000000e+00> : vector<8x8xf32>
    %106 = tpu.matmul %104, %105, %cst_35 {dimension_numbers = #tpu.dot_dimension_numbers<[1], [1], [0], [0], [0, 0, 1, 0], [], []>} : vector<8x8xbf16>, vector<8x8xbf16>, vector<8x8xf32> -> vector<8x8xf32>
    %cst_36 = arith.constant dense<0xFF800000> : vector<8xf32>
    %107 = vector.multi_reduction <maximumf>, %106, %cst_36 [1] : vector<8x8xf32> to vector<8xf32>
    %108 = vector.shape_cast %107 : vector<8xf32> to vector<8x1xf32>
    %109 = vector.broadcast %108 : vector<8x1xf32> to vector<8x8xf32>
    %110 = arith.subf %106, %109 : vector<8x8xf32>
    %111 = math.exp %110 : vector<8x8xf32>
    %cst_37 = arith.constant dense<0.000000e+00> : vector<8xf32>
    %112 = vector.multi_reduction <add>, %111, %cst_37 [1] : vector<8x8xf32> to vector<8xf32>
    %113 = vector.shape_cast %112 : vector<8xf32> to vector<8x1xf32>
    %114 = tpu.reciprocal %113 {approx = true} : vector<8x1xf32> -> vector<8x1xf32>
    %115 = vector.broadcast %114 : vector<8x1xf32> to vector<8x8xf32>
    %116 = arith.mulf %111, %115 : vector<8x8xf32>
    %117 = arith.truncf %116 : vector<8x8xf32> to vector<8x8xbf16>
    %118 = arith.truncf %103 : vector<8x8xf32> to vector<8x8xbf16>
    %cst_38 = arith.constant dense<0.000000e+00> : vector<8x8xf32>
    %119 = tpu.matmul %117, %118, %cst_38 {dimension_numbers = #tpu.dot_dimension_numbers<[1], [0], [0], [1], [0, 0, 1, 1], [], []>} : vector<8x8xbf16>, vector<8x8xbf16>, vector<8x8xf32> -> vector<8x8xf32>
    %120 = vector.extract_strided_slice %14 {offsets = [0, 40], sizes = [8, 8], strides = [1, 1]} : vector<8x192xf32> to vector<8x8xf32>
    %cst_39 = arith.constant 0.353553385 : f32
    %121 = vector.broadcast %cst_39 : f32 to vector<8x8xf32>
    %122 = arith.mulf %120, %121 : vector<8x8xf32>
    %123 = vector.extract_strided_slice %14 {offsets = [0, 104], sizes = [8, 8], strides = [1, 1]} : vector<8x192xf32> to vector<8x8xf32>
    %124 = vector.extract_strided_slice %14 {offsets = [0, 168], sizes = [8, 8], strides = [1, 1]} : vector<8x192xf32> to vector<8x8xf32>
    %125 = arith.truncf %122 : vector<8x8xf32> to vector<8x8xbf16>
    %126 = arith.truncf %123 : vector<8x8xf32> to vector<8x8xbf16>
    %cst_40 = arith.constant dense<0.000000e+00> : vector<8x8xf32>
    %127 = tpu.matmul %125, %126, %cst_40 {dimension_numbers = #tpu.dot_dimension_numbers<[1], [1], [0], [0], [0, 0, 1, 0], [], []>} : vector<8x8xbf16>, vector<8x8xbf16>, vector<8x8xf32> -> vector<8x8xf32>
    %cst_41 = arith.constant dense<0xFF800000> : vector<8xf32>
    %128 = vector.multi_reduction <maximumf>, %127, %cst_41 [1] : vector<8x8xf32> to vector<8xf32>
    %129 = vector.shape_cast %128 : vector<8xf32> to vector<8x1xf32>
    %130 = vector.broadcast %129 : vector<8x1xf32> to vector<8x8xf32>
    %131 = arith.subf %127, %130 : vector<8x8xf32>
    %132 = math.exp %131 : vector<8x8xf32>
    %cst_42 = arith.constant dense<0.000000e+00> : vector<8xf32>
    %133 = vector.multi_reduction <add>, %132, %cst_42 [1] : vector<8x8xf32> to vector<8xf32>
    %134 = vector.shape_cast %133 : vector<8xf32> to vector<8x1xf32>
    %135 = tpu.reciprocal %134 {approx = true} : vector<8x1xf32> -> vector<8x1xf32>
    %136 = vector.broadcast %135 : vector<8x1xf32> to vector<8x8xf32>
    %137 = arith.mulf %132, %136 : vector<8x8xf32>
    %138 = arith.truncf %137 : vector<8x8xf32> to vector<8x8xbf16>
    %139 = arith.truncf %124 : vector<8x8xf32> to vector<8x8xbf16>
    %cst_43 = arith.constant dense<0.000000e+00> : vector<8x8xf32>
    %140 = tpu.matmul %138, %139, %cst_43 {dimension_numbers = #tpu.dot_dimension_numbers<[1], [0], [0], [1], [0, 0, 1, 1], [], []>} : vector<8x8xbf16>, vector<8x8xbf16>, vector<8x8xf32> -> vector<8x8xf32>
    %141 = vector.extract_strided_slice %14 {offsets = [0, 48], sizes = [8, 8], strides = [1, 1]} : vector<8x192xf32> to vector<8x8xf32>
    %cst_44 = arith.constant 0.353553385 : f32
    %142 = vector.broadcast %cst_44 : f32 to vector<8x8xf32>
    %143 = arith.mulf %141, %142 : vector<8x8xf32>
    %144 = vector.extract_strided_slice %14 {offsets = [0, 112], sizes = [8, 8], strides = [1, 1]} : vector<8x192xf32> to vector<8x8xf32>
    %145 = vector.extract_strided_slice %14 {offsets = [0, 176], sizes = [8, 8], strides = [1, 1]} : vector<8x192xf32> to vector<8x8xf32>
    %146 = arith.truncf %143 : vector<8x8xf32> to vector<8x8xbf16>
    %147 = arith.truncf %144 : vector<8x8xf32> to vector<8x8xbf16>
    %cst_45 = arith.constant dense<0.000000e+00> : vector<8x8xf32>
    %148 = tpu.matmul %146, %147, %cst_45 {dimension_numbers = #tpu.dot_dimension_numbers<[1], [1], [0], [0], [0, 0, 1, 0], [], []>} : vector<8x8xbf16>, vector<8x8xbf16>, vector<8x8xf32> -> vector<8x8xf32>
    %cst_46 = arith.constant dense<0xFF800000> : vector<8xf32>
    %149 = vector.multi_reduction <maximumf>, %148, %cst_46 [1] : vector<8x8xf32> to vector<8xf32>
    %150 = vector.shape_cast %149 : vector<8xf32> to vector<8x1xf32>
    %151 = vector.broadcast %150 : vector<8x1xf32> to vector<8x8xf32>
    %152 = arith.subf %148, %151 : vector<8x8xf32>
    %153 = math.exp %152 : vector<8x8xf32>
    %cst_47 = arith.constant dense<0.000000e+00> : vector<8xf32>
    %154 = vector.multi_reduction <add>, %153, %cst_47 [1] : vector<8x8xf32> to vector<8xf32>
    %155 = vector.shape_cast %154 : vector<8xf32> to vector<8x1xf32>
    %156 = tpu.reciprocal %155 {approx = true} : vector<8x1xf32> -> vector<8x1xf32>
    %157 = vector.broadcast %156 : vector<8x1xf32> to vector<8x8xf32>
    %158 = arith.mulf %153, %157 : vector<8x8xf32>
    %159 = arith.truncf %158 : vector<8x8xf32> to vector<8x8xbf16>
    %160 = arith.truncf %145 : vector<8x8xf32> to vector<8x8xbf16>
    %cst_48 = arith.constant dense<0.000000e+00> : vector<8x8xf32>
    %161 = tpu.matmul %159, %160, %cst_48 {dimension_numbers = #tpu.dot_dimension_numbers<[1], [0], [0], [1], [0, 0, 1, 1], [], []>} : vector<8x8xbf16>, vector<8x8xbf16>, vector<8x8xf32> -> vector<8x8xf32>
    %162 = vector.extract_strided_slice %14 {offsets = [0, 56], sizes = [8, 8], strides = [1, 1]} : vector<8x192xf32> to vector<8x8xf32>
    %cst_49 = arith.constant 0.353553385 : f32
    %163 = vector.broadcast %cst_49 : f32 to vector<8x8xf32>
    %164 = arith.mulf %162, %163 : vector<8x8xf32>
    %165 = vector.extract_strided_slice %14 {offsets = [0, 120], sizes = [8, 8], strides = [1, 1]} : vector<8x192xf32> to vector<8x8xf32>
    %166 = vector.extract_strided_slice %14 {offsets = [0, 184], sizes = [8, 8], strides = [1, 1]} : vector<8x192xf32> to vector<8x8xf32>
    %167 = arith.truncf %164 : vector<8x8xf32> to vector<8x8xbf16>
    %168 = arith.truncf %165 : vector<8x8xf32> to vector<8x8xbf16>
    %cst_50 = arith.constant dense<0.000000e+00> : vector<8x8xf32>
    %169 = tpu.matmul %167, %168, %cst_50 {dimension_numbers = #tpu.dot_dimension_numbers<[1], [1], [0], [0], [0, 0, 1, 0], [], []>} : vector<8x8xbf16>, vector<8x8xbf16>, vector<8x8xf32> -> vector<8x8xf32>
    %cst_51 = arith.constant dense<0xFF800000> : vector<8xf32>
    %170 = vector.multi_reduction <maximumf>, %169, %cst_51 [1] : vector<8x8xf32> to vector<8xf32>
    %171 = vector.shape_cast %170 : vector<8xf32> to vector<8x1xf32>
    %172 = vector.broadcast %171 : vector<8x1xf32> to vector<8x8xf32>
    %173 = arith.subf %169, %172 : vector<8x8xf32>
    %174 = math.exp %173 : vector<8x8xf32>
    %cst_52 = arith.constant dense<0.000000e+00> : vector<8xf32>
    %175 = vector.multi_reduction <add>, %174, %cst_52 [1] : vector<8x8xf32> to vector<8xf32>
    %176 = vector.shape_cast %175 : vector<8xf32> to vector<8x1xf32>
    %177 = tpu.reciprocal %176 {approx = true} : vector<8x1xf32> -> vector<8x1xf32>
    %178 = vector.broadcast %177 : vector<8x1xf32> to vector<8x8xf32>
    %179 = arith.mulf %174, %178 : vector<8x8xf32>
    %180 = arith.truncf %179 : vector<8x8xf32> to vector<8x8xbf16>
    %181 = arith.truncf %166 : vector<8x8xf32> to vector<8x8xbf16>
    %cst_53 = arith.constant dense<0.000000e+00> : vector<8x8xf32>
    %182 = tpu.matmul %180, %181, %cst_53 {dimension_numbers = #tpu.dot_dimension_numbers<[1], [0], [0], [1], [0, 0, 1, 1], [], []>} : vector<8x8xbf16>, vector<8x8xbf16>, vector<8x8xf32> -> vector<8x8xf32>
    %183 = tpu.concatenate %35, %56, %77, %98, %119, %140, %161, %182 in 1 : vector<8x8xf32>, vector<8x8xf32>, vector<8x8xf32>, vector<8x8xf32>, vector<8x8xf32>, vector<8x8xf32>, vector<8x8xf32>, vector<8x8xf32> -> vector<8x64xf32>
    %c0_54 = arith.constant 0 : index
    %c0_55 = arith.constant 0 : index
    %c0_56 = arith.constant 0 : index
    %184 = vector.load %arg5[%c0_54, %c0_55, %c0_56] : memref<10x64x64xbf16, #tpu.memory_space<vmem>>, vector<1x64x64xbf16>
    %185 = vector.shape_cast %184 : vector<1x64x64xbf16> to vector<64x64xbf16>
    %186 = vector.extract_strided_slice %6 {offsets = [0, 0], sizes = [1, 64], strides = [1, 1]} : vector<10x64xf32> to vector<1x64xf32>
    %187 = arith.truncf %183 : vector<8x64xf32> to vector<8x64xbf16>
    %cst_57 = arith.constant dense<0.000000e+00> : vector<8x64xf32>
    %188 = tpu.matmul %187, %185, %cst_57 {dimension_numbers = #tpu.dot_dimension_numbers<[1], [0], [0], [1], [0, 0, 1, 1], [], []>} : vector<8x64xbf16>, vector<64x64xbf16>, vector<8x64xf32> -> vector<8x64xf32>
    %189 = vector.broadcast %186 : vector<1x64xf32> to vector<8x64xf32>
    %190 = arith.addf %188, %189 : vector<8x64xf32>
    %c1 = arith.constant 1 : index
    %c0_58 = arith.constant 0 : index
    %c0_59 = arith.constant 0 : index
    %191 = vector.load %arg5[%c1, %c0_58, %c0_59] : memref<10x64x64xbf16, #tpu.memory_space<vmem>>, vector<1x64x64xbf16>
    %192 = vector.shape_cast %191 : vector<1x64x64xbf16> to vector<64x64xbf16>
    %193 = vector.extract_strided_slice %6 {offsets = [1, 0], sizes = [1, 64], strides = [1, 1]} : vector<10x64xf32> to vector<1x64xf32>
    %194 = arith.truncf %190 : vector<8x64xf32> to vector<8x64xbf16>
    %cst_60 = arith.constant dense<0.000000e+00> : vector<8x64xf32>
    %195 = tpu.matmul %194, %192, %cst_60 {dimension_numbers = #tpu.dot_dimension_numbers<[1], [0], [0], [1], [0, 0, 1, 1], [], []>} : vector<8x64xbf16>, vector<64x64xbf16>, vector<8x64xf32> -> vector<8x64xf32>
    %196 = vector.broadcast %193 : vector<1x64xf32> to vector<8x64xf32>
    %197 = arith.addf %195, %196 : vector<8x64xf32>
    %198 = arith.mulf %197, %197 : vector<8x64xf32>
    %199 = arith.mulf %197, %198 : vector<8x64xf32>
    %cst_61 = arith.constant 4.471500e-02 : f32
    %200 = vector.broadcast %cst_61 : f32 to vector<8x64xf32>
    %201 = arith.mulf %200, %199 : vector<8x64xf32>
    %202 = arith.addf %197, %201 : vector<8x64xf32>
    %cst_62 = arith.constant 0.797884583 : f32
    %203 = vector.broadcast %cst_62 : f32 to vector<8x64xf32>
    %204 = arith.mulf %203, %202 : vector<8x64xf32>
    %205 = math.tanh %204 : vector<8x64xf32>
    %cst_63 = arith.constant 1.000000e+00 : f32
    %206 = vector.broadcast %cst_63 : f32 to vector<8x64xf32>
    %207 = arith.addf %206, %205 : vector<8x64xf32>
    %cst_64 = arith.constant 5.000000e-01 : f32
    %208 = vector.broadcast %cst_64 : f32 to vector<8x64xf32>
    %209 = arith.mulf %208, %207 : vector<8x64xf32>
    %210 = arith.mulf %197, %209 : vector<8x64xf32>
    %c2 = arith.constant 2 : index
    %c0_65 = arith.constant 0 : index
    %c0_66 = arith.constant 0 : index
    %211 = vector.load %arg5[%c2, %c0_65, %c0_66] : memref<10x64x64xbf16, #tpu.memory_space<vmem>>, vector<1x64x64xbf16>
    %212 = vector.shape_cast %211 : vector<1x64x64xbf16> to vector<64x64xbf16>
    %213 = vector.extract_strided_slice %6 {offsets = [2, 0], sizes = [1, 64], strides = [1, 1]} : vector<10x64xf32> to vector<1x64xf32>
    %214 = arith.truncf %210 : vector<8x64xf32> to vector<8x64xbf16>
    %cst_67 = arith.constant dense<0.000000e+00> : vector<8x64xf32>
    %215 = tpu.matmul %214, %212, %cst_67 {dimension_numbers = #tpu.dot_dimension_numbers<[1], [0], [0], [1], [0, 0, 1, 1], [], []>} : vector<8x64xbf16>, vector<64x64xbf16>, vector<8x64xf32> -> vector<8x64xf32>
    %216 = vector.broadcast %213 : vector<1x64xf32> to vector<8x64xf32>
    %217 = arith.addf %215, %216 : vector<8x64xf32>
    %218 = arith.addf %190, %217 : vector<8x64xf32>
    %219 = arith.addf %4, %218 : vector<8x64xf32>
    %220 = vector.extract_strided_slice %6 {offsets = [3, 0], sizes = [1, 64], strides = [1, 1]} : vector<10x64xf32> to vector<1x64xf32>
    %221 = vector.extract_strided_slice %6 {offsets = [4, 0], sizes = [1, 64], strides = [1, 1]} : vector<10x64xf32> to vector<1x64xf32>
    %cst_68 = arith.constant dense<0.000000e+00> : vector<8xf32>
    %222 = vector.multi_reduction <add>, %219, %cst_68 [1] : vector<8x64xf32> to vector<8xf32>
    %223 = vector.shape_cast %222 : vector<8xf32> to vector<8x1xf32>
    %cst_69 = arith.constant 6.400000e+01 : f32
    %224 = vector.broadcast %cst_69 : f32 to vector<8x1xf32>
    %225 = arith.divf %223, %224 : vector<8x1xf32>
    %226 = vector.broadcast %225 : vector<8x1xf32> to vector<8x64xf32>
    %227 = arith.subf %219, %226 : vector<8x64xf32>
    %228 = arith.mulf %227, %227 : vector<8x64xf32>
    %cst_70 = arith.constant dense<0.000000e+00> : vector<8xf32>
    %229 = vector.multi_reduction <add>, %228, %cst_70 [1] : vector<8x64xf32> to vector<8xf32>
    %230 = vector.shape_cast %229 : vector<8xf32> to vector<8x1xf32>
    %cst_71 = arith.constant 6.400000e+01 : f32
    %231 = vector.broadcast %cst_71 : f32 to vector<8x1xf32>
    %232 = arith.divf %230, %231 : vector<8x1xf32>
    %233 = vector.broadcast %225 : vector<8x1xf32> to vector<8x64xf32>
    %234 = arith.subf %219, %233 : vector<8x64xf32>
    %cst_72 = arith.constant 9.99999974E-6 : f32
    %235 = vector.broadcast %cst_72 : f32 to vector<8x1xf32>
    %236 = arith.addf %232, %235 : vector<8x1xf32>
    %237 = math.rsqrt %236 : vector<8x1xf32>
    %238 = vector.broadcast %237 : vector<8x1xf32> to vector<8x64xf32>
    %239 = arith.mulf %234, %238 : vector<8x64xf32>
    %240 = vector.broadcast %220 : vector<1x64xf32> to vector<8x64xf32>
    %241 = arith.mulf %239, %240 : vector<8x64xf32>
    %242 = vector.broadcast %221 : vector<1x64xf32> to vector<8x64xf32>
    %243 = arith.addf %241, %242 : vector<8x64xf32>
    %c0_73 = arith.constant 0 : index
    %c0_74 = arith.constant 0 : index
    %c0_75 = arith.constant 0 : index
    %244 = vector.load %arg6[%c0_73, %c0_74, %c0_75] : memref<2x64x128xbf16, #tpu.memory_space<vmem>>, vector<1x64x128xbf16>
    %245 = vector.shape_cast %244 : vector<1x64x128xbf16> to vector<64x128xbf16>
    %c0_76 = arith.constant 0 : index
    %c0_77 = arith.constant 0 : index
    %c0_78 = arith.constant 0 : index
    %246 = vector.load %arg7[%c0_76, %c0_77, %c0_78] : memref<2x1x128xf32, #tpu.memory_space<vmem>>, vector<1x1x128xf32>
    %247 = vector.shape_cast %246 : vector<1x1x128xf32> to vector<1x128xf32>
    %248 = arith.truncf %243 : vector<8x64xf32> to vector<8x64xbf16>
    %cst_79 = arith.constant dense<0.000000e+00> : vector<8x128xf32>
    %249 = tpu.matmul %248, %245, %cst_79 {dimension_numbers = #tpu.dot_dimension_numbers<[1], [0], [0], [1], [0, 0, 1, 1], [], []>} : vector<8x64xbf16>, vector<64x128xbf16>, vector<8x128xf32> -> vector<8x128xf32>
    %250 = vector.broadcast %247 : vector<1x128xf32> to vector<8x128xf32>
    %251 = arith.addf %249, %250 : vector<8x128xf32>
    %252 = arith.mulf %251, %251 : vector<8x128xf32>
    %253 = arith.mulf %251, %252 : vector<8x128xf32>
    %cst_80 = arith.constant 4.471500e-02 : f32
    %254 = vector.broadcast %cst_80 : f32 to vector<8x128xf32>
    %255 = arith.mulf %254, %253 : vector<8x128xf32>
    %256 = arith.addf %251, %255 : vector<8x128xf32>
    %cst_81 = arith.constant 0.797884583 : f32
    %257 = vector.broadcast %cst_81 : f32 to vector<8x128xf32>
    %258 = arith.mulf %257, %256 : vector<8x128xf32>
    %259 = math.tanh %258 : vector<8x128xf32>
    %cst_82 = arith.constant 1.000000e+00 : f32
    %260 = vector.broadcast %cst_82 : f32 to vector<8x128xf32>
    %261 = arith.addf %260, %259 : vector<8x128xf32>
    %cst_83 = arith.constant 5.000000e-01 : f32
    %262 = vector.broadcast %cst_83 : f32 to vector<8x128xf32>
    %263 = arith.mulf %262, %261 : vector<8x128xf32>
    %264 = arith.mulf %251, %263 : vector<8x128xf32>
    %c0_84 = arith.constant 0 : index
    %c0_85 = arith.constant 0 : index
    %c0_86 = arith.constant 0 : index
    %265 = vector.load %arg8[%c0_84, %c0_85, %c0_86] : memref<2x128x64xbf16, #tpu.memory_space<vmem>>, vector<1x128x64xbf16>
    %266 = vector.shape_cast %265 : vector<1x128x64xbf16> to vector<128x64xbf16>
    %267 = vector.extract_strided_slice %6 {offsets = [5, 0], sizes = [1, 64], strides = [1, 1]} : vector<10x64xf32> to vector<1x64xf32>
    %268 = arith.truncf %264 : vector<8x128xf32> to vector<8x128xbf16>
    %cst_87 = arith.constant dense<0.000000e+00> : vector<8x64xf32>
    %269 = tpu.matmul %268, %266, %cst_87 {dimension_numbers = #tpu.dot_dimension_numbers<[1], [0], [0], [1], [0, 0, 1, 1], [], []>} : vector<8x128xbf16>, vector<128x64xbf16>, vector<8x64xf32> -> vector<8x64xf32>
    %270 = vector.broadcast %267 : vector<1x64xf32> to vector<8x64xf32>
    %271 = arith.addf %269, %270 : vector<8x64xf32>
    %c3 = arith.constant 3 : index
    %c0_88 = arith.constant 0 : index
    %c0_89 = arith.constant 0 : index
    %272 = vector.load %arg5[%c3, %c0_88, %c0_89] : memref<10x64x64xbf16, #tpu.memory_space<vmem>>, vector<1x64x64xbf16>
    %273 = vector.shape_cast %272 : vector<1x64x64xbf16> to vector<64x64xbf16>
    %274 = vector.extract_strided_slice %6 {offsets = [6, 0], sizes = [1, 64], strides = [1, 1]} : vector<10x64xf32> to vector<1x64xf32>
    %275 = arith.truncf %271 : vector<8x64xf32> to vector<8x64xbf16>
    %cst_90 = arith.constant dense<0.000000e+00> : vector<8x64xf32>
    %276 = tpu.matmul %275, %273, %cst_90 {dimension_numbers = #tpu.dot_dimension_numbers<[1], [0], [0], [1], [0, 0, 1, 1], [], []>} : vector<8x64xbf16>, vector<64x64xbf16>, vector<8x64xf32> -> vector<8x64xf32>
    %277 = vector.broadcast %274 : vector<1x64xf32> to vector<8x64xf32>
    %278 = arith.addf %276, %277 : vector<8x64xf32>
    %279 = arith.mulf %278, %278 : vector<8x64xf32>
    %280 = arith.mulf %278, %279 : vector<8x64xf32>
    %cst_91 = arith.constant 4.471500e-02 : f32
    %281 = vector.broadcast %cst_91 : f32 to vector<8x64xf32>
    %282 = arith.mulf %281, %280 : vector<8x64xf32>
    %283 = arith.addf %278, %282 : vector<8x64xf32>
    %cst_92 = arith.constant 0.797884583 : f32
    %284 = vector.broadcast %cst_92 : f32 to vector<8x64xf32>
    %285 = arith.mulf %284, %283 : vector<8x64xf32>
    %286 = math.tanh %285 : vector<8x64xf32>
    %cst_93 = arith.constant 1.000000e+00 : f32
    %287 = vector.broadcast %cst_93 : f32 to vector<8x64xf32>
    %288 = arith.addf %287, %286 : vector<8x64xf32>
    %cst_94 = arith.constant 5.000000e-01 : f32
    %289 = vector.broadcast %cst_94 : f32 to vector<8x64xf32>
    %290 = arith.mulf %289, %288 : vector<8x64xf32>
    %291 = arith.mulf %278, %290 : vector<8x64xf32>
    %c4 = arith.constant 4 : index
    %c0_95 = arith.constant 0 : index
    %c0_96 = arith.constant 0 : index
    %292 = vector.load %arg5[%c4, %c0_95, %c0_96] : memref<10x64x64xbf16, #tpu.memory_space<vmem>>, vector<1x64x64xbf16>
    %293 = vector.shape_cast %292 : vector<1x64x64xbf16> to vector<64x64xbf16>
    %294 = vector.extract_strided_slice %6 {offsets = [7, 0], sizes = [1, 64], strides = [1, 1]} : vector<10x64xf32> to vector<1x64xf32>
    %295 = arith.truncf %291 : vector<8x64xf32> to vector<8x64xbf16>
    %cst_97 = arith.constant dense<0.000000e+00> : vector<8x64xf32>
    %296 = tpu.matmul %295, %293, %cst_97 {dimension_numbers = #tpu.dot_dimension_numbers<[1], [0], [0], [1], [0, 0, 1, 1], [], []>} : vector<8x64xbf16>, vector<64x64xbf16>, vector<8x64xf32> -> vector<8x64xf32>
    %297 = vector.broadcast %294 : vector<1x64xf32> to vector<8x64xf32>
    %298 = arith.addf %296, %297 : vector<8x64xf32>
    %299 = arith.addf %271, %298 : vector<8x64xf32>
    %300 = arith.addf %243, %299 : vector<8x64xf32>
    %301 = vector.extract_strided_slice %6 {offsets = [8, 0], sizes = [1, 64], strides = [1, 1]} : vector<10x64xf32> to vector<1x64xf32>
    %302 = vector.extract_strided_slice %6 {offsets = [9, 0], sizes = [1, 64], strides = [1, 1]} : vector<10x64xf32> to vector<1x64xf32>
    %cst_98 = arith.constant dense<0.000000e+00> : vector<8xf32>
    %303 = vector.multi_reduction <add>, %300, %cst_98 [1] : vector<8x64xf32> to vector<8xf32>
    %304 = vector.shape_cast %303 : vector<8xf32> to vector<8x1xf32>
    %cst_99 = arith.constant 6.400000e+01 : f32
    %305 = vector.broadcast %cst_99 : f32 to vector<8x1xf32>
    %306 = arith.divf %304, %305 : vector<8x1xf32>
    %307 = vector.broadcast %306 : vector<8x1xf32> to vector<8x64xf32>
    %308 = arith.subf %300, %307 : vector<8x64xf32>
    %309 = arith.mulf %308, %308 : vector<8x64xf32>
    %cst_100 = arith.constant dense<0.000000e+00> : vector<8xf32>
    %310 = vector.multi_reduction <add>, %309, %cst_100 [1] : vector<8x64xf32> to vector<8xf32>
    %311 = vector.shape_cast %310 : vector<8xf32> to vector<8x1xf32>
    %cst_101 = arith.constant 6.400000e+01 : f32
    %312 = vector.broadcast %cst_101 : f32 to vector<8x1xf32>
    %313 = arith.divf %311, %312 : vector<8x1xf32>
    %314 = vector.broadcast %306 : vector<8x1xf32> to vector<8x64xf32>
    %315 = arith.subf %300, %314 : vector<8x64xf32>
    %cst_102 = arith.constant 9.99999974E-6 : f32
    %316 = vector.broadcast %cst_102 : f32 to vector<8x1xf32>
    %317 = arith.addf %313, %316 : vector<8x1xf32>
    %318 = math.rsqrt %317 : vector<8x1xf32>
    %319 = vector.broadcast %318 : vector<8x1xf32> to vector<8x64xf32>
    %320 = arith.mulf %315, %319 : vector<8x64xf32>
    %321 = vector.broadcast %301 : vector<1x64xf32> to vector<8x64xf32>
    %322 = arith.mulf %320, %321 : vector<8x64xf32>
    %323 = vector.broadcast %302 : vector<1x64xf32> to vector<8x64xf32>
    %324 = arith.addf %322, %323 : vector<8x64xf32>
    %c1_103 = arith.constant 1 : index
    %c0_104 = arith.constant 0 : index
    %c0_105 = arith.constant 0 : index
    %325 = vector.load %arg9[%c1_103, %c0_104, %c0_105] : memref<2x10x64xf32, #tpu.memory_space<vmem>>, vector<1x10x64xf32>
    %326 = vector.shape_cast %325 : vector<1x10x64xf32> to vector<10x64xf32>
    %c1_106 = arith.constant 1 : index
    %c0_107 = arith.constant 0 : index
    %c0_108 = arith.constant 0 : index
    %327 = vector.load %arg3[%c1_106, %c0_107, %c0_108] : memref<2x64x192xbf16, #tpu.memory_space<vmem>>, vector<1x64x192xbf16>
    %328 = vector.shape_cast %327 : vector<1x64x192xbf16> to vector<64x192xbf16>
    %c1_109 = arith.constant 1 : index
    %c0_110 = arith.constant 0 : index
    %c0_111 = arith.constant 0 : index
    %329 = vector.load %arg4[%c1_109, %c0_110, %c0_111] : memref<2x1x192xf32, #tpu.memory_space<vmem>>, vector<1x1x192xf32>
    %330 = vector.shape_cast %329 : vector<1x1x192xf32> to vector<1x192xf32>
    %331 = arith.truncf %324 : vector<8x64xf32> to vector<8x64xbf16>
    %cst_112 = arith.constant dense<0.000000e+00> : vector<8x192xf32>
    %332 = tpu.matmul %331, %328, %cst_112 {dimension_numbers = #tpu.dot_dimension_numbers<[1], [0], [0], [1], [0, 0, 1, 1], [], []>} : vector<8x64xbf16>, vector<64x192xbf16>, vector<8x192xf32> -> vector<8x192xf32>
    %333 = vector.broadcast %330 : vector<1x192xf32> to vector<8x192xf32>
    %334 = arith.addf %332, %333 : vector<8x192xf32>
    %335 = vector.extract_strided_slice %334 {offsets = [0, 0], sizes = [8, 8], strides = [1, 1]} : vector<8x192xf32> to vector<8x8xf32>
    %cst_113 = arith.constant 0.353553385 : f32
    %336 = vector.broadcast %cst_113 : f32 to vector<8x8xf32>
    %337 = arith.mulf %335, %336 : vector<8x8xf32>
    %338 = vector.extract_strided_slice %334 {offsets = [0, 64], sizes = [8, 8], strides = [1, 1]} : vector<8x192xf32> to vector<8x8xf32>
    %339 = vector.extract_strided_slice %334 {offsets = [0, 128], sizes = [8, 8], strides = [1, 1]} : vector<8x192xf32> to vector<8x8xf32>
    %340 = arith.truncf %337 : vector<8x8xf32> to vector<8x8xbf16>
    %341 = arith.truncf %338 : vector<8x8xf32> to vector<8x8xbf16>
    %cst_114 = arith.constant dense<0.000000e+00> : vector<8x8xf32>
    %342 = tpu.matmul %340, %341, %cst_114 {dimension_numbers = #tpu.dot_dimension_numbers<[1], [1], [0], [0], [0, 0, 1, 0], [], []>} : vector<8x8xbf16>, vector<8x8xbf16>, vector<8x8xf32> -> vector<8x8xf32>
    %cst_115 = arith.constant dense<0xFF800000> : vector<8xf32>
    %343 = vector.multi_reduction <maximumf>, %342, %cst_115 [1] : vector<8x8xf32> to vector<8xf32>
    %344 = vector.shape_cast %343 : vector<8xf32> to vector<8x1xf32>
    %345 = vector.broadcast %344 : vector<8x1xf32> to vector<8x8xf32>
    %346 = arith.subf %342, %345 : vector<8x8xf32>
    %347 = math.exp %346 : vector<8x8xf32>
    %cst_116 = arith.constant dense<0.000000e+00> : vector<8xf32>
    %348 = vector.multi_reduction <add>, %347, %cst_116 [1] : vector<8x8xf32> to vector<8xf32>
    %349 = vector.shape_cast %348 : vector<8xf32> to vector<8x1xf32>
    %350 = tpu.reciprocal %349 {approx = true} : vector<8x1xf32> -> vector<8x1xf32>
    %351 = vector.broadcast %350 : vector<8x1xf32> to vector<8x8xf32>
    %352 = arith.mulf %347, %351 : vector<8x8xf32>
    %353 = arith.truncf %352 : vector<8x8xf32> to vector<8x8xbf16>
    %354 = arith.truncf %339 : vector<8x8xf32> to vector<8x8xbf16>
    %cst_117 = arith.constant dense<0.000000e+00> : vector<8x8xf32>
    %355 = tpu.matmul %353, %354, %cst_117 {dimension_numbers = #tpu.dot_dimension_numbers<[1], [0], [0], [1], [0, 0, 1, 1], [], []>} : vector<8x8xbf16>, vector<8x8xbf16>, vector<8x8xf32> -> vector<8x8xf32>
    %356 = vector.extract_strided_slice %334 {offsets = [0, 8], sizes = [8, 8], strides = [1, 1]} : vector<8x192xf32> to vector<8x8xf32>
    %cst_118 = arith.constant 0.353553385 : f32
    %357 = vector.broadcast %cst_118 : f32 to vector<8x8xf32>
    %358 = arith.mulf %356, %357 : vector<8x8xf32>
    %359 = vector.extract_strided_slice %334 {offsets = [0, 72], sizes = [8, 8], strides = [1, 1]} : vector<8x192xf32> to vector<8x8xf32>
    %360 = vector.extract_strided_slice %334 {offsets = [0, 136], sizes = [8, 8], strides = [1, 1]} : vector<8x192xf32> to vector<8x8xf32>
    %361 = arith.truncf %358 : vector<8x8xf32> to vector<8x8xbf16>
    %362 = arith.truncf %359 : vector<8x8xf32> to vector<8x8xbf16>
    %cst_119 = arith.constant dense<0.000000e+00> : vector<8x8xf32>
    %363 = tpu.matmul %361, %362, %cst_119 {dimension_numbers = #tpu.dot_dimension_numbers<[1], [1], [0], [0], [0, 0, 1, 0], [], []>} : vector<8x8xbf16>, vector<8x8xbf16>, vector<8x8xf32> -> vector<8x8xf32>
    %cst_120 = arith.constant dense<0xFF800000> : vector<8xf32>
    %364 = vector.multi_reduction <maximumf>, %363, %cst_120 [1] : vector<8x8xf32> to vector<8xf32>
    %365 = vector.shape_cast %364 : vector<8xf32> to vector<8x1xf32>
    %366 = vector.broadcast %365 : vector<8x1xf32> to vector<8x8xf32>
    %367 = arith.subf %363, %366 : vector<8x8xf32>
    %368 = math.exp %367 : vector<8x8xf32>
    %cst_121 = arith.constant dense<0.000000e+00> : vector<8xf32>
    %369 = vector.multi_reduction <add>, %368, %cst_121 [1] : vector<8x8xf32> to vector<8xf32>
    %370 = vector.shape_cast %369 : vector<8xf32> to vector<8x1xf32>
    %371 = tpu.reciprocal %370 {approx = true} : vector<8x1xf32> -> vector<8x1xf32>
    %372 = vector.broadcast %371 : vector<8x1xf32> to vector<8x8xf32>
    %373 = arith.mulf %368, %372 : vector<8x8xf32>
    %374 = arith.truncf %373 : vector<8x8xf32> to vector<8x8xbf16>
    %375 = arith.truncf %360 : vector<8x8xf32> to vector<8x8xbf16>
    %cst_122 = arith.constant dense<0.000000e+00> : vector<8x8xf32>
    %376 = tpu.matmul %374, %375, %cst_122 {dimension_numbers = #tpu.dot_dimension_numbers<[1], [0], [0], [1], [0, 0, 1, 1], [], []>} : vector<8x8xbf16>, vector<8x8xbf16>, vector<8x8xf32> -> vector<8x8xf32>
    %377 = vector.extract_strided_slice %334 {offsets = [0, 16], sizes = [8, 8], strides = [1, 1]} : vector<8x192xf32> to vector<8x8xf32>
    %cst_123 = arith.constant 0.353553385 : f32
    %378 = vector.broadcast %cst_123 : f32 to vector<8x8xf32>
    %379 = arith.mulf %377, %378 : vector<8x8xf32>
    %380 = vector.extract_strided_slice %334 {offsets = [0, 80], sizes = [8, 8], strides = [1, 1]} : vector<8x192xf32> to vector<8x8xf32>
    %381 = vector.extract_strided_slice %334 {offsets = [0, 144], sizes = [8, 8], strides = [1, 1]} : vector<8x192xf32> to vector<8x8xf32>
    %382 = arith.truncf %379 : vector<8x8xf32> to vector<8x8xbf16>
    %383 = arith.truncf %380 : vector<8x8xf32> to vector<8x8xbf16>
    %cst_124 = arith.constant dense<0.000000e+00> : vector<8x8xf32>
    %384 = tpu.matmul %382, %383, %cst_124 {dimension_numbers = #tpu.dot_dimension_numbers<[1], [1], [0], [0], [0, 0, 1, 0], [], []>} : vector<8x8xbf16>, vector<8x8xbf16>, vector<8x8xf32> -> vector<8x8xf32>
    %cst_125 = arith.constant dense<0xFF800000> : vector<8xf32>
    %385 = vector.multi_reduction <maximumf>, %384, %cst_125 [1] : vector<8x8xf32> to vector<8xf32>
    %386 = vector.shape_cast %385 : vector<8xf32> to vector<8x1xf32>
    %387 = vector.broadcast %386 : vector<8x1xf32> to vector<8x8xf32>
    %388 = arith.subf %384, %387 : vector<8x8xf32>
    %389 = math.exp %388 : vector<8x8xf32>
    %cst_126 = arith.constant dense<0.000000e+00> : vector<8xf32>
    %390 = vector.multi_reduction <add>, %389, %cst_126 [1] : vector<8x8xf32> to vector<8xf32>
    %391 = vector.shape_cast %390 : vector<8xf32> to vector<8x1xf32>
    %392 = tpu.reciprocal %391 {approx = true} : vector<8x1xf32> -> vector<8x1xf32>
    %393 = vector.broadcast %392 : vector<8x1xf32> to vector<8x8xf32>
    %394 = arith.mulf %389, %393 : vector<8x8xf32>
    %395 = arith.truncf %394 : vector<8x8xf32> to vector<8x8xbf16>
    %396 = arith.truncf %381 : vector<8x8xf32> to vector<8x8xbf16>
    %cst_127 = arith.constant dense<0.000000e+00> : vector<8x8xf32>
    %397 = tpu.matmul %395, %396, %cst_127 {dimension_numbers = #tpu.dot_dimension_numbers<[1], [0], [0], [1], [0, 0, 1, 1], [], []>} : vector<8x8xbf16>, vector<8x8xbf16>, vector<8x8xf32> -> vector<8x8xf32>
    %398 = vector.extract_strided_slice %334 {offsets = [0, 24], sizes = [8, 8], strides = [1, 1]} : vector<8x192xf32> to vector<8x8xf32>
    %cst_128 = arith.constant 0.353553385 : f32
    %399 = vector.broadcast %cst_128 : f32 to vector<8x8xf32>
    %400 = arith.mulf %398, %399 : vector<8x8xf32>
    %401 = vector.extract_strided_slice %334 {offsets = [0, 88], sizes = [8, 8], strides = [1, 1]} : vector<8x192xf32> to vector<8x8xf32>
    %402 = vector.extract_strided_slice %334 {offsets = [0, 152], sizes = [8, 8], strides = [1, 1]} : vector<8x192xf32> to vector<8x8xf32>
    %403 = arith.truncf %400 : vector<8x8xf32> to vector<8x8xbf16>
    %404 = arith.truncf %401 : vector<8x8xf32> to vector<8x8xbf16>
    %cst_129 = arith.constant dense<0.000000e+00> : vector<8x8xf32>
    %405 = tpu.matmul %403, %404, %cst_129 {dimension_numbers = #tpu.dot_dimension_numbers<[1], [1], [0], [0], [0, 0, 1, 0], [], []>} : vector<8x8xbf16>, vector<8x8xbf16>, vector<8x8xf32> -> vector<8x8xf32>
    %cst_130 = arith.constant dense<0xFF800000> : vector<8xf32>
    %406 = vector.multi_reduction <maximumf>, %405, %cst_130 [1] : vector<8x8xf32> to vector<8xf32>
    %407 = vector.shape_cast %406 : vector<8xf32> to vector<8x1xf32>
    %408 = vector.broadcast %407 : vector<8x1xf32> to vector<8x8xf32>
    %409 = arith.subf %405, %408 : vector<8x8xf32>
    %410 = math.exp %409 : vector<8x8xf32>
    %cst_131 = arith.constant dense<0.000000e+00> : vector<8xf32>
    %411 = vector.multi_reduction <add>, %410, %cst_131 [1] : vector<8x8xf32> to vector<8xf32>
    %412 = vector.shape_cast %411 : vector<8xf32> to vector<8x1xf32>
    %413 = tpu.reciprocal %412 {approx = true} : vector<8x1xf32> -> vector<8x1xf32>
    %414 = vector.broadcast %413 : vector<8x1xf32> to vector<8x8xf32>
    %415 = arith.mulf %410, %414 : vector<8x8xf32>
    %416 = arith.truncf %415 : vector<8x8xf32> to vector<8x8xbf16>
    %417 = arith.truncf %402 : vector<8x8xf32> to vector<8x8xbf16>
    %cst_132 = arith.constant dense<0.000000e+00> : vector<8x8xf32>
    %418 = tpu.matmul %416, %417, %cst_132 {dimension_numbers = #tpu.dot_dimension_numbers<[1], [0], [0], [1], [0, 0, 1, 1], [], []>} : vector<8x8xbf16>, vector<8x8xbf16>, vector<8x8xf32> -> vector<8x8xf32>
    %419 = vector.extract_strided_slice %334 {offsets = [0, 32], sizes = [8, 8], strides = [1, 1]} : vector<8x192xf32> to vector<8x8xf32>
    %cst_133 = arith.constant 0.353553385 : f32
    %420 = vector.broadcast %cst_133 : f32 to vector<8x8xf32>
    %421 = arith.mulf %419, %420 : vector<8x8xf32>
    %422 = vector.extract_strided_slice %334 {offsets = [0, 96], sizes = [8, 8], strides = [1, 1]} : vector<8x192xf32> to vector<8x8xf32>
    %423 = vector.extract_strided_slice %334 {offsets = [0, 160], sizes = [8, 8], strides = [1, 1]} : vector<8x192xf32> to vector<8x8xf32>
    %424 = arith.truncf %421 : vector<8x8xf32> to vector<8x8xbf16>
    %425 = arith.truncf %422 : vector<8x8xf32> to vector<8x8xbf16>
    %cst_134 = arith.constant dense<0.000000e+00> : vector<8x8xf32>
    %426 = tpu.matmul %424, %425, %cst_134 {dimension_numbers = #tpu.dot_dimension_numbers<[1], [1], [0], [0], [0, 0, 1, 0], [], []>} : vector<8x8xbf16>, vector<8x8xbf16>, vector<8x8xf32> -> vector<8x8xf32>
    %cst_135 = arith.constant dense<0xFF800000> : vector<8xf32>
    %427 = vector.multi_reduction <maximumf>, %426, %cst_135 [1] : vector<8x8xf32> to vector<8xf32>
    %428 = vector.shape_cast %427 : vector<8xf32> to vector<8x1xf32>
    %429 = vector.broadcast %428 : vector<8x1xf32> to vector<8x8xf32>
    %430 = arith.subf %426, %429 : vector<8x8xf32>
    %431 = math.exp %430 : vector<8x8xf32>
    %cst_136 = arith.constant dense<0.000000e+00> : vector<8xf32>
    %432 = vector.multi_reduction <add>, %431, %cst_136 [1] : vector<8x8xf32> to vector<8xf32>
    %433 = vector.shape_cast %432 : vector<8xf32> to vector<8x1xf32>
    %434 = tpu.reciprocal %433 {approx = true} : vector<8x1xf32> -> vector<8x1xf32>
    %435 = vector.broadcast %434 : vector<8x1xf32> to vector<8x8xf32>
    %436 = arith.mulf %431, %435 : vector<8x8xf32>
    %437 = arith.truncf %436 : vector<8x8xf32> to vector<8x8xbf16>
    %438 = arith.truncf %423 : vector<8x8xf32> to vector<8x8xbf16>
    %cst_137 = arith.constant dense<0.000000e+00> : vector<8x8xf32>
    %439 = tpu.matmul %437, %438, %cst_137 {dimension_numbers = #tpu.dot_dimension_numbers<[1], [0], [0], [1], [0, 0, 1, 1], [], []>} : vector<8x8xbf16>, vector<8x8xbf16>, vector<8x8xf32> -> vector<8x8xf32>
    %440 = vector.extract_strided_slice %334 {offsets = [0, 40], sizes = [8, 8], strides = [1, 1]} : vector<8x192xf32> to vector<8x8xf32>
    %cst_138 = arith.constant 0.353553385 : f32
    %441 = vector.broadcast %cst_138 : f32 to vector<8x8xf32>
    %442 = arith.mulf %440, %441 : vector<8x8xf32>
    %443 = vector.extract_strided_slice %334 {offsets = [0, 104], sizes = [8, 8], strides = [1, 1]} : vector<8x192xf32> to vector<8x8xf32>
    %444 = vector.extract_strided_slice %334 {offsets = [0, 168], sizes = [8, 8], strides = [1, 1]} : vector<8x192xf32> to vector<8x8xf32>
    %445 = arith.truncf %442 : vector<8x8xf32> to vector<8x8xbf16>
    %446 = arith.truncf %443 : vector<8x8xf32> to vector<8x8xbf16>
    %cst_139 = arith.constant dense<0.000000e+00> : vector<8x8xf32>
    %447 = tpu.matmul %445, %446, %cst_139 {dimension_numbers = #tpu.dot_dimension_numbers<[1], [1], [0], [0], [0, 0, 1, 0], [], []>} : vector<8x8xbf16>, vector<8x8xbf16>, vector<8x8xf32> -> vector<8x8xf32>
    %cst_140 = arith.constant dense<0xFF800000> : vector<8xf32>
    %448 = vector.multi_reduction <maximumf>, %447, %cst_140 [1] : vector<8x8xf32> to vector<8xf32>
    %449 = vector.shape_cast %448 : vector<8xf32> to vector<8x1xf32>
    %450 = vector.broadcast %449 : vector<8x1xf32> to vector<8x8xf32>
    %451 = arith.subf %447, %450 : vector<8x8xf32>
    %452 = math.exp %451 : vector<8x8xf32>
    %cst_141 = arith.constant dense<0.000000e+00> : vector<8xf32>
    %453 = vector.multi_reduction <add>, %452, %cst_141 [1] : vector<8x8xf32> to vector<8xf32>
    %454 = vector.shape_cast %453 : vector<8xf32> to vector<8x1xf32>
    %455 = tpu.reciprocal %454 {approx = true} : vector<8x1xf32> -> vector<8x1xf32>
    %456 = vector.broadcast %455 : vector<8x1xf32> to vector<8x8xf32>
    %457 = arith.mulf %452, %456 : vector<8x8xf32>
    %458 = arith.truncf %457 : vector<8x8xf32> to vector<8x8xbf16>
    %459 = arith.truncf %444 : vector<8x8xf32> to vector<8x8xbf16>
    %cst_142 = arith.constant dense<0.000000e+00> : vector<8x8xf32>
    %460 = tpu.matmul %458, %459, %cst_142 {dimension_numbers = #tpu.dot_dimension_numbers<[1], [0], [0], [1], [0, 0, 1, 1], [], []>} : vector<8x8xbf16>, vector<8x8xbf16>, vector<8x8xf32> -> vector<8x8xf32>
    %461 = vector.extract_strided_slice %334 {offsets = [0, 48], sizes = [8, 8], strides = [1, 1]} : vector<8x192xf32> to vector<8x8xf32>
    %cst_143 = arith.constant 0.353553385 : f32
    %462 = vector.broadcast %cst_143 : f32 to vector<8x8xf32>
    %463 = arith.mulf %461, %462 : vector<8x8xf32>
    %464 = vector.extract_strided_slice %334 {offsets = [0, 112], sizes = [8, 8], strides = [1, 1]} : vector<8x192xf32> to vector<8x8xf32>
    %465 = vector.extract_strided_slice %334 {offsets = [0, 176], sizes = [8, 8], strides = [1, 1]} : vector<8x192xf32> to vector<8x8xf32>
    %466 = arith.truncf %463 : vector<8x8xf32> to vector<8x8xbf16>
    %467 = arith.truncf %464 : vector<8x8xf32> to vector<8x8xbf16>
    %cst_144 = arith.constant dense<0.000000e+00> : vector<8x8xf32>
    %468 = tpu.matmul %466, %467, %cst_144 {dimension_numbers = #tpu.dot_dimension_numbers<[1], [1], [0], [0], [0, 0, 1, 0], [], []>} : vector<8x8xbf16>, vector<8x8xbf16>, vector<8x8xf32> -> vector<8x8xf32>
    %cst_145 = arith.constant dense<0xFF800000> : vector<8xf32>
    %469 = vector.multi_reduction <maximumf>, %468, %cst_145 [1] : vector<8x8xf32> to vector<8xf32>
    %470 = vector.shape_cast %469 : vector<8xf32> to vector<8x1xf32>
    %471 = vector.broadcast %470 : vector<8x1xf32> to vector<8x8xf32>
    %472 = arith.subf %468, %471 : vector<8x8xf32>
    %473 = math.exp %472 : vector<8x8xf32>
    %cst_146 = arith.constant dense<0.000000e+00> : vector<8xf32>
    %474 = vector.multi_reduction <add>, %473, %cst_146 [1] : vector<8x8xf32> to vector<8xf32>
    %475 = vector.shape_cast %474 : vector<8xf32> to vector<8x1xf32>
    %476 = tpu.reciprocal %475 {approx = true} : vector<8x1xf32> -> vector<8x1xf32>
    %477 = vector.broadcast %476 : vector<8x1xf32> to vector<8x8xf32>
    %478 = arith.mulf %473, %477 : vector<8x8xf32>
    %479 = arith.truncf %478 : vector<8x8xf32> to vector<8x8xbf16>
    %480 = arith.truncf %465 : vector<8x8xf32> to vector<8x8xbf16>
    %cst_147 = arith.constant dense<0.000000e+00> : vector<8x8xf32>
    %481 = tpu.matmul %479, %480, %cst_147 {dimension_numbers = #tpu.dot_dimension_numbers<[1], [0], [0], [1], [0, 0, 1, 1], [], []>} : vector<8x8xbf16>, vector<8x8xbf16>, vector<8x8xf32> -> vector<8x8xf32>
    %482 = vector.extract_strided_slice %334 {offsets = [0, 56], sizes = [8, 8], strides = [1, 1]} : vector<8x192xf32> to vector<8x8xf32>
    %cst_148 = arith.constant 0.353553385 : f32
    %483 = vector.broadcast %cst_148 : f32 to vector<8x8xf32>
    %484 = arith.mulf %482, %483 : vector<8x8xf32>
    %485 = vector.extract_strided_slice %334 {offsets = [0, 120], sizes = [8, 8], strides = [1, 1]} : vector<8x192xf32> to vector<8x8xf32>
    %486 = vector.extract_strided_slice %334 {offsets = [0, 184], sizes = [8, 8], strides = [1, 1]} : vector<8x192xf32> to vector<8x8xf32>
    %487 = arith.truncf %484 : vector<8x8xf32> to vector<8x8xbf16>
    %488 = arith.truncf %485 : vector<8x8xf32> to vector<8x8xbf16>
    %cst_149 = arith.constant dense<0.000000e+00> : vector<8x8xf32>
    %489 = tpu.matmul %487, %488, %cst_149 {dimension_numbers = #tpu.dot_dimension_numbers<[1], [1], [0], [0], [0, 0, 1, 0], [], []>} : vector<8x8xbf16>, vector<8x8xbf16>, vector<8x8xf32> -> vector<8x8xf32>
    %cst_150 = arith.constant dense<0xFF800000> : vector<8xf32>
    %490 = vector.multi_reduction <maximumf>, %489, %cst_150 [1] : vector<8x8xf32> to vector<8xf32>
    %491 = vector.shape_cast %490 : vector<8xf32> to vector<8x1xf32>
    %492 = vector.broadcast %491 : vector<8x1xf32> to vector<8x8xf32>
    %493 = arith.subf %489, %492 : vector<8x8xf32>
    %494 = math.exp %493 : vector<8x8xf32>
    %cst_151 = arith.constant dense<0.000000e+00> : vector<8xf32>
    %495 = vector.multi_reduction <add>, %494, %cst_151 [1] : vector<8x8xf32> to vector<8xf32>
    %496 = vector.shape_cast %495 : vector<8xf32> to vector<8x1xf32>
    %497 = tpu.reciprocal %496 {approx = true} : vector<8x1xf32> -> vector<8x1xf32>
    %498 = vector.broadcast %497 : vector<8x1xf32> to vector<8x8xf32>
    %499 = arith.mulf %494, %498 : vector<8x8xf32>
    %500 = arith.truncf %499 : vector<8x8xf32> to vector<8x8xbf16>
    %501 = arith.truncf %486 : vector<8x8xf32> to vector<8x8xbf16>
    %cst_152 = arith.constant dense<0.000000e+00> : vector<8x8xf32>
    %502 = tpu.matmul %500, %501, %cst_152 {dimension_numbers = #tpu.dot_dimension_numbers<[1], [0], [0], [1], [0, 0, 1, 1], [], []>} : vector<8x8xbf16>, vector<8x8xbf16>, vector<8x8xf32> -> vector<8x8xf32>
    %503 = tpu.concatenate %355, %376, %397, %418, %439, %460, %481, %502 in 1 : vector<8x8xf32>, vector<8x8xf32>, vector<8x8xf32>, vector<8x8xf32>, vector<8x8xf32>, vector<8x8xf32>, vector<8x8xf32>, vector<8x8xf32> -> vector<8x64xf32>
    %c5 = arith.constant 5 : index
    %c0_153 = arith.constant 0 : index
    %c0_154 = arith.constant 0 : index
    %504 = vector.load %arg5[%c5, %c0_153, %c0_154] : memref<10x64x64xbf16, #tpu.memory_space<vmem>>, vector<1x64x64xbf16>
    %505 = vector.shape_cast %504 : vector<1x64x64xbf16> to vector<64x64xbf16>
    %506 = vector.extract_strided_slice %326 {offsets = [0, 0], sizes = [1, 64], strides = [1, 1]} : vector<10x64xf32> to vector<1x64xf32>
    %507 = arith.truncf %503 : vector<8x64xf32> to vector<8x64xbf16>
    %cst_155 = arith.constant dense<0.000000e+00> : vector<8x64xf32>
    %508 = tpu.matmul %507, %505, %cst_155 {dimension_numbers = #tpu.dot_dimension_numbers<[1], [0], [0], [1], [0, 0, 1, 1], [], []>} : vector<8x64xbf16>, vector<64x64xbf16>, vector<8x64xf32> -> vector<8x64xf32>
    %509 = vector.broadcast %506 : vector<1x64xf32> to vector<8x64xf32>
    %510 = arith.addf %508, %509 : vector<8x64xf32>
    %c6 = arith.constant 6 : index
    %c0_156 = arith.constant 0 : index
    %c0_157 = arith.constant 0 : index
    %511 = vector.load %arg5[%c6, %c0_156, %c0_157] : memref<10x64x64xbf16, #tpu.memory_space<vmem>>, vector<1x64x64xbf16>
    %512 = vector.shape_cast %511 : vector<1x64x64xbf16> to vector<64x64xbf16>
    %513 = vector.extract_strided_slice %326 {offsets = [1, 0], sizes = [1, 64], strides = [1, 1]} : vector<10x64xf32> to vector<1x64xf32>
    %514 = arith.truncf %510 : vector<8x64xf32> to vector<8x64xbf16>
    %cst_158 = arith.constant dense<0.000000e+00> : vector<8x64xf32>
    %515 = tpu.matmul %514, %512, %cst_158 {dimension_numbers = #tpu.dot_dimension_numbers<[1], [0], [0], [1], [0, 0, 1, 1], [], []>} : vector<8x64xbf16>, vector<64x64xbf16>, vector<8x64xf32> -> vector<8x64xf32>
    %516 = vector.broadcast %513 : vector<1x64xf32> to vector<8x64xf32>
    %517 = arith.addf %515, %516 : vector<8x64xf32>
    %518 = arith.mulf %517, %517 : vector<8x64xf32>
    %519 = arith.mulf %517, %518 : vector<8x64xf32>
    %cst_159 = arith.constant 4.471500e-02 : f32
    %520 = vector.broadcast %cst_159 : f32 to vector<8x64xf32>
    %521 = arith.mulf %520, %519 : vector<8x64xf32>
    %522 = arith.addf %517, %521 : vector<8x64xf32>
    %cst_160 = arith.constant 0.797884583 : f32
    %523 = vector.broadcast %cst_160 : f32 to vector<8x64xf32>
    %524 = arith.mulf %523, %522 : vector<8x64xf32>
    %525 = math.tanh %524 : vector<8x64xf32>
    %cst_161 = arith.constant 1.000000e+00 : f32
    %526 = vector.broadcast %cst_161 : f32 to vector<8x64xf32>
    %527 = arith.addf %526, %525 : vector<8x64xf32>
    %cst_162 = arith.constant 5.000000e-01 : f32
    %528 = vector.broadcast %cst_162 : f32 to vector<8x64xf32>
    %529 = arith.mulf %528, %527 : vector<8x64xf32>
    %530 = arith.mulf %517, %529 : vector<8x64xf32>
    %c7 = arith.constant 7 : index
    %c0_163 = arith.constant 0 : index
    %c0_164 = arith.constant 0 : index
    %531 = vector.load %arg5[%c7, %c0_163, %c0_164] : memref<10x64x64xbf16, #tpu.memory_space<vmem>>, vector<1x64x64xbf16>
    %532 = vector.shape_cast %531 : vector<1x64x64xbf16> to vector<64x64xbf16>
    %533 = vector.extract_strided_slice %326 {offsets = [2, 0], sizes = [1, 64], strides = [1, 1]} : vector<10x64xf32> to vector<1x64xf32>
    %534 = arith.truncf %530 : vector<8x64xf32> to vector<8x64xbf16>
    %cst_165 = arith.constant dense<0.000000e+00> : vector<8x64xf32>
    %535 = tpu.matmul %534, %532, %cst_165 {dimension_numbers = #tpu.dot_dimension_numbers<[1], [0], [0], [1], [0, 0, 1, 1], [], []>} : vector<8x64xbf16>, vector<64x64xbf16>, vector<8x64xf32> -> vector<8x64xf32>
    %536 = vector.broadcast %533 : vector<1x64xf32> to vector<8x64xf32>
    %537 = arith.addf %535, %536 : vector<8x64xf32>
    %538 = arith.addf %510, %537 : vector<8x64xf32>
    %539 = arith.addf %324, %538 : vector<8x64xf32>
    %540 = vector.extract_strided_slice %326 {offsets = [3, 0], sizes = [1, 64], strides = [1, 1]} : vector<10x64xf32> to vector<1x64xf32>
    %541 = vector.extract_strided_slice %326 {offsets = [4, 0], sizes = [1, 64], strides = [1, 1]} : vector<10x64xf32> to vector<1x64xf32>
    %cst_166 = arith.constant dense<0.000000e+00> : vector<8xf32>
    %542 = vector.multi_reduction <add>, %539, %cst_166 [1] : vector<8x64xf32> to vector<8xf32>
    %543 = vector.shape_cast %542 : vector<8xf32> to vector<8x1xf32>
    %cst_167 = arith.constant 6.400000e+01 : f32
    %544 = vector.broadcast %cst_167 : f32 to vector<8x1xf32>
    %545 = arith.divf %543, %544 : vector<8x1xf32>
    %546 = vector.broadcast %545 : vector<8x1xf32> to vector<8x64xf32>
    %547 = arith.subf %539, %546 : vector<8x64xf32>
    %548 = arith.mulf %547, %547 : vector<8x64xf32>
    %cst_168 = arith.constant dense<0.000000e+00> : vector<8xf32>
    %549 = vector.multi_reduction <add>, %548, %cst_168 [1] : vector<8x64xf32> to vector<8xf32>
    %550 = vector.shape_cast %549 : vector<8xf32> to vector<8x1xf32>
    %cst_169 = arith.constant 6.400000e+01 : f32
    %551 = vector.broadcast %cst_169 : f32 to vector<8x1xf32>
    %552 = arith.divf %550, %551 : vector<8x1xf32>
    %553 = vector.broadcast %545 : vector<8x1xf32> to vector<8x64xf32>
    %554 = arith.subf %539, %553 : vector<8x64xf32>
    %cst_170 = arith.constant 9.99999974E-6 : f32
    %555 = vector.broadcast %cst_170 : f32 to vector<8x1xf32>
    %556 = arith.addf %552, %555 : vector<8x1xf32>
    %557 = math.rsqrt %556 : vector<8x1xf32>
    %558 = vector.broadcast %557 : vector<8x1xf32> to vector<8x64xf32>
    %559 = arith.mulf %554, %558 : vector<8x64xf32>
    %560 = vector.broadcast %540 : vector<1x64xf32> to vector<8x64xf32>
    %561 = arith.mulf %559, %560 : vector<8x64xf32>
    %562 = vector.broadcast %541 : vector<1x64xf32> to vector<8x64xf32>
    %563 = arith.addf %561, %562 : vector<8x64xf32>
    %c1_171 = arith.constant 1 : index
    %c0_172 = arith.constant 0 : index
    %c0_173 = arith.constant 0 : index
    %564 = vector.load %arg6[%c1_171, %c0_172, %c0_173] : memref<2x64x128xbf16, #tpu.memory_space<vmem>>, vector<1x64x128xbf16>
    %565 = vector.shape_cast %564 : vector<1x64x128xbf16> to vector<64x128xbf16>
    %c1_174 = arith.constant 1 : index
    %c0_175 = arith.constant 0 : index
    %c0_176 = arith.constant 0 : index
    %566 = vector.load %arg7[%c1_174, %c0_175, %c0_176] : memref<2x1x128xf32, #tpu.memory_space<vmem>>, vector<1x1x128xf32>
    %567 = vector.shape_cast %566 : vector<1x1x128xf32> to vector<1x128xf32>
    %568 = arith.truncf %563 : vector<8x64xf32> to vector<8x64xbf16>
    %cst_177 = arith.constant dense<0.000000e+00> : vector<8x128xf32>
    %569 = tpu.matmul %568, %565, %cst_177 {dimension_numbers = #tpu.dot_dimension_numbers<[1], [0], [0], [1], [0, 0, 1, 1], [], []>} : vector<8x64xbf16>, vector<64x128xbf16>, vector<8x128xf32> -> vector<8x128xf32>
    %570 = vector.broadcast %567 : vector<1x128xf32> to vector<8x128xf32>
    %571 = arith.addf %569, %570 : vector<8x128xf32>
    %572 = arith.mulf %571, %571 : vector<8x128xf32>
    %573 = arith.mulf %571, %572 : vector<8x128xf32>
    %cst_178 = arith.constant 4.471500e-02 : f32
    %574 = vector.broadcast %cst_178 : f32 to vector<8x128xf32>
    %575 = arith.mulf %574, %573 : vector<8x128xf32>
    %576 = arith.addf %571, %575 : vector<8x128xf32>
    %cst_179 = arith.constant 0.797884583 : f32
    %577 = vector.broadcast %cst_179 : f32 to vector<8x128xf32>
    %578 = arith.mulf %577, %576 : vector<8x128xf32>
    %579 = math.tanh %578 : vector<8x128xf32>
    %cst_180 = arith.constant 1.000000e+00 : f32
    %580 = vector.broadcast %cst_180 : f32 to vector<8x128xf32>
    %581 = arith.addf %580, %579 : vector<8x128xf32>
    %cst_181 = arith.constant 5.000000e-01 : f32
    %582 = vector.broadcast %cst_181 : f32 to vector<8x128xf32>
    %583 = arith.mulf %582, %581 : vector<8x128xf32>
    %584 = arith.mulf %571, %583 : vector<8x128xf32>
    %c1_182 = arith.constant 1 : index
    %c0_183 = arith.constant 0 : index
    %c0_184 = arith.constant 0 : index
    %585 = vector.load %arg8[%c1_182, %c0_183, %c0_184] : memref<2x128x64xbf16, #tpu.memory_space<vmem>>, vector<1x128x64xbf16>
    %586 = vector.shape_cast %585 : vector<1x128x64xbf16> to vector<128x64xbf16>
    %587 = vector.extract_strided_slice %326 {offsets = [5, 0], sizes = [1, 64], strides = [1, 1]} : vector<10x64xf32> to vector<1x64xf32>
    %588 = arith.truncf %584 : vector<8x128xf32> to vector<8x128xbf16>
    %cst_185 = arith.constant dense<0.000000e+00> : vector<8x64xf32>
    %589 = tpu.matmul %588, %586, %cst_185 {dimension_numbers = #tpu.dot_dimension_numbers<[1], [0], [0], [1], [0, 0, 1, 1], [], []>} : vector<8x128xbf16>, vector<128x64xbf16>, vector<8x64xf32> -> vector<8x64xf32>
    %590 = vector.broadcast %587 : vector<1x64xf32> to vector<8x64xf32>
    %591 = arith.addf %589, %590 : vector<8x64xf32>
    %c8 = arith.constant 8 : index
    %c0_186 = arith.constant 0 : index
    %c0_187 = arith.constant 0 : index
    %592 = vector.load %arg5[%c8, %c0_186, %c0_187] : memref<10x64x64xbf16, #tpu.memory_space<vmem>>, vector<1x64x64xbf16>
    %593 = vector.shape_cast %592 : vector<1x64x64xbf16> to vector<64x64xbf16>
    %594 = vector.extract_strided_slice %326 {offsets = [6, 0], sizes = [1, 64], strides = [1, 1]} : vector<10x64xf32> to vector<1x64xf32>
    %595 = arith.truncf %591 : vector<8x64xf32> to vector<8x64xbf16>
    %cst_188 = arith.constant dense<0.000000e+00> : vector<8x64xf32>
    %596 = tpu.matmul %595, %593, %cst_188 {dimension_numbers = #tpu.dot_dimension_numbers<[1], [0], [0], [1], [0, 0, 1, 1], [], []>} : vector<8x64xbf16>, vector<64x64xbf16>, vector<8x64xf32> -> vector<8x64xf32>
    %597 = vector.broadcast %594 : vector<1x64xf32> to vector<8x64xf32>
    %598 = arith.addf %596, %597 : vector<8x64xf32>
    %599 = arith.mulf %598, %598 : vector<8x64xf32>
    %600 = arith.mulf %598, %599 : vector<8x64xf32>
    %cst_189 = arith.constant 4.471500e-02 : f32
    %601 = vector.broadcast %cst_189 : f32 to vector<8x64xf32>
    %602 = arith.mulf %601, %600 : vector<8x64xf32>
    %603 = arith.addf %598, %602 : vector<8x64xf32>
    %cst_190 = arith.constant 0.797884583 : f32
    %604 = vector.broadcast %cst_190 : f32 to vector<8x64xf32>
    %605 = arith.mulf %604, %603 : vector<8x64xf32>
    %606 = math.tanh %605 : vector<8x64xf32>
    %cst_191 = arith.constant 1.000000e+00 : f32
    %607 = vector.broadcast %cst_191 : f32 to vector<8x64xf32>
    %608 = arith.addf %607, %606 : vector<8x64xf32>
    %cst_192 = arith.constant 5.000000e-01 : f32
    %609 = vector.broadcast %cst_192 : f32 to vector<8x64xf32>
    %610 = arith.mulf %609, %608 : vector<8x64xf32>
    %611 = arith.mulf %598, %610 : vector<8x64xf32>
    %c9 = arith.constant 9 : index
    %c0_193 = arith.constant 0 : index
    %c0_194 = arith.constant 0 : index
    %612 = vector.load %arg5[%c9, %c0_193, %c0_194] : memref<10x64x64xbf16, #tpu.memory_space<vmem>>, vector<1x64x64xbf16>
    %613 = vector.shape_cast %612 : vector<1x64x64xbf16> to vector<64x64xbf16>
    %614 = vector.extract_strided_slice %326 {offsets = [7, 0], sizes = [1, 64], strides = [1, 1]} : vector<10x64xf32> to vector<1x64xf32>
    %615 = arith.truncf %611 : vector<8x64xf32> to vector<8x64xbf16>
    %cst_195 = arith.constant dense<0.000000e+00> : vector<8x64xf32>
    %616 = tpu.matmul %615, %613, %cst_195 {dimension_numbers = #tpu.dot_dimension_numbers<[1], [0], [0], [1], [0, 0, 1, 1], [], []>} : vector<8x64xbf16>, vector<64x64xbf16>, vector<8x64xf32> -> vector<8x64xf32>
    %617 = vector.broadcast %614 : vector<1x64xf32> to vector<8x64xf32>
    %618 = arith.addf %616, %617 : vector<8x64xf32>
    %619 = arith.addf %591, %618 : vector<8x64xf32>
    %620 = arith.addf %563, %619 : vector<8x64xf32>
    %621 = vector.extract_strided_slice %326 {offsets = [8, 0], sizes = [1, 64], strides = [1, 1]} : vector<10x64xf32> to vector<1x64xf32>
    %622 = vector.extract_strided_slice %326 {offsets = [9, 0], sizes = [1, 64], strides = [1, 1]} : vector<10x64xf32> to vector<1x64xf32>
    %cst_196 = arith.constant dense<0.000000e+00> : vector<8xf32>
    %623 = vector.multi_reduction <add>, %620, %cst_196 [1] : vector<8x64xf32> to vector<8xf32>
    %624 = vector.shape_cast %623 : vector<8xf32> to vector<8x1xf32>
    %cst_197 = arith.constant 6.400000e+01 : f32
    %625 = vector.broadcast %cst_197 : f32 to vector<8x1xf32>
    %626 = arith.divf %624, %625 : vector<8x1xf32>
    %627 = vector.broadcast %626 : vector<8x1xf32> to vector<8x64xf32>
    %628 = arith.subf %620, %627 : vector<8x64xf32>
    %629 = arith.mulf %628, %628 : vector<8x64xf32>
    %cst_198 = arith.constant dense<0.000000e+00> : vector<8xf32>
    %630 = vector.multi_reduction <add>, %629, %cst_198 [1] : vector<8x64xf32> to vector<8xf32>
    %631 = vector.shape_cast %630 : vector<8xf32> to vector<8x1xf32>
    %cst_199 = arith.constant 6.400000e+01 : f32
    %632 = vector.broadcast %cst_199 : f32 to vector<8x1xf32>
    %633 = arith.divf %631, %632 : vector<8x1xf32>
    %634 = vector.broadcast %626 : vector<8x1xf32> to vector<8x64xf32>
    %635 = arith.subf %620, %634 : vector<8x64xf32>
    %cst_200 = arith.constant 9.99999974E-6 : f32
    %636 = vector.broadcast %cst_200 : f32 to vector<8x1xf32>
    %637 = arith.addf %633, %636 : vector<8x1xf32>
    %638 = math.rsqrt %637 : vector<8x1xf32>
    %639 = vector.broadcast %638 : vector<8x1xf32> to vector<8x64xf32>
    %640 = arith.mulf %635, %639 : vector<8x64xf32>
    %641 = vector.broadcast %621 : vector<1x64xf32> to vector<8x64xf32>
    %642 = arith.mulf %640, %641 : vector<8x64xf32>
    %643 = vector.broadcast %622 : vector<1x64xf32> to vector<8x64xf32>
    %644 = arith.addf %642, %643 : vector<8x64xf32>
    %c0_201 = arith.constant 0 : index
    %c0_202 = arith.constant 0 : index
    %645 = vector.load %arg11[%c0_201, %c0_202] : memref<1x2xf32, #tpu.memory_space<vmem>>, vector<1x2xf32>
    %c0_203 = arith.constant 0 : index
    %c0_204 = arith.constant 0 : index
    %c0_205 = arith.constant 0 : index
    %646 = vector.load %arg10[%c0_203, %c0_204, %c0_205] : memref<2x8x64xf32, #tpu.memory_space<vmem>>, vector<1x8x64xf32>
    %647 = vector.shape_cast %646 : vector<1x8x64xf32> to vector<8x64xf32>
    %648 = arith.mulf %644, %647 : vector<8x64xf32>
    %cst_206 = arith.constant dense<0.000000e+00> : vector<8xf32>
    %649 = vector.multi_reduction <add>, %648, %cst_206 [1] : vector<8x64xf32> to vector<8xf32>
    %650 = vector.shape_cast %649 : vector<8xf32> to vector<8x1xf32>
    %cst_207 = arith.constant dense<0.000000e+00> : vector<1xf32>
    %651 = vector.multi_reduction <add>, %650, %cst_207 [0] : vector<8x1xf32> to vector<1xf32>
    %652 = vector.shape_cast %651 : vector<1xf32> to vector<1x1xf32>
    %c1_208 = arith.constant 1 : index
    %c0_209 = arith.constant 0 : index
    %c0_210 = arith.constant 0 : index
    %653 = vector.load %arg10[%c1_208, %c0_209, %c0_210] : memref<2x8x64xf32, #tpu.memory_space<vmem>>, vector<1x8x64xf32>
    %654 = vector.shape_cast %653 : vector<1x8x64xf32> to vector<8x64xf32>
    %655 = arith.mulf %644, %654 : vector<8x64xf32>
    %cst_211 = arith.constant dense<0.000000e+00> : vector<8xf32>
    %656 = vector.multi_reduction <add>, %655, %cst_211 [1] : vector<8x64xf32> to vector<8xf32>
    %657 = vector.shape_cast %656 : vector<8xf32> to vector<8x1xf32>
    %cst_212 = arith.constant dense<0.000000e+00> : vector<1xf32>
    %658 = vector.multi_reduction <add>, %657, %cst_212 [0] : vector<8x1xf32> to vector<1xf32>
    %659 = vector.shape_cast %658 : vector<1xf32> to vector<1x1xf32>
    %660 = tpu.concatenate %652, %659 in 1 : vector<1x1xf32>, vector<1x1xf32> -> vector<1x2xf32>
    %661 = arith.addf %645, %660 : vector<1x2xf32>
    %c0_213 = arith.constant 0 : index
    %c0_214 = arith.constant 0 : index
    %c0_215 = arith.constant 0 : index
    %662 = vector.load %arg12[%c0_213, %c0_214, %c0_215] : memref<1x1x2xf32, #tpu.memory_space<vmem>>, vector<1x1x2xf32>
    %663 = vector.shape_cast %662 : vector<1x1x2xf32> to vector<1x2xf32>
    %664 = vector.shape_cast %661 : vector<1x2xf32> to vector<1x1x2xf32>
    tpu.vector_store %arg12[%c0_213, %c0_214, %c0_215], %664 {strides = array<i32>} : memref<1x1x2xf32, #tpu.memory_space<vmem>>, vector<1x1x2xf32>,
    return
  }
  func.func @transform_0(%arg0: i32) -> (i32, i32, i32) {
    %c0_i32 = arith.constant 0 : i32
    %c0_i32_0 = arith.constant 0 : i32
    %c0_i32_1 = arith.constant 0 : i32
    return %arg0, %c0_i32, %c0_i32_0 : i32, i32, i32
  }
  func.func @transform_1(%arg0: i32) -> (i32, i32, i32) {
    %c0_i32 = arith.constant 0 : i32
    %c0_i32_0 = arith.constant 0 : i32
    %c0_i32_1 = arith.constant 0 : i32
    %c0_i32_2 = arith.constant 0 : i32
    return %c0_i32, %c0_i32_0, %c0_i32_1 : i32, i32, i32
  }
  func.func @transform_2(%arg0: i32) -> (i32, i32, i32) {
    %c0_i32 = arith.constant 0 : i32
    %c0_i32_0 = arith.constant 0 : i32
    %c0_i32_1 = arith.constant 0 : i32
    %c0_i32_2 = arith.constant 0 : i32
    return %c0_i32, %c0_i32_0, %c0_i32_1 : i32, i32, i32
  }
  func.func @transform_3(%arg0: i32) -> (i32, i32, i32) {
    %c0_i32 = arith.constant 0 : i32
    %c0_i32_0 = arith.constant 0 : i32
    %c0_i32_1 = arith.constant 0 : i32
    %c0_i32_2 = arith.constant 0 : i32
    return %c0_i32, %c0_i32_0, %c0_i32_1 : i32, i32, i32
  }
  func.func @transform_4(%arg0: i32) -> (i32, i32, i32) {
    %c0_i32 = arith.constant 0 : i32
    %c0_i32_0 = arith.constant 0 : i32
    %c0_i32_1 = arith.constant 0 : i32
    %c0_i32_2 = arith.constant 0 : i32
    return %c0_i32, %c0_i32_0, %c0_i32_1 : i32, i32, i32
  }
  func.func @transform_5(%arg0: i32) -> (i32, i32, i32) {
    %c0_i32 = arith.constant 0 : i32
    %c0_i32_0 = arith.constant 0 : i32
    %c0_i32_1 = arith.constant 0 : i32
    %c0_i32_2 = arith.constant 0 : i32
    return %c0_i32, %c0_i32_0, %c0_i32_1 : i32, i32, i32
  }
  func.func @transform_6(%arg0: i32) -> (i32, i32, i32) {
    %c0_i32 = arith.constant 0 : i32
    %c0_i32_0 = arith.constant 0 : i32
    %c0_i32_1 = arith.constant 0 : i32
    %c0_i32_2 = arith.constant 0 : i32
    return %c0_i32, %c0_i32_0, %c0_i32_1 : i32, i32, i32
  }
  func.func @transform_7(%arg0: i32) -> (i32, i32, i32) {
    %c0_i32 = arith.constant 0 : i32
    %c0_i32_0 = arith.constant 0 : i32
    %c0_i32_1 = arith.constant 0 : i32
    %c0_i32_2 = arith.constant 0 : i32
    return %c0_i32, %c0_i32_0, %c0_i32_1 : i32, i32, i32
  }
  func.func @transform_8(%arg0: i32) -> (i32, i32, i32) {
    %c0_i32 = arith.constant 0 : i32
    %c0_i32_0 = arith.constant 0 : i32
    %c0_i32_1 = arith.constant 0 : i32
    %c0_i32_2 = arith.constant 0 : i32
    return %c0_i32, %c0_i32_0, %c0_i32_1 : i32, i32, i32
  }
  func.func @transform_9(%arg0: i32) -> (i32, i32, i32) {
    %c0_i32 = arith.constant 0 : i32
    %c0_i32_0 = arith.constant 0 : i32
    %c0_i32_1 = arith.constant 0 : i32
    %c0_i32_2 = arith.constant 0 : i32
    return %c0_i32, %c0_i32_0, %c0_i32_1 : i32, i32, i32
  }
  func.func @transform_10(%arg0: i32) -> (i32, i32) {
    %c0_i32 = arith.constant 0 : i32
    %c0_i32_0 = arith.constant 0 : i32
    %c0_i32_1 = arith.constant 0 : i32
    return %c0_i32, %c0_i32_0 : i32, i32
  }
  func.func @transform_11(%arg0: i32) -> (i32, i32, i32) {
    %c0_i32 = arith.constant 0 : i32
    %c0_i32_0 = arith.constant 0 : i32
    %c0_i32_1 = arith.constant 0 : i32
    return %arg0, %c0_i32, %c0_i32_0 : i32, i32, i32
  }
}

</mosaic_0001>

<llo_original>
// kernel: tpu_custom_call.1
$region0: #{tpu_custom_call.1}
  #allocation0 [shape = 'u32[]', space=smem, size = 0x4, offset = 0x4, fixed_abs, tag = 'smem constant byte address 0x4 - core index']
  #allocation1 [shape = 'u32[144,128]{1,0:T(1,128)}', space=vmem, size = 0x12000, scoped, tag = 'internal scratch']
  %s0 = inlined_call_operand.hbm [shape: f32[2,8,64], index: 0, kind: input, shape index: {}]
  %s1 = inlined_call_operand.vmem [shape: f32[1,64,64], index: 1, kind: input, shape index: {}]
  %s2 = inlined_call_operand.vmem [shape: bf16[2,64,192], index: 2, kind: input, shape index: {}]
  %s3 = inlined_call_operand.hbm [shape: f32[2,1,192], index: 3, kind: input, shape index: {}]
  %s4 = inlined_call_operand.hbm [shape: bf16[10,64,64], index: 4, kind: input, shape index: {}]
  %s5 = inlined_call_operand.hbm [shape: bf16[2,64,128], index: 5, kind: input, shape index: {}]
  %s6 = inlined_call_operand.vmem [shape: f32[2,1,128], index: 6, kind: input, shape index: {}]
  %s7 = inlined_call_operand.vmem [shape: bf16[2,128,64], index: 7, kind: input, shape index: {}]
  %s8 = inlined_call_operand.vmem [shape: f32[2,10,64], index: 8, kind: input, shape index: {}]
  %s9 = inlined_call_operand.vmem [shape: f32[2,8,64], index: 9, kind: input, shape index: {}]
  %s10 = inlined_call_operand.vmem [shape: f32[1,2], index: 10, kind: input, shape index: {}]
  %s11 = inlined_call_operand.hbm [shape: f32[2,1,2], index: 11, kind: output, shape index: {}]
  %s12 = sld [smem:[#allocation0]]
  $region93: #{tpu_custom_call.1} parent=0
    _
  %s14 = ssub.s32 1, %s12
  %s15 = scalar_select 0, %s14, %s12
  $region1: #{tpu_custom_call.1} parent=0
    #allocation2 [shape = 'u8[8192]{0}', space=vmem, size = 0x2000, scoped, tag = 'input window, operand 0']
    #allocation3 [shape = 's32[2]{0}', space=sflag, size = 0x8, scoped, tag = 'scoped memory for tpu_custom_call.1']
    #allocation4 [shape = 's32[2]{0}', space=sflag, size = 0x8, scoped, tag = 'scoped memory for tpu_custom_call.1']
    #allocation5 [shape = 'u8[2048]{0}', space=vmem, size = 0x800, scoped, tag = 'input window, operand 3, single buffered']
    #allocation6 [shape = 's32[1]{0}', space=sflag, size = 0x4, scoped, tag = 'scoped memory for tpu_custom_call.1']
    #allocation7 [shape = 'u8[163840]{0}', space=vmem, size = 0x28000, scoped, tag = 'input window, operand 4, single buffered']
    #allocation8 [shape = 'u8[32768]{0}', space=vmem, size = 0x8000, scoped, tag = 'input window, operand 5, single buffered']
    #allocation9 [shape = 's32[1]{0}', space=sflag, size = 0x4, scoped, tag = 'scoped memory for tpu_custom_call.1']
    #allocation10 [shape = 'u8[1024]{0}', space=vmem, size = 0x400, scoped, tag = 'output window, operand 0']
    %16 = vsyncpa [#allocation3], 0
    %s17 = scalar_lea.sflag [#allocation3], 1
    %18 = vsyncpa %s17, 0
    %19 = vsyncpa [#allocation6], 0
    %20 = vsyncpa [#allocation9], 0
    %21 = vsyncpa [#allocation4], 0
    %s22 = scalar_lea.sflag [#allocation4], 1
    %23 = vsyncpa %s22, 0
    loop: start=0, step=1, limit=4
    $region2: #{tpu_custom_call.1} parent=1 // loop_pre_header
      _
    $region3: #{tpu_custom_call.1} parent=1 // loop_header
      %s25 = sphi 0, %s29
      %p26 = scmp.ge.s32.totalorder %s25, 4
      %s35 = sphi 0, %s37
      %s38 = sphi 0, %s35
      %s39 = sphi 0, %s38
      %s55 = sphi 0, %s39
      %s59 = sphi 0, %s59
      %s61 = sphi 0, %s59
      %s62 = sphi 0, %s61
      %s76 = sphi 0, %s62
      %s80 = sphi 0, %s80
      %s82 = sphi 0, %s80
      %s83 = sphi 0, %s82
      %s97 = sphi 0, %s83
      %s101 = sphi 0, %s101
      %s103 = sphi 0, %s101
      %s104 = sphi 0, %s103
      %s118 = sphi 0, %s104
      %s122 = sphi 0, %s122
      %s124 = sphi 0, %s122
      %s125 = sphi 0, %s124
      %s139 = sphi 0, %s125
      %s143 = sphi 0, %s143
      %s145 = sphi 0, %s143
      %s146 = sphi 0, %s145
      %s160 = sphi 0, %s146
      %s164 = sphi 0, %s164
      %s166 = sphi 0, %s164
      %s167 = sphi 0, %s166
      %s181 = sphi 0, %s167
      %s185 = sphi 0, %s185
      %s187 = sphi 0, %s185
      %s188 = sphi 0, %s187
      %s202 = sphi 0, %s188
      %s206 = sphi 0, %s206
      %s208 = sphi 0, %s206
      %s209 = sphi 0, %s208
      %s223 = sphi 0, %s209
      %s227 = sphi 0, %s227
      %s229 = sphi 0, %s227
      %s230 = sphi 0, %s229
      %s244 = sphi 0, %s230
      %s248 = sphi 0, %s248
      %s250 = sphi 0, %s248
      %s251 = sphi 0, %s250
      %s265 = sphi 0, %s251
      %s271 = sphi 0, %s273
      %s274 = sphi 0, %s271
      %s275 = sphi 0, %s274
      %s291 = sphi 0, %s275
    $region4: #{tpu_custom_call.1} parent=1 // loop_header_branch
      %28 = sbr.rel (%p26) target = $region8
    $region5: #{tpu_custom_call.1} parent=1 // loop_body
      %s30 = ssub.s32 %s25, 1
      %s31 = ssub.s32 %s25, 2
      %s32 = sadd.s32 %s25, 1
      %s33 = ssub.s32 %s25, %s32
      %p34 = scmp.eq.s32.totalorder %s33, 0
      %s36 = sadd.s32 %s35, 1
      %s37 = scalar_select %p34, %s35, %s36
      %p40 = pneg %p34
      %p41 = scmp.eq.s32.totalorder %s25, 1
      %p42 = por %p40, %p41
      %p43 = scmp.ne.s32.totalorder %s35, %s38
      %p44 = scmp.eq.s32.totalorder %s25, 0
      %p45 = por %p43, %p44
      %p46 = scmp.ne.s32.totalorder %s35, %s38
      %p47 = scmp.eq.s32.totalorder %s30, 1
      %p48 = por %p46, %p47
      %p49 = scmp.ne.s32.totalorder %s38, %s39
      %p50 = scmp.eq.s32.totalorder %s30, 0
      %p51 = por %p49, %p50
      %p52 = scmp.ne.s32.totalorder %s38, %s39
      %p53 = scmp.eq.s32.totalorder %s31, 1
      %p54 = por %p52, %p53
      %p56 = scmp.ne.s32.totalorder %s39, %s55
      %p57 = scmp.eq.s32.totalorder %s31, 0
      %p58 = por %p56, %p57
      %s60 = sadd.s32 %s59, 1
      %p63 = scmp.eq.s32.totalorder %s25, 1
      %p64 = scmp.ne.s32.totalorder %s59, %s61
      %p65 = scmp.eq.s32.totalorder %s25, 0
      %p66 = por %p64, %p65
      %p67 = scmp.ne.s32.totalorder %s59, %s61
      %p68 = scmp.eq.s32.totalorder %s30, 1
      %p69 = por %p67, %p68
      %p70 = scmp.ne.s32.totalorder %s61, %s62
      %p71 = scmp.eq.s32.totalorder %s30, 0
      %p72 = por %p70, %p71
      %p73 = scmp.ne.s32.totalorder %s61, %s62
      %p74 = scmp.eq.s32.totalorder %s31, 1
      %p75 = por %p73, %p74
      %p77 = scmp.ne.s32.totalorder %s62, %s76
      %p78 = scmp.eq.s32.totalorder %s31, 0
      %p79 = por %p77, %p78
      %s81 = sadd.s32 %s80, 1
      %p84 = scmp.eq.s32.totalorder %s25, 1
      %p85 = scmp.ne.s32.totalorder %s80, %s82
      %p86 = scmp.eq.s32.totalorder %s25, 0
      %p87 = por %p85, %p86
      %p88 = scmp.ne.s32.totalorder %s80, %s82
      %p89 = scmp.eq.s32.totalorder %s30, 1
      %p90 = por %p88, %p89
      %p91 = scmp.ne.s32.totalorder %s82, %s83
      %p92 = scmp.eq.s32.totalorder %s30, 0
      %p93 = por %p91, %p92
      %p94 = scmp.ne.s32.totalorder %s82, %s83
      %p95 = scmp.eq.s32.totalorder %s31, 1
      %p96 = por %p94, %p95
      %p98 = scmp.ne.s32.totalorder %s83, %s97
      %p99 = scmp.eq.s32.totalorder %s31, 0
      %p100 = por %p98, %p99
      %s102 = sadd.s32 %s101, 1
      %p105 = scmp.eq.s32.totalorder %s25, 1
      %p106 = scmp.ne.s32.totalorder %s101, %s103
      %p107 = scmp.eq.s32.totalorder %s25, 0
      %p108 = por %p106, %p107
      %p109 = scmp.ne.s32.totalorder %s101, %s103
      %p110 = scmp.eq.s32.totalorder %s30, 1
      %p111 = por %p109, %p110
      %p112 = scmp.ne.s32.totalorder %s103, %s104
      %p113 = scmp.eq.s32.totalorder %s30, 0
      %p114 = por %p112, %p113
      %p115 = scmp.ne.s32.totalorder %s103, %s104
      %p116 = scmp.eq.s32.totalorder %s31, 1
      %p117 = por %p115, %p116
      %p119 = scmp.ne.s32.totalorder %s104, %s118
      %p120 = scmp.eq.s32.totalorder %s31, 0
      %p121 = por %p119, %p120
      %s123 = sadd.s32 %s122, 1
      %p126 = scmp.eq.s32.totalorder %s25, 1
      %p127 = scmp.ne.s32.totalorder %s122, %s124
      %p128 = scmp.eq.s32.totalorder %s25, 0
      %p129 = por %p127, %p128
      %p130 = scmp.ne.s32.totalorder %s122, %s124
      %p131 = scmp.eq.s32.totalorder %s30, 1
      %p132 = por %p130, %p131
      %p133 = scmp.ne.s32.totalorder %s124, %s125
      %p134 = scmp.eq.s32.totalorder %s30, 0
      %p135 = por %p133, %p134
      %p136 = scmp.ne.s32.totalorder %s124, %s125
      %p137 = scmp.eq.s32.totalorder %s31, 1
      %p138 = por %p136, %p137
      %p140 = scmp.ne.s32.totalorder %s125, %s139
      %p141 = scmp.eq.s32.totalorder %s31, 0
      %p142 = por %p140, %p141
      %s144 = sadd.s32 %s143, 1
      %p147 = scmp.eq.s32.totalorder %s25, 1
      %p148 = scmp.ne.s32.totalorder %s143, %s145
      %p149 = scmp.eq.s32.totalorder %s25, 0
      %p150 = por %p148, %p149
      %p151 = scmp.ne.s32.totalorder %s143, %s145
      %p152 = scmp.eq.s32.totalorder %s30, 1
      %p153 = por %p151, %p152
      %p154 = scmp.ne.s32.totalorder %s145, %s146
      %p155 = scmp.eq.s32.totalorder %s30, 0
      %p156 = por %p154, %p155
      %p157 = scmp.ne.s32.totalorder %s145, %s146
      %p158 = scmp.eq.s32.totalorder %s31, 1
      %p159 = por %p157, %p158
      %p161 = scmp.ne.s32.totalorder %s146, %s160
      %p162 = scmp.eq.s32.totalorder %s31, 0
      %p163 = por %p161, %p162
      %s165 = sadd.s32 %s164, 1
      %p168 = scmp.eq.s32.totalorder %s25, 1
      %p169 = scmp.ne.s32.totalorder %s164, %s166
      %p170 = scmp.eq.s32.totalorder %s25, 0
      %p171 = por %p169, %p170
      %p172 = scmp.ne.s32.totalorder %s164, %s166
      %p173 = scmp.eq.s32.totalorder %s30, 1
      %p174 = por %p172, %p173
      %p175 = scmp.ne.s32.totalorder %s166, %s167
      %p176 = scmp.eq.s32.totalorder %s30, 0
      %p177 = por %p175, %p176
      %p178 = scmp.ne.s32.totalorder %s166, %s167
      %p179 = scmp.eq.s32.totalorder %s31, 1
      %p180 = por %p178, %p179
      %p182 = scmp.ne.s32.totalorder %s167, %s181
      %p183 = scmp.eq.s32.totalorder %s31, 0
      %p184 = por %p182, %p183
      %s186 = sadd.s32 %s185, 1
      %p189 = scmp.eq.s32.totalorder %s25, 1
      %p190 = scmp.ne.s32.totalorder %s185, %s187
      %p191 = scmp.eq.s32.totalorder %s25, 0
      %p192 = por %p190, %p191
      %p193 = scmp.ne.s32.totalorder %s185, %s187
      %p194 = scmp.eq.s32.totalorder %s30, 1
      %p195 = por %p193, %p194
      %p196 = scmp.ne.s32.totalorder %s187, %s188
      %p197 = scmp.eq.s32.totalorder %s30, 0
      %p198 = por %p196, %p197
      %p199 = scmp.ne.s32.totalorder %s187, %s188
      %p200 = scmp.eq.s32.totalorder %s31, 1
      %p201 = por %p199, %p200
      %p203 = scmp.ne.s32.totalorder %s188, %s202
      %p204 = scmp.eq.s32.totalorder %s31, 0
      %p205 = por %p203, %p204
      %s207 = sadd.s32 %s206, 1
      %p210 = scmp.eq.s32.totalorder %s25, 1
      %p211 = scmp.ne.s32.totalorder %s206, %s208
      %p212 = scmp.eq.s32.totalorder %s25, 0
      %p213 = por %p211, %p212
      %p214 = scmp.ne.s32.totalorder %s206, %s208
      %p215 = scmp.eq.s32.totalorder %s30, 1
      %p216 = por %p214, %p215
      %p217 = scmp.ne.s32.totalorder %s208, %s209
      %p218 = scmp.eq.s32.totalorder %s30, 0
      %p219 = por %p217, %p218
      %p220 = scmp.ne.s32.totalorder %s208, %s209
      %p221 = scmp.eq.s32.totalorder %s31, 1
      %p222 = por %p220, %p221
      %p224 = scmp.ne.s32.totalorder %s209, %s223
      %p225 = scmp.eq.s32.totalorder %s31, 0
      %p226 = por %p224, %p225
      %s228 = sadd.s32 %s227, 1
      %p231 = scmp.eq.s32.totalorder %s25, 1
      %p232 = scmp.ne.s32.totalorder %s227, %s229
      %p233 = scmp.eq.s32.totalorder %s25, 0
      %p234 = por %p232, %p233
      %p235 = scmp.ne.s32.totalorder %s227, %s229
      %p236 = scmp.eq.s32.totalorder %s30, 1
      %p237 = por %p235, %p236
      %p238 = scmp.ne.s32.totalorder %s229, %s230
      %p239 = scmp.eq.s32.totalorder %s30, 0
      %p240 = por %p238, %p239
      %p241 = scmp.ne.s32.totalorder %s229, %s230
      %p242 = scmp.eq.s32.totalorder %s31, 1
      %p243 = por %p241, %p242
      %p245 = scmp.ne.s32.totalorder %s230, %s244
      %p246 = scmp.eq.s32.totalorder %s31, 0
      %p247 = por %p245, %p246
      %s249 = sadd.s32 %s248, 1
      %p252 = scmp.eq.s32.totalorder %s25, 1
      %p253 = scmp.ne.s32.totalorder %s248, %s250
      %p254 = scmp.eq.s32.totalorder %s25, 0
      %p255 = por %p253, %p254
      %p256 = scmp.ne.s32.totalorder %s248, %s250
      %p257 = scmp.eq.s32.totalorder %s30, 1
      %p258 = por %p256, %p257
      %p259 = scmp.ne.s32.totalorder %s250, %s251
      %p260 = scmp.eq.s32.totalorder %s30, 0
      %p261 = por %p259, %p260
      %p262 = scmp.ne.s32.totalorder %s250, %s251
      %p263 = scmp.eq.s32.totalorder %s31, 1
      %p264 = por %p262, %p263
      %p266 = scmp.ne.s32.totalorder %s251, %s265
      %p267 = scmp.eq.s32.totalorder %s31, 0
      %p268 = por %p266, %p267
      %s269 = ssub.s32 %s25, %s32
      %p270 = scmp.eq.s32.totalorder %s269, 0
      %s272 = sadd.s32 %s271, 1
      %s273 = scalar_select %p270, %s271, %s272
      %p276 = pneg %p270
      %p277 = scmp.eq.s32.totalorder %s25, 1
      %p278 = por %p276, %p277
      %p279 = scmp.ne.s32.totalorder %s271, %s274
      %p280 = scmp.eq.s32.totalorder %s25, 0
      %p281 = por %p279, %p280
      %p282 = scmp.ne.s32.totalorder %s271, %s274
      %p283 = scmp.eq.s32.totalorder %s30, 1
      %p284 = por %p282, %p283
      %p285 = scmp.ne.s32.totalorder %s274, %s275
      %p286 = scmp.eq.s32.totalorder %s30, 0
      %p287 = por %p285, %p286
      %p288 = scmp.ne.s32.totalorder %s274, %s275
      %p289 = scmp.eq.s32.totalorder %s31, 1
      %p290 = por %p288, %p289
      %p292 = scmp.ne.s32.totalorder %s275, %s291
      %p293 = scmp.eq.s32.totalorder %s31, 0
      %p294 = por %p292, %p293
      %p295 = scmp.le.s32.totalorder 1, %s25
      %p296 = scmp.lt.s32.totalorder %s25, 3
      %p297 = pnand %p295, %p296
      %p298 = pneg %p297
      // Predicated region
      $region9: #{tpu_custom_call.1} parent=5 // pred_check
        _
      $region10: #{tpu_custom_call.1} parent=5 // pred_check_branch
        %300 = sbr.rel (%p297) target = $region12
      $region11: #{tpu_custom_call.1} parent=5 // pred_region
        %s301 = ssub.s32 %s25, 1
        // Predicated region
        $region13: #{tpu_custom_call.1} parent=11 // pred_check
          %p302 = pneg %p72
        $region14: #{tpu_custom_call.1} parent=11 // pred_check_branch
          %304 = sbr.rel (%p302) target = $region16
        $region15: #{tpu_custom_call.1} parent=11 // pred_region
          _
        $region16: #{tpu_custom_call.1} parent=11 // pred_fallthru
          _
        // Predicated region
        $region17: #{tpu_custom_call.1} parent=11 // pred_check
          %p305 = pneg %p93
        $region18: #{tpu_custom_call.1} parent=11 // pred_check_branch
          %307 = sbr.rel (%p305) target = $region20
        $region19: #{tpu_custom_call.1} parent=11 // pred_region
          _
        $region20: #{tpu_custom_call.1} parent=11 // pred_fallthru
          _
        // Predicated region
        $region21: #{tpu_custom_call.1} parent=11 // pred_check
          %p308 = pneg %p114
        $region22: #{tpu_custom_call.1} parent=11 // pred_check_branch
          %310 = sbr.rel (%p308) target = $region24
        $region23: #{tpu_custom_call.1} parent=11 // pred_region
          %s312 = ssub.s32 64, 64
          %313 = vsyncadd [#allocation6], %s312
          %s314 = sshll.u32 [#allocation5], 4
          %s315 = int_to_ptr.vmem [resolvable:$true] %s314
          %320 = dma.hbm_to_vmem [thread:$0]  %s3, 64, %s315, [#allocation6], 32, 32, 2
        $region24: #{tpu_custom_call.1} parent=11 // pred_fallthru
          _
        // Predicated region
        $region25: #{tpu_custom_call.1} parent=11 // pred_check
          %p321 = pneg %p135
        $region26: #{tpu_custom_call.1} parent=11 // pred_check_branch
          %323 = sbr.rel (%p321) target = $region28
        $region27: #{tpu_custom_call.1} parent=11 // pred_region
          %s325 = ssub.s32 5120, 5120
          %326 = vsyncadd [#allocation6], %s325
          %s327 = sshll.u32 [#allocation7], 4
          %s328 = int_to_ptr.vmem [resolvable:$true] %s327
          %333 = dma.hbm_to_vmem [thread:$0]  %s4, 5120, %s328, [#allocation6], 64, 64, 4
        $region28: #{tpu_custom_call.1} parent=11 // pred_fallthru
          _
        // Predicated region
        $region29: #{tpu_custom_call.1} parent=11 // pred_check
          %p334 = pneg %p156
        $region30: #{tpu_custom_call.1} parent=11 // pred_check_branch
          %336 = sbr.rel (%p334) target = $region32
        $region31: #{tpu_custom_call.1} parent=11 // pred_region
          %s338 = ssub.s32 1024, 1024
          %339 = vsyncadd [#allocation9], %s338
          %s340 = sshll.u32 [#allocation8], 4
          %s341 = int_to_ptr.vmem [resolvable:$true] %s340
          %346 = dma.hbm_to_vmem [thread:$0]  %s5, 1024, %s341, [#allocation9], 64, 64, 4
        $region32: #{tpu_custom_call.1} parent=11 // pred_fallthru
          _
        // Predicated region
        $region33: #{tpu_custom_call.1} parent=11 // pred_check
          %p347 = pneg %p177
        $region34: #{tpu_custom_call.1} parent=11 // pred_check_branch
          %349 = sbr.rel (%p347) target = $region36
        $region35: #{tpu_custom_call.1} parent=11 // pred_region
          _
        $region36: #{tpu_custom_call.1} parent=11 // pred_fallthru
          _
        // Predicated region
        $region37: #{tpu_custom_call.1} parent=11 // pred_check
          %p350 = pneg %p198
        $region38: #{tpu_custom_call.1} parent=11 // pred_check_branch
          %352 = sbr.rel (%p350) target = $region40
        $region39: #{tpu_custom_call.1} parent=11 // pred_region
          _
        $region40: #{tpu_custom_call.1} parent=11 // pred_fallthru
          _
        // Predicated region
        $region41: #{tpu_custom_call.1} parent=11 // pred_check
          %p353 = pneg %p219
        $region42: #{tpu_custom_call.1} parent=11 // pred_check_branch
          %355 = sbr.rel (%p353) target = $region44
        $region43: #{tpu_custom_call.1} parent=11 // pred_region
          _
        $region44: #{tpu_custom_call.1} parent=11 // pred_fallthru
          _
        // Predicated region
        $region45: #{tpu_custom_call.1} parent=11 // pred_check
          %p356 = pneg %p240
        $region46: #{tpu_custom_call.1} parent=11 // pred_check_branch
          %358 = sbr.rel (%p356) target = $region48
        $region47: #{tpu_custom_call.1} parent=11 // pred_region
          _
        $region48: #{tpu_custom_call.1} parent=11 // pred_fallthru
          _
        // Predicated region
        $region49: #{tpu_custom_call.1} parent=11 // pred_check
          %p359 = pneg %p261
        $region50: #{tpu_custom_call.1} parent=11 // pred_check_branch
          %361 = sbr.rel (%p359) target = $region52
        $region51: #{tpu_custom_call.1} parent=11 // pred_region
          _
        $region52: #{tpu_custom_call.1} parent=11 // pred_fallthru
          _
      $region12: #{tpu_custom_call.1} parent=5 // pred_fallthru
        _
      %p362 = scmp.lt.s32.totalorder %s25, 2
      // Predicated region
      $region53: #{tpu_custom_call.1} parent=5 // pred_check
        %p363 = pneg %p362
      $region54: #{tpu_custom_call.1} parent=5 // pred_check_branch
        %365 = sbr.rel (%p363) target = $region56
      $region55: #{tpu_custom_call.1} parent=5 // pred_region
        // Predicated region
        $region57: #{tpu_custom_call.1} parent=55 // pred_check
          %p366 = pneg %p45
        $region58: #{tpu_custom_call.1} parent=55 // pred_check_branch
          %368 = sbr.rel (%p366) target = $region60
        $region59: #{tpu_custom_call.1} parent=55 // pred_region
          %s369 = sand.u32 %s35, 1
          %s370 = scalar_lea.sflag [#allocation3], %s369
          %s371 = sand.u32 %s35, 1
          %s372 = smul.addr %s371, 8
          %s373 = scalar_lea.vmem [#allocation2], %s372
          %s375 = ssub.s32 128, 128
          %376 = vsyncadd %s370, %s375
          %s377 = smul.addr %s25, 128
          %s378 = scalar_lea.hbm %s0, %s377
          %s380 = sshll.u32 %s373, 4
          %s381 = int_to_ptr.vmem [resolvable:$true] %s380
          %383 = dma.hbm_to_vmem [thread:$0]  %s378, 128, %s381, %s370
        $region60: #{tpu_custom_call.1} parent=55 // pred_fallthru
          _
      $region56: #{tpu_custom_call.1} parent=5 // pred_fallthru
        _
      %p384 = scmp.le.s32.totalorder 1, %s25
      %p385 = scmp.lt.s32.totalorder %s25, 3
      %p386 = pnand %p384, %p385
      %p387 = pneg %p386
      // Predicated region
      $region61: #{tpu_custom_call.1} parent=5 // pred_check
        _
      $region62: #{tpu_custom_call.1} parent=5 // pred_check_branch
        %389 = sbr.rel (%p386) target = $region64
      $region63: #{tpu_custom_call.1} parent=5 // pred_region
        %s390 = ssub.s32 %s25, 1
        %s391 = sand.u32 %s38, 1
        %s392 = scalar_lea.sflag [#allocation3], %s391
        %s393 = sand.u32 %s38, 1
        %s394 = smul.addr %s393, 8
        %s395 = scalar_lea.vmem [#allocation2], %s394
        // Predicated region
        $region65: #{tpu_custom_call.1} parent=63 // pred_check
          %p396 = pneg %p51
        $region66: #{tpu_custom_call.1} parent=63 // pred_check_branch
          %398 = sbr.rel (%p396) target = $region68
        $region67: #{tpu_custom_call.1} parent=63 // pred_region
          %399 = dma.done %s392, 128
        $region68: #{tpu_custom_call.1} parent=63 // pred_fallthru
          _
        // Predicated region
        $region69: #{tpu_custom_call.1} parent=63 // pred_check
          %p400 = pneg %p114
        $region70: #{tpu_custom_call.1} parent=63 // pred_check_branch
          %402 = sbr.rel (%p400) target = $region72
        $region71: #{tpu_custom_call.1} parent=63 // pred_region
          %403 = dma.done [#allocation6], 64
        $region72: #{tpu_custom_call.1} parent=63 // pred_fallthru
          _
        // Predicated region
        $region73: #{tpu_custom_call.1} parent=63 // pred_check
          %p404 = pneg %p135
        $region74: #{tpu_custom_call.1} parent=63 // pred_check_branch
          %406 = sbr.rel (%p404) target = $region76
        $region75: #{tpu_custom_call.1} parent=63 // pred_region
          %407 = dma.done [#allocation6], 5120
        $region76: #{tpu_custom_call.1} parent=63 // pred_fallthru
          _
        // Predicated region
        $region77: #{tpu_custom_call.1} parent=63 // pred_check
          %p408 = pneg %p156
        $region78: #{tpu_custom_call.1} parent=63 // pred_check_branch
          %410 = sbr.rel (%p408) target = $region80
        $region79: #{tpu_custom_call.1} parent=63 // pred_region
          %411 = dma.done [#allocation9], 1024
        $region80: #{tpu_custom_call.1} parent=63 // pred_fallthru
          _
        %s412 = sand.u32 %s38, 1
        %s413 = scalar_lea.sflag [#allocation3], %s412
        %s414 = sand.u32 %s38, 1
        %s415 = smul.addr %s414, 8
        %s416 = scalar_lea.vmem [#allocation2], %s415
        %p417 = pneg %p51
        %p418 = pneg %p48
        %p419 = pneg %p72
        %p420 = pneg %p69
        %p421 = pneg %p93
        %p422 = pneg %p90
        %p423 = pneg %p114
        %p424 = pneg %p111
        %p425 = pneg %p135
        %p426 = pneg %p132
        %p427 = pneg %p156
        %p428 = pneg %p153
        %p429 = pneg %p177
        %p430 = pneg %p174
        %p431 = pneg %p198
        %p432 = pneg %p195
        %p433 = pneg %p219
        %p434 = pneg %p216
        %p435 = pneg %p240
        %p436 = pneg %p237
        %p437 = pneg %p261
        %p438 = pneg %p258
        %p439 = pneg %p287
        %p440 = pneg %p284
        %s441 = sand.u32 %s274, 1
        %s442 = scalar_lea.sflag [#allocation4], %s441
        %s443 = sand.u32 %s274, 1
        %s444 = scalar_lea.vmem [#allocation10], %s443
        %v446 = vld [vmem:[%s1] sm:$0xff]
        %v447 = vld [vmem:[%s395] sm:$0xff]
        %v448 = vadd.f32 %v447, %v446
        %v449 = vld [vmem:[%s8] sm:$0xff]
        %v450 = vld [vmem:[%s8 + $0x8] sm:$0x3]
        %v451 = vld [vmem:[%s2] sm:$0xff]
        %v452 = vld [vmem:[%s2 + $0x8] sm:$0xff]
        %v453 = vld [vmem:[%s2 + $0x10] sm:$0xff]
        %v454 = vld [vmem:[%s2 + $0x18] sm:$0xff]
        %v455 = vld [vmem:[%s2 + $0x20] sm:$0xff]
        %v456 = vld [vmem:[%s2 + $0x28] sm:$0xff]
        %v457 = vld [vmem:[%s2 + $0x30] sm:$0xff]
        %v458 = vld [vmem:[%s2 + $0x38] sm:$0xff]
        %v459 = vld [vmem:[#allocation5] sm:$0x3]
        %v460 = vpack.c.bf16 %v448, %v448
        %v462 = vlaneseq
        %v463 = vshrl.u32 %v462, 7
        %v464 = vsub.s32 0, %v463
        %v465 = vrot.slane %v459, %v464
        %v466 = vlaneseq
        %v467 = vshrl.u32 %v466, 7
        %v468 = vsub.s32 1, %v467
        %v469 = vrot.slane %v459, %v468
        %v480 = vunpack.c.l.b16 %v451
        %v481 = vunpack.c.h.b16 %v451
        %v482 = vunpack.c.l.b16 %v452
        %v483 = vunpack.c.h.b16 %v452
        %v484 = vunpack.c.l.b16 %v453
        %v485 = vunpack.c.h.b16 %v453
        %v486 = vunpack.c.l.b16 %v454
        %v487 = vunpack.c.h.b16 %v454
        %v488 = vunpack.c.l.b16 %v455
        %v489 = vunpack.c.h.b16 %v455
        %v490 = vunpack.c.l.b16 %v456
        %v491 = vunpack.c.h.b16 %v456
        %v492 = vunpack.c.l.b16 %v457
        %v493 = vunpack.c.h.b16 %v457
        %v494 = vunpack.c.l.b16 %v458
        %v495 = vunpack.c.h.b16 %v458
        %v496 = vpack.c.b16 %v482, %v480
        %v497 = vpack.c.b16 %v483, %v481
        %v498 = vpack.c.b16 %v486, %v484
        %v499 = vpack.c.b16 %v487, %v485
        %v500 = vpack.c.b16 %v490, %v488
        %v501 = vpack.c.b16 %v491, %v489
        %v502 = vpack.c.b16 %v494, %v492
        %v503 = vpack.c.b16 %v495, %v493
        %vm512 = vcmask 523264
        %v514 = vsel %vm512, %v460, 0
        %516 = vmatprep.subr.bf16.mxu0 %v497
        %517 = vmatpush1.bf16.msra.mxu0 %v496
        %518 = vmatprep.subr.bf16.mxu0 %v499
        %519 = vmatpush1.bf16.msra.mxu0 %v498
        %520 = vmatprep.subr.bf16.mxu0 %v501
        %521 = vmatpush1.bf16.msra.mxu0 %v500
        %522 = vmatprep.subr.bf16.mxu0 %v503
        %523 = vmatpush1.bf16.msra.mxu0 %v502
        %524 = vmatprep.subr.bf16.mxu0 0
        %525 = vmatpush1.bf16.msra.mxu0 0
        %526 = vmatprep.subr.bf16.mxu0 0
        %527 = vmatpush1.bf16.msra.mxu0 0
        %528 = vmatprep.subr.bf16.mxu0 0
        %529 = vmatpush1.bf16.msra.mxu0 0
        %530 = vmatprep.subr.bf16.mxu0 0
        %531 = vmatpush1.bf16.msra.mxu0 0
        %532 = vmatprep.subr.bf16.mxu0 0
        %533 = vmatpush1.bf16.msra.mxu0 0
        %534 = vmatprep.subr.bf16.mxu0 0
        %535 = vmatpush1.bf16.msra.mxu0 0
        %536 = vmatprep.subr.bf16.mxu0 0
        %537 = vmatpush1.bf16.msra.mxu0 0
        %538 = vmatprep.subr.bf16.mxu0 0
        %539 = vmatpush1.bf16.msra.mxu0 0
        %540 = vmatprep.subr.bf16.mxu0 0
        %541 = vmatpush1.bf16.msra.mxu0 0
        %542 = vmatprep.subr.bf16.mxu0 0
        %543 = vmatpush1.bf16.msra.mxu0 0
        %544 = vmatprep.subr.bf16.mxu0 0
        %545 = vmatpush1.bf16.msra.mxu0 0
        %546 = vmatprep.subr.bf16.mxu0 0
        %547 = vmatpush1.bf16.msra.mxu0 0
        %548 = vmatprep.mubr.bf16.mxu0 0
        %549 = vmatmul.mubr.bf16.gmra.mrb[0].mxu0 %v514
        %v550 = vpop.f32.mrb[0].mxu0
        %v551 = vadd.f32 %v465, %v550
        %v552 = vpop.f32.mrb[0].mxu0
        %v553 = vadd.f32 %v469, %v552
        %v554 = vpop.f32.mrb[0].mxu0
        %v555 = vpop.f32.mrb[0].mxu0
        %556 = vdwg.mxu0
        %v557 = vmul.f32 %v551, 0.35355338
        %v558 = vpack.c.bf16 %v557, %v557
        %v559 = vpack.c.bf16 %v551, %v551
        %561 = vrot.lane.b32.xlu0 %v559, 64
        %v562 = vpop.permute.xlu0 %561
        %vm563 = vcmask 64512
        %v565 = vsel %vm563, %v558, 0
        %v568 = vsel %vm563, %v562, 0
        %570 = vmatprep.subr.bf16.mxu0 0
        %571 = vmatpush1.bf16.xpose.msra.mxu0 %v568
        %572 = vmatprep.subr.bf16.mxu0 0
        %573 = vmatpush1.bf16.xpose.msra.mxu0 0
        %574 = vmatprep.subr.bf16.mxu0 0
        %575 = vmatpush1.bf16.xpose.msra.mxu0 0
        %576 = vmatprep.subr.bf16.mxu0 0
        %577 = vmatpush1.bf16.xpose.msra.mxu0 0
        %578 = vmatprep.subr.bf16.mxu0 0
        %579 = vmatpush1.bf16.xpose.msra.mxu0 0
        %580 = vmatprep.subr.bf16.mxu0 0
        %581 = vmatpush1.bf16.xpose.msra.mxu0 0
        %582 = vmatprep.subr.bf16.mxu0 0
        %583 = vmatpush1.bf16.xpose.msra.mxu0 0
        %584 = vmatprep.subr.bf16.mxu0 0
        %585 = vmatpush1.bf16.xpose.msra.mxu0 0
        %586 = vmatprep.subr.bf16.mxu0 0
        %587 = vmatpush1.bf16.xpose.msra.mxu0 0
        %588 = vmatprep.subr.bf16.mxu0 0
        %589 = vmatpush1.bf16.xpose.msra.mxu0 0
        %590 = vmatprep.subr.bf16.mxu0 0
        %591 = vmatpush1.bf16.xpose.msra.mxu0 0
        %592 = vmatprep.subr.bf16.mxu0 0
        %593 = vmatpush1.bf16.xpose.msra.mxu0 0
        %594 = vmatprep.subr.bf16.mxu0 0
        %595 = vmatpush1.bf16.xpose.msra.mxu0 0
        %596 = vmatprep.subr.bf16.mxu0 0
        %597 = vmatpush1.bf16.xpose.msra.mxu0 0
        %598 = vmatprep.subr.bf16.mxu0 0
        %599 = vmatpush1.bf16.xpose.msra.mxu0 0
        %600 = vmatprep.subr.bf16.mxu0 0
        %601 = vmatpush1.bf16.xpose.msra.mxu0 0
        %602 = vmatprep.mubr.bf16.mxu0 0
        %603 = vmatmul.mubr.bf16.gmra.mrb[0].mxu0 %v565
        %v604 = vpop.f32.mrb[0].mxu0
        %v605 = vadd.f32 0.0, %v604
        %v606 = vpop.f32.mrb[0].mxu0
        %v607 = vpop.f32.mrb[0].mxu0
        %v608 = vpop.f32.mrb[0].mxu0
        %609 = vdwg.mxu0
        %v610 = vsel %vm563, %v605, -inf
        %611 = vmax.xlane.f32.xlu0 %v610
        %v612 = vpop.xlane.xlu0 %611
        %v613 = vsub.f32 %v605, %v612
        %v614 = vmul.f32 %v613, 1.442695
        %v615 = vpow.pop %v614
        %v616 = vsel %vm563, %v615, 0.0
        %617 = vadd.xlane.f32.xlu0 %v616
        %v618 = vpop.xlane.xlu0 %617
        %v619 = vrcp.pop %v618
        %v620 = vmul.f32 %v615, %v619
        %v621 = vpack.c.bf16 %v620, %v620
        %v622 = vpack.c.bf16 %v553, %v553
        %v624 = vsel %vm563, %v621, 0
        %vm626 = vcmask 1043456
        %v628 = vsel %vm626, %v622, 0
        %630 = vmatprep.subr.bf16.mxu0 0
        %631 = vmatpush1.bf16.msra.mxu0 %v628
        %632 = vmatprep.subr.bf16.mxu0 0
        %633 = vmatpush1.bf16.msra.mxu0 0
        %634 = vmatprep.subr.bf16.mxu0 0
        %635 = vmatpush1.bf16.msra.mxu0 0
        %636 = vmatprep.subr.bf16.mxu0 0
        %637 = vmatpush1.bf16.msra.mxu0 0
        %638 = vmatprep.subr.bf16.mxu0 0
        %639 = vmatpush1.bf16.msra.mxu0 0
        %640 = vmatprep.subr.bf16.mxu0 0
        %641 = vmatpush1.bf16.msra.mxu0 0
        %642 = vmatprep.subr.bf16.mxu0 0
        %643 = vmatpush1.bf16.msra.mxu0 0
        %644 = vmatprep.subr.bf16.mxu0 0
        %645 = vmatpush1.bf16.msra.mxu0 0
        %646 = vmatprep.subr.bf16.mxu0 0
        %647 = vmatpush1.bf16.msra.mxu0 0
        %648 = vmatprep.subr.bf16.mxu0 0
        %649 = vmatpush1.bf16.msra.mxu0 0
        %650 = vmatprep.subr.bf16.mxu0 0
        %651 = vmatpush1.bf16.msra.mxu0 0
        %652 = vmatprep.subr.bf16.mxu0 0
        %653 = vmatpush1.bf16.msra.mxu0 0
        %654 = vmatprep.subr.bf16.mxu0 0
        %655 = vmatpush1.bf16.msra.mxu0 0
        %656 = vmatprep.subr.bf16.mxu0 0
        %657 = vmatpush1.bf16.msra.mxu0 0
        %658 = vmatprep.subr.bf16.mxu0 0
        %659 = vmatpush1.bf16.msra.mxu0 0
        %660 = vmatprep.subr.bf16.mxu0 0
        %661 = vmatpush1.bf16.msra.mxu0 0
        %662 = vmatprep.mubr.bf16.mxu0 0
        %663 = vmatmul.mubr.bf16.gmra.mrb[0].mxu0 %v624
        %v664 = vpop.f32.mrb[0].mxu0
        %v665 = vadd.f32 0.0, %v664
        %v666 = vpop.f32.mrb[0].mxu0
        %v667 = vpop.f32.mrb[0].mxu0
        %v668 = vpop.f32.mrb[0].mxu0
        %669 = vdwg.mxu0
        %671 = vrot.lane.b32.xlu0 %v558, 120
        %v672 = vpop.permute.xlu0 %671
        %673 = vrot.lane.b32.xlu0 %v559, 56
        %v674 = vpop.permute.xlu0 %673
        %v676 = vsel %vm563, %v672, 0
        %v679 = vsel %vm563, %v674, 0
        %681 = vmatprep.subr.bf16.mxu0 0
        %682 = vmatpush1.bf16.xpose.msra.mxu0 %v679
        %683 = vmatprep.subr.bf16.mxu0 0
        %684 = vmatpush1.bf16.xpose.msra.mxu0 0
        %685 = vmatprep.subr.bf16.mxu0 0
        %686 = vmatpush1.bf16.xpose.msra.mxu0 0
        %687 = vmatprep.subr.bf16.mxu0 0
        %688 = vmatpush1.bf16.xpose.msra.mxu0 0
        %689 = vmatprep.subr.bf16.mxu0 0
        %690 = vmatpush1.bf16.xpose.msra.mxu0 0
        %691 = vmatprep.subr.bf16.mxu0 0
        %692 = vmatpush1.bf16.xpose.msra.mxu0 0
        %693 = vmatprep.subr.bf16.mxu0 0
        %694 = vmatpush1.bf16.xpose.msra.mxu0 0
        %695 = vmatprep.subr.bf16.mxu0 0
        %696 = vmatpush1.bf16.xpose.msra.mxu0 0
        %697 = vmatprep.subr.bf16.mxu0 0
        %698 = vmatpush1.bf16.xpose.msra.mxu0 0
        %699 = vmatprep.subr.bf16.mxu0 0
        %700 = vmatpush1.bf16.xpose.msra.mxu0 0
        %701 = vmatprep.subr.bf16.mxu0 0
        %702 = vmatpush1.bf16.xpose.msra.mxu0 0
        %703 = vmatprep.subr.bf16.mxu0 0
        %704 = vmatpush1.bf16.xpose.msra.mxu0 0
        %705 = vmatprep.subr.bf16.mxu0 0
        %706 = vmatpush1.bf16.xpose.msra.mxu0 0
        %707 = vmatprep.subr.bf16.mxu0 0
        %708 = vmatpush1.bf16.xpose.msra.mxu0 0
        %709 = vmatprep.subr.bf16.mxu0 0
        %710 = vmatpush1.bf16.xpose.msra.mxu0 0
        %711 = vmatprep.subr.bf16.mxu0 0
        %712 = vmatpush1.bf16.xpose.msra.mxu0 0
        %713 = vmatprep.mubr.bf16.mxu0 0
        %714 = vmatmul.mubr.bf16.gmra.mrb[0].mxu0 %v676
        %v715 = vpop.f32.mrb[0].mxu0
        %v716 = vadd.f32 0.0, %v715
        %v717 = vpop.f32.mrb[0].mxu0
        %v718 = vpop.f32.mrb[0].mxu0
        %v719 = vpop.f32.mrb[0].mxu0
        %720 = vdwg.mxu0
        %v721 = vsel %vm563, %v716, -inf
        %722 = vmax.xlane.f32.xlu0 %v721
        %v723 = vpop.xlane.xlu0 %722
        %v724 = vsub.f32 %v716, %v723
        %v725 = vmul.f32 %v724, 1.442695
        %v726 = vpow.pop %v725
        %v727 = vsel %vm563, %v726, 0.0
        %728 = vadd.xlane.f32.xlu0 %v727
        %v729 = vpop.xlane.xlu0 %728
        %v730 = vrcp.pop %v729
        %v731 = vmul.f32 %v726, %v730
        %v732 = vpack.c.bf16 %v731, %v731
        %734 = vrot.lane.b32.xlu0 %v622, 120
        %v735 = vpop.permute.xlu0 %734
        %v737 = vsel %vm563, %v732, 0
        %v740 = vsel %vm626, %v735, 0
        %742 = vmatprep.subr.bf16.mxu0 0
        %743 = vmatpush1.bf16.msra.mxu0 %v740
        %744 = vmatprep.subr.bf16.mxu0 0
        %745 = vmatpush1.bf16.msra.mxu0 0
        %746 = vmatprep.subr.bf16.mxu0 0
        %747 = vmatpush1.bf16.msra.mxu0 0
        %748 = vmatprep.subr.bf16.mxu0 0
        %749 = vmatpush1.bf16.msra.mxu0 0
        %750 = vmatprep.subr.bf16.mxu0 0
        %751 = vmatpush1.bf16.msra.mxu0 0
        %752 = vmatprep.subr.bf16.mxu0 0
        %753 = vmatpush1.bf16.msra.mxu0 0
        %754 = vmatprep.subr.bf16.mxu0 0
        %755 = vmatpush1.bf16.msra.mxu0 0
        %756 = vmatprep.subr.bf16.mxu0 0
        %757 = vmatpush1.bf16.msra.mxu0 0
        %758 = vmatprep.subr.bf16.mxu0 0
        %759 = vmatpush1.bf16.msra.mxu0 0
        %760 = vmatprep.subr.bf16.mxu0 0
        %761 = vmatpush1.bf16.msra.mxu0 0
        %762 = vmatprep.subr.bf16.mxu0 0
        %763 = vmatpush1.bf16.msra.mxu0 0
        %764 = vmatprep.subr.bf16.mxu0 0
        %765 = vmatpush1.bf16.msra.mxu0 0
        %766 = vmatprep.subr.bf16.mxu0 0
        %767 = vmatpush1.bf16.msra.mxu0 0
        %768 = vmatprep.subr.bf16.mxu0 0
        %769 = vmatpush1.bf16.msra.mxu0 0
        %770 = vmatprep.subr.bf16.mxu0 0
        %771 = vmatpush1.bf16.msra.mxu0 0
        %772 = vmatprep.subr.bf16.mxu0 0
        %773 = vmatpush1.bf16.msra.mxu0 0
        %774 = vmatprep.mubr.bf16.mxu0 0
        %775 = vmatmul.mubr.bf16.gmra.mrb[0].mxu0 %v737
        %v776 = vpop.f32.mrb[0].mxu0
        %v777 = vadd.f32 0.0, %v776
        %v778 = vpop.f32.mrb[0].mxu0
        %v779 = vpop.f32.mrb[0].mxu0
        %v780 = vpop.f32.mrb[0].mxu0
        %781 = vdwg.mxu0
        %782 = vrot.lane.b32.xlu0 %v558, 112
        %v783 = vpop.permute.xlu0 %782
        %784 = vrot.lane.b32.xlu0 %v559, 48
        %v785 = vpop.permute.xlu0 %784
        %v787 = vsel %vm563, %v783, 0
        %v790 = vsel %vm563, %v785, 0
        %792 = vmatprep.subr.bf16.mxu0 0
        %793 = vmatpush1.bf16.xpose.msra.mxu0 %v790
        %794 = vmatprep.subr.bf16.mxu0 0
        %795 = vmatpush1.bf16.xpose.msra.mxu0 0
        %796 = vmatprep.subr.bf16.mxu0 0
        %797 = vmatpush1.bf16.xpose.msra.mxu0 0
        %798 = vmatprep.subr.bf16.mxu0 0
        %799 = vmatpush1.bf16.xpose.msra.mxu0 0
        %800 = vmatprep.subr.bf16.mxu0 0
        %801 = vmatpush1.bf16.xpose.msra.mxu0 0
        %802 = vmatprep.subr.bf16.mxu0 0
        %803 = vmatpush1.bf16.xpose.msra.mxu0 0
        %804 = vmatprep.subr.bf16.mxu0 0
        %805 = vmatpush1.bf16.xpose.msra.mxu0 0
        %806 = vmatprep.subr.bf16.mxu0 0
        %807 = vmatpush1.bf16.xpose.msra.mxu0 0
        %808 = vmatprep.subr.bf16.mxu0 0
        %809 = vmatpush1.bf16.xpose.msra.mxu0 0
        %810 = vmatprep.subr.bf16.mxu0 0
        %811 = vmatpush1.bf16.xpose.msra.mxu0 0
        %812 = vmatprep.subr.bf16.mxu0 0
        %813 = vmatpush1.bf16.xpose.msra.mxu0 0
        %814 = vmatprep.subr.bf16.mxu0 0
        %815 = vmatpush1.bf16.xpose.msra.mxu0 0
        %816 = vmatprep.subr.bf16.mxu0 0
        %817 = vmatpush1.bf16.xpose.msra.mxu0 0
        %818 = vmatprep.subr.bf16.mxu0 0
        %819 = vmatpush1.bf16.xpose.msra.mxu0 0
        %820 = vmatprep.subr.bf16.mxu0 0
        %821 = vmatpush1.bf16.xpose.msra.mxu0 0
        %822 = vmatprep.subr.bf16.mxu0 0
        %823 = vmatpush1.bf16.xpose.msra.mxu0 0
        %824 = vmatprep.mubr.bf16.mxu0 0
        %825 = vmatmul.mubr.bf16.gmra.mrb[0].mxu0 %v787
        %v826 = vpop.f32.mrb[0].mxu0
        %v827 = vadd.f32 0.0, %v826
        %v828 = vpop.f32.mrb[0].mxu0
        %v829 = vpop.f32.mrb[0].mxu0
        %v830 = vpop.f32.mrb[0].mxu0
        %831 = vdwg.mxu0
        %v832 = vsel %vm563, %v827, -inf
        %833 = vmax.xlane.f32.xlu0 %v832
        %v834 = vpop.xlane.xlu0 %833
        %v835 = vsub.f32 %v827, %v834
        %v836 = vmul.f32 %v835, 1.442695
        %v837 = vpow.pop %v836
        %v838 = vsel %vm563, %v837, 0.0
        %839 = vadd.xlane.f32.xlu0 %v838
        %v840 = vpop.xlane.xlu0 %839
        %v841 = vrcp.pop %v840
        %v842 = vmul.f32 %v837, %v841
        %v843 = vpack.c.bf16 %v842, %v842
        %844 = vrot.lane.b32.xlu0 %v622, 112
        %v845 = vpop.permute.xlu0 %844
        %v847 = vsel %vm563, %v843, 0
        %v850 = vsel %vm626, %v845, 0
        %852 = vmatprep.subr.bf16.mxu0 0
        %853 = vmatpush1.bf16.msra.mxu0 %v850
        %854 = vmatprep.subr.bf16.mxu0 0
        %855 = vmatpush1.bf16.msra.mxu0 0
        %856 = vmatprep.subr.bf16.mxu0 0
        %857 = vmatpush1.bf16.msra.mxu0 0
        %858 = vmatprep.subr.bf16.mxu0 0
        %859 = vmatpush1.bf16.msra.mxu0 0
        %860 = vmatprep.subr.bf16.mxu0 0
        %861 = vmatpush1.bf16.msra.mxu0 0
        %862 = vmatprep.subr.bf16.mxu0 0
        %863 = vmatpush1.bf16.msra.mxu0 0
        %864 = vmatprep.subr.bf16.mxu0 0
        %865 = vmatpush1.bf16.msra.mxu0 0
        %866 = vmatprep.subr.bf16.mxu0 0
        %867 = vmatpush1.bf16.msra.mxu0 0
        %868 = vmatprep.subr.bf16.mxu0 0
        %869 = vmatpush1.bf16.msra.mxu0 0
        %870 = vmatprep.subr.bf16.mxu0 0
        %871 = vmatpush1.bf16.msra.mxu0 0
        %872 = vmatprep.subr.bf16.mxu0 0
        %873 = vmatpush1.bf16.msra.mxu0 0
        %874 = vmatprep.subr.bf16.mxu0 0
        %875 = vmatpush1.bf16.msra.mxu0 0
        %876 = vmatprep.subr.bf16.mxu0 0
        %877 = vmatpush1.bf16.msra.mxu0 0
        %878 = vmatprep.subr.bf16.mxu0 0
        %879 = vmatpush1.bf16.msra.mxu0 0
        %880 = vmatprep.subr.bf16.mxu0 0
        %881 = vmatpush1.bf16.msra.mxu0 0
        %882 = vmatprep.subr.bf16.mxu0 0
        %883 = vmatpush1.bf16.msra.mxu0 0
        %884 = vmatprep.mubr.bf16.mxu0 0
        %885 = vmatmul.mubr.bf16.gmra.mrb[0].mxu0 %v847
        %v886 = vpop.f32.mrb[0].mxu0
        %v887 = vadd.f32 0.0, %v886
        %v888 = vpop.f32.mrb[0].mxu0
        %v889 = vpop.f32.mrb[0].mxu0
        %v890 = vpop.f32.mrb[0].mxu0
        %891 = vdwg.mxu0
        %892 = vrot.lane.b32.xlu0 %v558, 104
        %v893 = vpop.permute.xlu0 %892
        %894 = vrot.lane.b32.xlu0 %v559, 40
        %v895 = vpop.permute.xlu0 %894
        %v897 = vsel %vm563, %v893, 0
        %v900 = vsel %vm563, %v895, 0
        %902 = vmatprep.subr.bf16.mxu0 0
        %903 = vmatpush1.bf16.xpose.msra.mxu0 %v900
        %904 = vmatprep.subr.bf16.mxu0 0
        %905 = vmatpush1.bf16.xpose.msra.mxu0 0
        %906 = vmatprep.subr.bf16.mxu0 0
        %907 = vmatpush1.bf16.xpose.msra.mxu0 0
        %908 = vmatprep.subr.bf16.mxu0 0
        %909 = vmatpush1.bf16.xpose.msra.mxu0 0
        %910 = vmatprep.subr.bf16.mxu0 0
        %911 = vmatpush1.bf16.xpose.msra.mxu0 0
        %912 = vmatprep.subr.bf16.mxu0 0
        %913 = vmatpush1.bf16.xpose.msra.mxu0 0
        %914 = vmatprep.subr.bf16.mxu0 0
        %915 = vmatpush1.bf16.xpose.msra.mxu0 0
        %916 = vmatprep.subr.bf16.mxu0 0
        %917 = vmatpush1.bf16.xpose.msra.mxu0 0
        %918 = vmatprep.subr.bf16.mxu0 0
        %919 = vmatpush1.bf16.xpose.msra.mxu0 0
        %920 = vmatprep.subr.bf16.mxu0 0
        %921 = vmatpush1.bf16.xpose.msra.mxu0 0
        %922 = vmatprep.subr.bf16.mxu0 0
        %923 = vmatpush1.bf16.xpose.msra.mxu0 0
        %924 = vmatprep.subr.bf16.mxu0 0
        %925 = vmatpush1.bf16.xpose.msra.mxu0 0
        %926 = vmatprep.subr.bf16.mxu0 0
        %927 = vmatpush1.bf16.xpose.msra.mxu0 0
        %928 = vmatprep.subr.bf16.mxu0 0
        %929 = vmatpush1.bf16.xpose.msra.mxu0 0
        %930 = vmatprep.subr.bf16.mxu0 0
        %931 = vmatpush1.bf16.xpose.msra.mxu0 0
        %932 = vmatprep.subr.bf16.mxu0 0
        %933 = vmatpush1.bf16.xpose.msra.mxu0 0
        %934 = vmatprep.mubr.bf16.mxu0 0
        %935 = vmatmul.mubr.bf16.gmra.mrb[0].mxu0 %v897
        %v936 = vpop.f32.mrb[0].mxu0
        %v937 = vadd.f32 0.0, %v936
        %v938 = vpop.f32.mrb[0].mxu0
        %v939 = vpop.f32.mrb[0].mxu0
        %v940 = vpop.f32.mrb[0].mxu0
        %941 = vdwg.mxu0
        %v942 = vsel %vm563, %v937, -inf
        %943 = vmax.xlane.f32.xlu0 %v942
        %v944 = vpop.xlane.xlu0 %943
        %v945 = vsub.f32 %v937, %v944
        %v946 = vmul.f32 %v945, 1.442695
        %v947 = vpow.pop %v946
        %v948 = vsel %vm563, %v947, 0.0
        %949 = vadd.xlane.f32.xlu0 %v948
        %v950 = vpop.xlane.xlu0 %949
        %v951 = vrcp.pop %v950
        %v952 = vmul.f32 %v947, %v951
        %v953 = vpack.c.bf16 %v952, %v952
        %954 = vrot.lane.b32.xlu0 %v622, 104
        %v955 = vpop.permute.xlu0 %954
        %v957 = vsel %vm563, %v953, 0
        %v960 = vsel %vm626, %v955, 0
        %962 = vmatprep.subr.bf16.mxu0 0
        %963 = vmatpush1.bf16.msra.mxu0 %v960
        %964 = vmatprep.subr.bf16.mxu0 0
        %965 = vmatpush1.bf16.msra.mxu0 0
        %966 = vmatprep.subr.bf16.mxu0 0
        %967 = vmatpush1.bf16.msra.mxu0 0
        %968 = vmatprep.subr.bf16.mxu0 0
        %969 = vmatpush1.bf16.msra.mxu0 0
        %970 = vmatprep.subr.bf16.mxu0 0
        %971 = vmatpush1.bf16.msra.mxu0 0
        %972 = vmatprep.subr.bf16.mxu0 0
        %973 = vmatpush1.bf16.msra.mxu0 0
        %974 = vmatprep.subr.bf16.mxu0 0
        %975 = vmatpush1.bf16.msra.mxu0 0
        %976 = vmatprep.subr.bf16.mxu0 0
        %977 = vmatpush1.bf16.msra.mxu0 0
        %978 = vmatprep.subr.bf16.mxu0 0
        %979 = vmatpush1.bf16.msra.mxu0 0
        %980 = vmatprep.subr.bf16.mxu0 0
        %981 = vmatpush1.bf16.msra.mxu0 0
        %982 = vmatprep.subr.bf16.mxu0 0
        %983 = vmatpush1.bf16.msra.mxu0 0
        %984 = vmatprep.subr.bf16.mxu0 0
        %985 = vmatpush1.bf16.msra.mxu0 0
        %986 = vmatprep.subr.bf16.mxu0 0
        %987 = vmatpush1.bf16.msra.mxu0 0
        %988 = vmatprep.subr.bf16.mxu0 0
        %989 = vmatpush1.bf16.msra.mxu0 0
        %990 = vmatprep.subr.bf16.mxu0 0
        %991 = vmatpush1.bf16.msra.mxu0 0
        %992 = vmatprep.subr.bf16.mxu0 0
        %993 = vmatpush1.bf16.msra.mxu0 0
        %994 = vmatprep.mubr.bf16.mxu0 0
        %995 = vmatmul.mubr.bf16.gmra.mrb[0].mxu0 %v957
        %v996 = vpop.f32.mrb[0].mxu0
        %v997 = vadd.f32 0.0, %v996
        %v998 = vpop.f32.mrb[0].mxu0
        %v999 = vpop.f32.mrb[0].mxu0
        %v1000 = vpop.f32.mrb[0].mxu0
        %1001 = vdwg.mxu0
        %1002 = vrot.lane.b32.xlu0 %v558, 96
        %v1003 = vpop.permute.xlu0 %1002
        %1004 = vrot.lane.b32.xlu0 %v559, 32
        %v1005 = vpop.permute.xlu0 %1004
        %v1007 = vsel %vm563, %v1003, 0
        %v1010 = vsel %vm563, %v1005, 0
        %1012 = vmatprep.subr.bf16.mxu0 0
        %1013 = vmatpush1.bf16.xpose.msra.mxu0 %v1010
        %1014 = vmatprep.subr.bf16.mxu0 0
        %1015 = vmatpush1.bf16.xpose.msra.mxu0 0
        %1016 = vmatprep.subr.bf16.mxu0 0
        %1017 = vmatpush1.bf16.xpose.msra.mxu0 0
        %1018 = vmatprep.subr.bf16.mxu0 0
        %1019 = vmatpush1.bf16.xpose.msra.mxu0 0
        %1020 = vmatprep.subr.bf16.mxu0 0
        %1021 = vmatpush1.bf16.xpose.msra.mxu0 0
        %1022 = vmatprep.subr.bf16.mxu0 0
        %1023 = vmatpush1.bf16.xpose.msra.mxu0 0
        %1024 = vmatprep.subr.bf16.mxu0 0
        %1025 = vmatpush1.bf16.xpose.msra.mxu0 0
        %1026 = vmatprep.subr.bf16.mxu0 0
        %1027 = vmatpush1.bf16.xpose.msra.mxu0 0
        %1028 = vmatprep.subr.bf16.mxu0 0
        %1029 = vmatpush1.bf16.xpose.msra.mxu0 0
        %1030 = vmatprep.subr.bf16.mxu0 0
        %1031 = vmatpush1.bf16.xpose.msra.mxu0 0
        %1032 = vmatprep.subr.bf16.mxu0 0
        %1033 = vmatpush1.bf16.xpose.msra.mxu0 0
        %1034 = vmatprep.subr.bf16.mxu0 0
        %1035 = vmatpush1.bf16.xpose.msra.mxu0 0
        %1036 = vmatprep.subr.bf16.mxu0 0
        %1037 = vmatpush1.bf16.xpose.msra.mxu0 0
        %1038 = vmatprep.subr.bf16.mxu0 0
        %1039 = vmatpush1.bf16.xpose.msra.mxu0 0
        %1040 = vmatprep.subr.bf16.mxu0 0
        %1041 = vmatpush1.bf16.xpose.msra.mxu0 0
        %1042 = vmatprep.subr.bf16.mxu0 0
        %1043 = vmatpush1.bf16.xpose.msra.mxu0 0
        %1044 = vmatprep.mubr.bf16.mxu0 0
        %1045 = vmatmul.mubr.bf16.gmra.mrb[0].mxu0 %v1007
        %v1046 = vpop.f32.mrb[0].mxu0
        %v1047 = vadd.f32 0.0, %v1046
        %v1048 = vpop.f32.mrb[0].mxu0
        %v1049 = vpop.f32.mrb[0].mxu0
        %v1050 = vpop.f32.mrb[0].mxu0
        %1051 = vdwg.mxu0
        %v1052 = vsel %vm563, %v1047, -inf
        %1053 = vmax.xlane.f32.xlu0 %v1052
        %v1054 = vpop.xlane.xlu0 %1053
        %v1055 = vsub.f32 %v1047, %v1054
        %v1056 = vmul.f32 %v1055, 1.442695
        %v1057 = vpow.pop %v1056
        %v1058 = vsel %vm563, %v1057, 0.0
        %1059 = vadd.xlane.f32.xlu0 %v1058
        %v1060 = vpop.xlane.xlu0 %1059
        %v1061 = vrcp.pop %v1060
        %v1062 = vmul.f32 %v1057, %v1061
        %v1063 = vpack.c.bf16 %v1062, %v1062
        %1064 = vrot.lane.b32.xlu0 %v622, 96
        %v1065 = vpop.permute.xlu0 %1064
        %v1067 = vsel %vm563, %v1063, 0
        %v1070 = vsel %vm626, %v1065, 0
        %1072 = vmatprep.subr.bf16.mxu0 0
        %1073 = vmatpush1.bf16.msra.mxu0 %v1070
        %1074 = vmatprep.subr.bf16.mxu0 0
        %1075 = vmatpush1.bf16.msra.mxu0 0
        %1076 = vmatprep.subr.bf16.mxu0 0
        %1077 = vmatpush1.bf16.msra.mxu0 0
        %1078 = vmatprep.subr.bf16.mxu0 0
        %1079 = vmatpush1.bf16.msra.mxu0 0
        %1080 = vmatprep.subr.bf16.mxu0 0
        %1081 = vmatpush1.bf16.msra.mxu0 0
        %1082 = vmatprep.subr.bf16.mxu0 0
        %1083 = vmatpush1.bf16.msra.mxu0 0
        %1084 = vmatprep.subr.bf16.mxu0 0
        %1085 = vmatpush1.bf16.msra.mxu0 0
        %1086 = vmatprep.subr.bf16.mxu0 0
        %1087 = vmatpush1.bf16.msra.mxu0 0
        %1088 = vmatprep.subr.bf16.mxu0 0
        %1089 = vmatpush1.bf16.msra.mxu0 0
        %1090 = vmatprep.subr.bf16.mxu0 0
        %1091 = vmatpush1.bf16.msra.mxu0 0
        %1092 = vmatprep.subr.bf16.mxu0 0
        %1093 = vmatpush1.bf16.msra.mxu0 0
        %1094 = vmatprep.subr.bf16.mxu0 0
        %1095 = vmatpush1.bf16.msra.mxu0 0
        %1096 = vmatprep.subr.bf16.mxu0 0
        %1097 = vmatpush1.bf16.msra.mxu0 0
        %1098 = vmatprep.subr.bf16.mxu0 0
        %1099 = vmatpush1.bf16.msra.mxu0 0
        %1100 = vmatprep.subr.bf16.mxu0 0
        %1101 = vmatpush1.bf16.msra.mxu0 0
        %1102 = vmatprep.subr.bf16.mxu0 0
        %1103 = vmatpush1.bf16.msra.mxu0 0
        %1104 = vmatprep.mubr.bf16.mxu0 0
        %1105 = vmatmul.mubr.bf16.gmra.mrb[0].mxu0 %v1067
        %v1106 = vpop.f32.mrb[0].mxu0
        %v1107 = vadd.f32 0.0, %v1106
        %v1108 = vpop.f32.mrb[0].mxu0
        %v1109 = vpop.f32.mrb[0].mxu0
        %v1110 = vpop.f32.mrb[0].mxu0
        %1111 = vdwg.mxu0
        %1112 = vrot.lane.b32.xlu0 %v558, 88
        %v1113 = vpop.permute.xlu0 %1112
        %1114 = vrot.lane.b32.xlu0 %v559, 24
        %v1115 = vpop.permute.xlu0 %1114
        %v1117 = vsel %vm563, %v1113, 0
        %v1120 = vsel %vm563, %v1115, 0
        %1122 = vmatprep.subr.bf16.mxu0 0
        %1123 = vmatpush1.bf16.xpose.msra.mxu0 %v1120
        %1124 = vmatprep.subr.bf16.mxu0 0
        %1125 = vmatpush1.bf16.xpose.msra.mxu0 0
        %1126 = vmatprep.subr.bf16.mxu0 0
        %1127 = vmatpush1.bf16.xpose.msra.mxu0 0
        %1128 = vmatprep.subr.bf16.mxu0 0
        %1129 = vmatpush1.bf16.xpose.msra.mxu0 0
        %1130 = vmatprep.subr.bf16.mxu0 0
        %1131 = vmatpush1.bf16.xpose.msra.mxu0 0
        %1132 = vmatprep.subr.bf16.mxu0 0
        %1133 = vmatpush1.bf16.xpose.msra.mxu0 0
        %1134 = vmatprep.subr.bf16.mxu0 0
        %1135 = vmatpush1.bf16.xpose.msra.mxu0 0
        %1136 = vmatprep.subr.bf16.mxu0 0
        %1137 = vmatpush1.bf16.xpose.msra.mxu0 0
        %1138 = vmatprep.subr.bf16.mxu0 0
        %1139 = vmatpush1.bf16.xpose.msra.mxu0 0
        %1140 = vmatprep.subr.bf16.mxu0 0
        %1141 = vmatpush1.bf16.xpose.msra.mxu0 0
        %1142 = vmatprep.subr.bf16.mxu0 0
        %1143 = vmatpush1.bf16.xpose.msra.mxu0 0
        %1144 = vmatprep.subr.bf16.mxu0 0
        %1145 = vmatpush1.bf16.xpose.msra.mxu0 0
        %1146 = vmatprep.subr.bf16.mxu0 0
        %1147 = vmatpush1.bf16.xpose.msra.mxu0 0
        %1148 = vmatprep.subr.bf16.mxu0 0
        %1149 = vmatpush1.bf16.xpose.msra.mxu0 0
        %1150 = vmatprep.subr.bf16.mxu0 0
        %1151 = vmatpush1.bf16.xpose.msra.mxu0 0
        %1152 = vmatprep.subr.bf16.mxu0 0
        %1153 = vmatpush1.bf16.xpose.msra.mxu0 0
        %1154 = vmatprep.mubr.bf16.mxu0 0
        %1155 = vmatmul.mubr.bf16.gmra.mrb[0].mxu0 %v1117
        %v1156 = vpop.f32.mrb[0].mxu0
        %v1157 = vadd.f32 0.0, %v1156
        %v1158 = vpop.f32.mrb[0].mxu0
        %v1159 = vpop.f32.mrb[0].mxu0
        %v1160 = vpop.f32.mrb[0].mxu0
        %1161 = vdwg.mxu0
        %v1162 = vsel %vm563, %v1157, -inf
        %1163 = vmax.xlane.f32.xlu0 %v1162
        %v1164 = vpop.xlane.xlu0 %1163
        %v1165 = vsub.f32 %v1157, %v1164
        %v1166 = vmul.f32 %v1165, 1.442695
        %v1167 = vpow.pop %v1166
        %v1168 = vsel %vm563, %v1167, 0.0
        %1169 = vadd.xlane.f32.xlu0 %v1168
        %v1170 = vpop.xlane.xlu0 %1169
        %v1171 = vrcp.pop %v1170
        %v1172 = vmul.f32 %v1167, %v1171
        %v1173 = vpack.c.bf16 %v1172, %v1172
        %1174 = vrot.lane.b32.xlu0 %v622, 88
        %v1175 = vpop.permute.xlu0 %1174
        %v1177 = vsel %vm563, %v1173, 0
        %v1180 = vsel %vm626, %v1175, 0
        %1182 = vmatprep.subr.bf16.mxu0 0
        %1183 = vmatpush1.bf16.msra.mxu0 %v1180
        %1184 = vmatprep.subr.bf16.mxu0 0
        %1185 = vmatpush1.bf16.msra.mxu0 0
        %1186 = vmatprep.subr.bf16.mxu0 0
        %1187 = vmatpush1.bf16.msra.mxu0 0
        %1188 = vmatprep.subr.bf16.mxu0 0
        %1189 = vmatpush1.bf16.msra.mxu0 0
        %1190 = vmatprep.subr.bf16.mxu0 0
        %1191 = vmatpush1.bf16.msra.mxu0 0
        %1192 = vmatprep.subr.bf16.mxu0 0
        %1193 = vmatpush1.bf16.msra.mxu0 0
        %1194 = vmatprep.subr.bf16.mxu0 0
        %1195 = vmatpush1.bf16.msra.mxu0 0
        %1196 = vmatprep.subr.bf16.mxu0 0
        %1197 = vmatpush1.bf16.msra.mxu0 0
        %1198 = vmatprep.subr.bf16.mxu0 0
        %1199 = vmatpush1.bf16.msra.mxu0 0
        %1200 = vmatprep.subr.bf16.mxu0 0
        %1201 = vmatpush1.bf16.msra.mxu0 0
        %1202 = vmatprep.subr.bf16.mxu0 0
        %1203 = vmatpush1.bf16.msra.mxu0 0
        %1204 = vmatprep.subr.bf16.mxu0 0
        %1205 = vmatpush1.bf16.msra.mxu0 0
        %1206 = vmatprep.subr.bf16.mxu0 0
        %1207 = vmatpush1.bf16.msra.mxu0 0
        %1208 = vmatprep.subr.bf16.mxu0 0
        %1209 = vmatpush1.bf16.msra.mxu0 0
        %1210 = vmatprep.subr.bf16.mxu0 0
        %1211 = vmatpush1.bf16.msra.mxu0 0
        %1212 = vmatprep.subr.bf16.mxu0 0
        %1213 = vmatpush1.bf16.msra.mxu0 0
        %1214 = vmatprep.mubr.bf16.mxu0 0
        %1215 = vmatmul.mubr.bf16.gmra.mrb[0].mxu0 %v1177
        %v1216 = vpop.f32.mrb[0].mxu0
        %v1217 = vadd.f32 0.0, %v1216
        %v1218 = vpop.f32.mrb[0].mxu0
        %v1219 = vpop.f32.mrb[0].mxu0
        %v1220 = vpop.f32.mrb[0].mxu0
        %1221 = vdwg.mxu0
        %1222 = vrot.lane.b32.xlu0 %v558, 80
        %v1223 = vpop.permute.xlu0 %1222
        %1224 = vrot.lane.b32.xlu0 %v559, 16
        %v1225 = vpop.permute.xlu0 %1224
        %v1227 = vsel %vm563, %v1223, 0
        %v1230 = vsel %vm563, %v1225, 0
        %1232 = vmatprep.subr.bf16.mxu0 0
        %1233 = vmatpush1.bf16.xpose.msra.mxu0 %v1230
        %1234 = vmatprep.subr.bf16.mxu0 0
        %1235 = vmatpush1.bf16.xpose.msra.mxu0 0
        %1236 = vmatprep.subr.bf16.mxu0 0
        %1237 = vmatpush1.bf16.xpose.msra.mxu0 0
        %1238 = vmatprep.subr.bf16.mxu0 0
        %1239 = vmatpush1.bf16.xpose.msra.mxu0 0
        %1240 = vmatprep.subr.bf16.mxu0 0
        %1241 = vmatpush1.bf16.xpose.msra.mxu0 0
        %1242 = vmatprep.subr.bf16.mxu0 0
        %1243 = vmatpush1.bf16.xpose.msra.mxu0 0
        %1244 = vmatprep.subr.bf16.mxu0 0
        %1245 = vmatpush1.bf16.xpose.msra.mxu0 0
        %1246 = vmatprep.subr.bf16.mxu0 0
        %1247 = vmatpush1.bf16.xpose.msra.mxu0 0
        %1248 = vmatprep.subr.bf16.mxu0 0
        %1249 = vmatpush1.bf16.xpose.msra.mxu0 0
        %1250 = vmatprep.subr.bf16.mxu0 0
        %1251 = vmatpush1.bf16.xpose.msra.mxu0 0
        %1252 = vmatprep.subr.bf16.mxu0 0
        %1253 = vmatpush1.bf16.xpose.msra.mxu0 0
        %1254 = vmatprep.subr.bf16.mxu0 0
        %1255 = vmatpush1.bf16.xpose.msra.mxu0 0
        %1256 = vmatprep.subr.bf16.mxu0 0
        %1257 = vmatpush1.bf16.xpose.msra.mxu0 0
        %1258 = vmatprep.subr.bf16.mxu0 0
        %1259 = vmatpush1.bf16.xpose.msra.mxu0 0
        %1260 = vmatprep.subr.bf16.mxu0 0
        %1261 = vmatpush1.bf16.xpose.msra.mxu0 0
        %1262 = vmatprep.subr.bf16.mxu0 0
        %1263 = vmatpush1.bf16.xpose.msra.mxu0 0
        %1264 = vmatprep.mubr.bf16.mxu0 0
        %1265 = vmatmul.mubr.bf16.gmra.mrb[0].mxu0 %v1227
        %v1266 = vpop.f32.mrb[0].mxu0
        %v1267 = vadd.f32 0.0, %v1266
        %v1268 = vpop.f32.mrb[0].mxu0
        %v1269 = vpop.f32.mrb[0].mxu0
        %v1270 = vpop.f32.mrb[0].mxu0
        %1271 = vdwg.mxu0
        %v1272 = vsel %vm563, %v1267, -inf
        %1273 = vmax.xlane.f32.xlu0 %v1272
        %v1274 = vpop.xlane.xlu0 %1273
        %v1275 = vsub.f32 %v1267, %v1274
        %v1276 = vmul.f32 %v1275, 1.442695
        %v1277 = vpow.pop %v1276
        %v1278 = vsel %vm563, %v1277, 0.0
        %1279 = vadd.xlane.f32.xlu0 %v1278
        %v1280 = vpop.xlane.xlu0 %1279
        %v1281 = vrcp.pop %v1280
        %v1282 = vmul.f32 %v1277, %v1281
        %v1283 = vpack.c.bf16 %v1282, %v1282
        %1284 = vrot.lane.b32.xlu0 %v622, 80
        %v1285 = vpop.permute.xlu0 %1284
        %v1287 = vsel %vm563, %v1283, 0
        %v1290 = vsel %vm626, %v1285, 0
        %1292 = vmatprep.subr.bf16.mxu0 0
        %1293 = vmatpush1.bf16.msra.mxu0 %v1290
        %1294 = vmatprep.subr.bf16.mxu0 0
        %1295 = vmatpush1.bf16.msra.mxu0 0
        %1296 = vmatprep.subr.bf16.mxu0 0
        %1297 = vmatpush1.bf16.msra.mxu0 0
        %1298 = vmatprep.subr.bf16.mxu0 0
        %1299 = vmatpush1.bf16.msra.mxu0 0
        %1300 = vmatprep.subr.bf16.mxu0 0
        %1301 = vmatpush1.bf16.msra.mxu0 0
        %1302 = vmatprep.subr.bf16.mxu0 0
        %1303 = vmatpush1.bf16.msra.mxu0 0
        %1304 = vmatprep.subr.bf16.mxu0 0
        %1305 = vmatpush1.bf16.msra.mxu0 0
        %1306 = vmatprep.subr.bf16.mxu0 0
        %1307 = vmatpush1.bf16.msra.mxu0 0
        %1308 = vmatprep.subr.bf16.mxu0 0
        %1309 = vmatpush1.bf16.msra.mxu0 0
        %1310 = vmatprep.subr.bf16.mxu0 0
        %1311 = vmatpush1.bf16.msra.mxu0 0
        %1312 = vmatprep.subr.bf16.mxu0 0
        %1313 = vmatpush1.bf16.msra.mxu0 0
        %1314 = vmatprep.subr.bf16.mxu0 0
        %1315 = vmatpush1.bf16.msra.mxu0 0
        %1316 = vmatprep.subr.bf16.mxu0 0
        %1317 = vmatpush1.bf16.msra.mxu0 0
        %1318 = vmatprep.subr.bf16.mxu0 0
        %1319 = vmatpush1.bf16.msra.mxu0 0
        %1320 = vmatprep.subr.bf16.mxu0 0
        %1321 = vmatpush1.bf16.msra.mxu0 0
        %1322 = vmatprep.subr.bf16.mxu0 0
        %1323 = vmatpush1.bf16.msra.mxu0 0
        %1324 = vmatprep.mubr.bf16.mxu0 0
        %1325 = vmatmul.mubr.bf16.gmra.mrb[0].mxu0 %v1287
        %v1326 = vpop.f32.mrb[0].mxu0
        %v1327 = vadd.f32 0.0, %v1326
        %v1328 = vpop.f32.mrb[0].mxu0
        %v1329 = vpop.f32.mrb[0].mxu0
        %v1330 = vpop.f32.mrb[0].mxu0
        %1331 = vdwg.mxu0
        %1332 = vrot.lane.b32.xlu0 %v558, 72
        %v1333 = vpop.permute.xlu0 %1332
        %1334 = vrot.lane.b32.xlu0 %v559, 8
        %v1335 = vpop.permute.xlu0 %1334
        %v1337 = vsel %vm563, %v1333, 0
        %v1340 = vsel %vm563, %v1335, 0
        %1342 = vmatprep.subr.bf16.mxu0 0
        %1343 = vmatpush1.bf16.xpose.msra.mxu0 %v1340
        %1344 = vmatprep.subr.bf16.mxu0 0
        %1345 = vmatpush1.bf16.xpose.msra.mxu0 0
        %1346 = vmatprep.subr.bf16.mxu0 0
        %1347 = vmatpush1.bf16.xpose.msra.mxu0 0
        %1348 = vmatprep.subr.bf16.mxu0 0
        %1349 = vmatpush1.bf16.xpose.msra.mxu0 0
        %1350 = vmatprep.subr.bf16.mxu0 0
        %1351 = vmatpush1.bf16.xpose.msra.mxu0 0
        %1352 = vmatprep.subr.bf16.mxu0 0
        %1353 = vmatpush1.bf16.xpose.msra.mxu0 0
        %1354 = vmatprep.subr.bf16.mxu0 0
        %1355 = vmatpush1.bf16.xpose.msra.mxu0 0
        %1356 = vmatprep.subr.bf16.mxu0 0
        %1357 = vmatpush1.bf16.xpose.msra.mxu0 0
        %1358 = vmatprep.subr.bf16.mxu0 0
        %1359 = vmatpush1.bf16.xpose.msra.mxu0 0
        %1360 = vmatprep.subr.bf16.mxu0 0
        %1361 = vmatpush1.bf16.xpose.msra.mxu0 0
        %1362 = vmatprep.subr.bf16.mxu0 0
        %1363 = vmatpush1.bf16.xpose.msra.mxu0 0
        %1364 = vmatprep.subr.bf16.mxu0 0
        %1365 = vmatpush1.bf16.xpose.msra.mxu0 0
        %1366 = vmatprep.subr.bf16.mxu0 0
        %1367 = vmatpush1.bf16.xpose.msra.mxu0 0
        %1368 = vmatprep.subr.bf16.mxu0 0
        %1369 = vmatpush1.bf16.xpose.msra.mxu0 0
        %1370 = vmatprep.subr.bf16.mxu0 0
        %1371 = vmatpush1.bf16.xpose.msra.mxu0 0
        %1372 = vmatprep.subr.bf16.mxu0 0
        %1373 = vmatpush1.bf16.xpose.msra.mxu0 0
        %1374 = vmatprep.mubr.bf16.mxu0 0
        %1375 = vmatmul.mubr.bf16.gmra.mrb[0].mxu0 %v1337
        %v1376 = vpop.f32.mrb[0].mxu0
        %v1377 = vadd.f32 0.0, %v1376
        %v1378 = vpop.f32.mrb[0].mxu0
        %v1379 = vpop.f32.mrb[0].mxu0
        %v1380 = vpop.f32.mrb[0].mxu0
        %1381 = vdwg.mxu0
        %v1382 = vsel %vm563, %v1377, -inf
        %1383 = vmax.xlane.f32.xlu0 %v1382
        %v1384 = vpop.xlane.xlu0 %1383
        %v1385 = vsub.f32 %v1377, %v1384
        %v1386 = vmul.f32 %v1385, 1.442695
        %v1387 = vpow.pop %v1386
        %v1388 = vsel %vm563, %v1387, 0.0
        %1389 = vadd.xlane.f32.xlu0 %v1388
        %v1390 = vpop.xlane.xlu0 %1389
        %v1391 = vrcp.pop %v1390
        %v1392 = vmul.f32 %v1387, %v1391
        %v1393 = vpack.c.bf16 %v1392, %v1392
        %1394 = vrot.lane.b32.xlu0 %v622, 72
        %v1395 = vpop.permute.xlu0 %1394
        %v1397 = vsel %vm563, %v1393, 0
        %v1400 = vsel %vm626, %v1395, 0
        %1402 = vmatprep.subr.bf16.mxu0 0
        %1403 = vmatpush1.bf16.msra.mxu0 %v1400
        %1404 = vmatprep.subr.bf16.mxu0 0
        %1405 = vmatpush1.bf16.msra.mxu0 0
        %1406 = vmatprep.subr.bf16.mxu0 0
        %1407 = vmatpush1.bf16.msra.mxu0 0
        %1408 = vmatprep.subr.bf16.mxu0 0
        %1409 = vmatpush1.bf16.msra.mxu0 0
        %1410 = vmatprep.subr.bf16.mxu0 0
        %1411 = vmatpush1.bf16.msra.mxu0 0
        %1412 = vmatprep.subr.bf16.mxu0 0
        %1413 = vmatpush1.bf16.msra.mxu0 0
        %1414 = vmatprep.subr.bf16.mxu0 0
        %1415 = vmatpush1.bf16.msra.mxu0 0
        %1416 = vmatprep.subr.bf16.mxu0 0
        %1417 = vmatpush1.bf16.msra.mxu0 0
        %1418 = vmatprep.subr.bf16.mxu0 0
        %1419 = vmatpush1.bf16.msra.mxu0 0
        %1420 = vmatprep.subr.bf16.mxu0 0
        %1421 = vmatpush1.bf16.msra.mxu0 0
        %1422 = vmatprep.subr.bf16.mxu0 0
        %1423 = vmatpush1.bf16.msra.mxu0 0
        %1424 = vmatprep.subr.bf16.mxu0 0
        %1425 = vmatpush1.bf16.msra.mxu0 0
        %1426 = vmatprep.subr.bf16.mxu0 0
        %1427 = vmatpush1.bf16.msra.mxu0 0
        %1428 = vmatprep.subr.bf16.mxu0 0
        %1429 = vmatpush1.bf16.msra.mxu0 0
        %1430 = vmatprep.subr.bf16.mxu0 0
        %1431 = vmatpush1.bf16.msra.mxu0 0
        %1432 = vmatprep.subr.bf16.mxu0 0
        %1433 = vmatpush1.bf16.msra.mxu0 0
        %1434 = vmatprep.mubr.bf16.mxu0 0
        %1435 = vmatmul.mubr.bf16.gmra.mrb[0].mxu0 %v1397
        %v1436 = vpop.f32.mrb[0].mxu0
        %v1437 = vadd.f32 0.0, %v1436
        %v1438 = vpop.f32.mrb[0].mxu0
        %v1439 = vpop.f32.mrb[0].mxu0
        %v1440 = vpop.f32.mrb[0].mxu0
        %1441 = vdwg.mxu0
        %1443 = vrot.lane.b32.xlu0 %v777, 8
        %v1444 = vpop.permute.xlu0 %1443
        %1447 = vrot.lane.b32.xlu0 %v887, 16
        %v1448 = vpop.permute.xlu0 %1447
        %1451 = vrot.lane.b32.xlu0 %v997, 24
        %v1452 = vpop.permute.xlu0 %1451
        %1455 = vrot.lane.b32.xlu0 %v1107, 32
        %v1456 = vpop.permute.xlu0 %1455
        %1459 = vrot.lane.b32.xlu0 %v1217, 40
        %v1460 = vpop.permute.xlu0 %1459
        %1463 = vrot.lane.b32.xlu0 %v1327, 48
        %v1464 = vpop.permute.xlu0 %1463
        %1467 = vrot.lane.b32.xlu0 %v1437, 56
        %v1468 = vpop.permute.xlu0 %1467
        %v1470 = vsel %vm563, %v665, %v1444
        %vm1471 = vcmask 130048
        %v1472 = vsel %vm1471, %v1470, %v1448
        %vm1473 = vcmask 195584
        %v1474 = vsel %vm1473, %v1472, %v1452
        %vm1475 = vcmask 261120
        %v1476 = vsel %vm1475, %v1474, %v1456
        %vm1477 = vcmask 326656
        %v1478 = vsel %vm1477, %v1476, %v1460
        %vm1479 = vcmask 392192
        %v1480 = vsel %vm1479, %v1478, %v1464
        %vm1481 = vcmask 457728
        %v1482 = vsel %vm1481, %v1480, %v1468
        %v1483 = vld [vmem:[#allocation7] sm:$0xf]
        %v1484 = vld [vmem:[#allocation7 + $0x4] sm:$0xf]
        %v1485 = vld [vmem:[#allocation7 + $0x8] sm:$0xf]
        %v1486 = vld [vmem:[#allocation7 + $0xc] sm:$0xf]
        %v1487 = vld [vmem:[#allocation7 + $0x10] sm:$0xf]
        %v1488 = vld [vmem:[#allocation7 + $0x14] sm:$0xf]
        %v1489 = vld [vmem:[#allocation7 + $0x18] sm:$0xf]
        %v1490 = vld [vmem:[#allocation7 + $0x1c] sm:$0xf]
        %v1491 = vpack.c.bf16 %v1482, %v1482
        %v1492 = vlaneseq
        %v1493 = vshrl.u32 %v1492, 7
        %v1494 = vsub.s32 0, %v1493
        %v1495 = vrot.slane %v449, %v1494
        %v1504 = vunpack.c.l.b16 %v1483
        %v1505 = vunpack.c.l.b16 %v1484
        %v1506 = vunpack.c.l.b16 %v1485
        %v1507 = vunpack.c.l.b16 %v1486
        %v1508 = vunpack.c.l.b16 %v1487
        %v1509 = vunpack.c.l.b16 %v1488
        %v1510 = vunpack.c.l.b16 %v1489
        %v1511 = vunpack.c.l.b16 %v1490
        %v1512 = vpack.c.b16 %v1505, %v1504
        %v1513 = vpack.c.b16 %v1507, %v1506
        %v1514 = vpack.c.b16 %v1509, %v1508
        %v1515 = vpack.c.b16 %v1511, %v1510
        %v1521 = vsel %vm512, %v1491, 0
        %1523 = vmatprep.subr.bf16.mxu0 0
        %1524 = vmatpush1.bf16.msra.mxu0 %v1512
        %1525 = vmatprep.subr.bf16.mxu0 0
        %1526 = vmatpush1.bf16.msra.mxu0 %v1513
        %1527 = vmatprep.subr.bf16.mxu0 0
        %1528 = vmatpush1.bf16.msra.mxu0 %v1514
        %1529 = vmatprep.subr.bf16.mxu0 0
        %1530 = vmatpush1.bf16.msra.mxu0 %v1515
        %1531 = vmatprep.subr.bf16.mxu0 0
        %1532 = vmatpush1.bf16.msra.mxu0 0
        %1533 = vmatprep.subr.bf16.mxu0 0
        %1534 = vmatpush1.bf16.msra.mxu0 0
        %1535 = vmatprep.subr.bf16.mxu0 0
        %1536 = vmatpush1.bf16.msra.mxu0 0
        %1537 = vmatprep.subr.bf16.mxu0 0
        %1538 = vmatpush1.bf16.msra.mxu0 0
        %1539 = vmatprep.subr.bf16.mxu0 0
        %1540 = vmatpush1.bf16.msra.mxu0 0
        %1541 = vmatprep.subr.bf16.mxu0 0
        %1542 = vmatpush1.bf16.msra.mxu0 0
        %1543 = vmatprep.subr.bf16.mxu0 0
        %1544 = vmatpush1.bf16.msra.mxu0 0
        %1545 = vmatprep.subr.bf16.mxu0 0
        %1546 = vmatpush1.bf16.msra.mxu0 0
        %1547 = vmatprep.subr.bf16.mxu0 0
        %1548 = vmatpush1.bf16.msra.mxu0 0
        %1549 = vmatprep.subr.bf16.mxu0 0
        %1550 = vmatpush1.bf16.msra.mxu0 0
        %1551 = vmatprep.subr.bf16.mxu0 0
        %1552 = vmatpush1.bf16.msra.mxu0 0
        %1553 = vmatprep.subr.bf16.mxu0 0
        %1554 = vmatpush1.bf16.msra.mxu0 0
        %1555 = vmatprep.mubr.bf16.mxu0 0
        %1556 = vmatmul.mubr.bf16.gmra.mrb[0].mxu0 %v1521
        %v1557 = vpop.f32.mrb[0].mxu0
        %v1558 = vadd.f32 %v1495, %v1557
        %v1559 = vpop.f32.mrb[0].mxu0
        %v1560 = vpop.f32.mrb[0].mxu0
        %v1561 = vpop.f32.mrb[0].mxu0
        %1562 = vdwg.mxu0
        %s1563 = scalar_lea.vmem [#allocation7], 32
        %v1564 = vld [vmem:[%s1563] sm:$0xf]
        %v1565 = vld [vmem:[%s1563 + $0x4] sm:$0xf]
        %v1566 = vld [vmem:[%s1563 + $0x8] sm:$0xf]
        %v1567 = vld [vmem:[%s1563 + $0xc] sm:$0xf]
        %v1568 = vld [vmem:[%s1563 + $0x10] sm:$0xf]
        %v1569 = vld [vmem:[%s1563 + $0x14] sm:$0xf]
        %v1570 = vld [vmem:[%s1563 + $0x18] sm:$0xf]
        %v1571 = vld [vmem:[%s1563 + $0x1c] sm:$0xf]
        %v1572 = vpack.c.bf16 %v1558, %v1558
        %v1573 = vlaneseq
        %v1574 = vshrl.u32 %v1573, 7
        %v1575 = vsub.s32 1, %v1574
        %v1576 = vrot.slane %v449, %v1575
        %v1585 = vunpack.c.l.b16 %v1564
        %v1586 = vunpack.c.l.b16 %v1565
        %v1587 = vunpack.c.l.b16 %v1566
        %v1588 = vunpack.c.l.b16 %v1567
        %v1589 = vunpack.c.l.b16 %v1568
        %v1590 = vunpack.c.l.b16 %v1569
        %v1591 = vunpack.c.l.b16 %v1570
        %v1592 = vunpack.c.l.b16 %v1571
        %v1593 = vpack.c.b16 %v1586, %v1585
        %v1594 = vpack.c.b16 %v1588, %v1587
        %v1595 = vpack.c.b16 %v1590, %v1589
        %v1596 = vpack.c.b16 %v1592, %v1591
        %v1602 = vsel %vm512, %v1572, 0
        %1604 = vmatprep.subr.bf16.mxu0 0
        %1605 = vmatpush1.bf16.msra.mxu0 %v1593
        %1606 = vmatprep.subr.bf16.mxu0 0
        %1607 = vmatpush1.bf16.msra.mxu0 %v1594
        %1608 = vmatprep.subr.bf16.mxu0 0
        %1609 = vmatpush1.bf16.msra.mxu0 %v1595
        %1610 = vmatprep.subr.bf16.mxu0 0
        %1611 = vmatpush1.bf16.msra.mxu0 %v1596
        %1612 = vmatprep.subr.bf16.mxu0 0
        %1613 = vmatpush1.bf16.msra.mxu0 0
        %1614 = vmatprep.subr.bf16.mxu0 0
        %1615 = vmatpush1.bf16.msra.mxu0 0
        %1616 = vmatprep.subr.bf16.mxu0 0
        %1617 = vmatpush1.bf16.msra.mxu0 0
        %1618 = vmatprep.subr.bf16.mxu0 0
        %1619 = vmatpush1.bf16.msra.mxu0 0
        %1620 = vmatprep.subr.bf16.mxu0 0
        %1621 = vmatpush1.bf16.msra.mxu0 0
        %1622 = vmatprep.subr.bf16.mxu0 0
        %1623 = vmatpush1.bf16.msra.mxu0 0
        %1624 = vmatprep.subr.bf16.mxu0 0
        %1625 = vmatpush1.bf16.msra.mxu0 0
        %1626 = vmatprep.subr.bf16.mxu0 0
        %1627 = vmatpush1.bf16.msra.mxu0 0
        %1628 = vmatprep.subr.bf16.mxu0 0
        %1629 = vmatpush1.bf16.msra.mxu0 0
        %1630 = vmatprep.subr.bf16.mxu0 0
        %1631 = vmatpush1.bf16.msra.mxu0 0
        %1632 = vmatprep.subr.bf16.mxu0 0
        %1633 = vmatpush1.bf16.msra.mxu0 0
        %1634 = vmatprep.subr.bf16.mxu0 0
        %1635 = vmatpush1.bf16.msra.mxu0 0
        %1636 = vmatprep.mubr.bf16.mxu0 0
        %1637 = vmatmul.mubr.bf16.gmra.mrb[0].mxu0 %v1602
        %v1638 = vpop.f32.mrb[0].mxu0
        %v1639 = vadd.f32 %v1576, %v1638
        %v1640 = vpop.f32.mrb[0].mxu0
        %v1641 = vpop.f32.mrb[0].mxu0
        %v1642 = vpop.f32.mrb[0].mxu0
        %1643 = vdwg.mxu0
        %v1644 = vmul.f32 %v1639, %v1639
        %v1645 = vmul.f32 %v1639, %v1644
        %v1646 = vmul.f32 %v1645, 0.044715
        %v1647 = vadd.f32 %v1639, %v1646
        %v1648 = vmul.f32 %v1647, 0.7978846
        %v1649 = vtanh.pop %v1648
        %v1650 = vadd.f32 %v1649, 1.0
        %v1651 = vmul.f32 %v1650, 0.5
        %v1652 = vmul.f32 %v1639, %v1651
        %s1653 = scalar_lea.vmem [#allocation7], 64
        %v1654 = vld [vmem:[%s1653] sm:$0xf]
        %v1655 = vld [vmem:[%s1653 + $0x4] sm:$0xf]
        %v1656 = vld [vmem:[%s1653 + $0x8] sm:$0xf]
        %v1657 = vld [vmem:[%s1653 + $0xc] sm:$0xf]
        %v1658 = vld [vmem:[%s1653 + $0x10] sm:$0xf]
        %v1659 = vld [vmem:[%s1653 + $0x14] sm:$0xf]
        %v1660 = vld [vmem:[%s1653 + $0x18] sm:$0xf]
        %v1661 = vld [vmem:[%s1653 + $0x1c] sm:$0xf]
        %v1662 = vpack.c.bf16 %v1652, %v1652
        %v1663 = vlaneseq
        %v1664 = vshrl.u32 %v1663, 7
        %v1665 = vsub.s32 2, %v1664
        %v1666 = vrot.slane %v449, %v1665
        %v1675 = vunpack.c.l.b16 %v1654
        %v1676 = vunpack.c.l.b16 %v1655
        %v1677 = vunpack.c.l.b16 %v1656
        %v1678 = vunpack.c.l.b16 %v1657
        %v1679 = vunpack.c.l.b16 %v1658
        %v1680 = vunpack.c.l.b16 %v1659
        %v1681 = vunpack.c.l.b16 %v1660
        %v1682 = vunpack.c.l.b16 %v1661
        %v1683 = vpack.c.b16 %v1676, %v1675
        %v1684 = vpack.c.b16 %v1678, %v1677
        %v1685 = vpack.c.b16 %v1680, %v1679
        %v1686 = vpack.c.b16 %v1682, %v1681
        %v1692 = vsel %vm512, %v1662, 0
        %1694 = vmatprep.subr.bf16.mxu0 0
        %1695 = vmatpush1.bf16.msra.mxu0 %v1683
        %1696 = vmatprep.subr.bf16.mxu0 0
        %1697 = vmatpush1.bf16.msra.mxu0 %v1684
        %1698 = vmatprep.subr.bf16.mxu0 0
        %1699 = vmatpush1.bf16.msra.mxu0 %v1685
        %1700 = vmatprep.subr.bf16.mxu0 0
        %1701 = vmatpush1.bf16.msra.mxu0 %v1686
        %1702 = vmatprep.subr.bf16.mxu0 0
        %1703 = vmatpush1.bf16.msra.mxu0 0
        %1704 = vmatprep.subr.bf16.mxu0 0
        %1705 = vmatpush1.bf16.msra.mxu0 0
        %1706 = vmatprep.subr.bf16.mxu0 0
        %1707 = vmatpush1.bf16.msra.mxu0 0
        %1708 = vmatprep.subr.bf16.mxu0 0
        %1709 = vmatpush1.bf16.msra.mxu0 0
        %1710 = vmatprep.subr.bf16.mxu0 0
        %1711 = vmatpush1.bf16.msra.mxu0 0
        %1712 = vmatprep.subr.bf16.mxu0 0
        %1713 = vmatpush1.bf16.msra.mxu0 0
        %1714 = vmatprep.subr.bf16.mxu0 0
        %1715 = vmatpush1.bf16.msra.mxu0 0
        %1716 = vmatprep.subr.bf16.mxu0 0
        %1717 = vmatpush1.bf16.msra.mxu0 0
        %1718 = vmatprep.subr.bf16.mxu0 0
        %1719 = vmatpush1.bf16.msra.mxu0 0
        %1720 = vmatprep.subr.bf16.mxu0 0
        %1721 = vmatpush1.bf16.msra.mxu0 0
        %1722 = vmatprep.subr.bf16.mxu0 0
        %1723 = vmatpush1.bf16.msra.mxu0 0
        %1724 = vmatprep.subr.bf16.mxu0 0
        %1725 = vmatpush1.bf16.msra.mxu0 0
        %1726 = vmatprep.mubr.bf16.mxu0 0
        %1727 = vmatmul.mubr.bf16.gmra.mrb[0].mxu0 %v1692
        %v1728 = vpop.f32.mrb[0].mxu0
        %v1729 = vadd.f32 %v1666, %v1728
        %v1730 = vpop.f32.mrb[0].mxu0
        %v1731 = vpop.f32.mrb[0].mxu0
        %v1732 = vpop.f32.mrb[0].mxu0
        %1733 = vdwg.mxu0
        %v1734 = vadd.f32 %v1558, %v1729
        %v1735 = vadd.f32 %v448, %v1734
        %v1736 = vsel %vm512, %v1735, 0.0
        %1737 = vadd.xlane.f32.xlu0 %v1736
        %v1738 = vpop.xlane.xlu0 %1737
        %v1739 = vrcp.pop 64.0
        %v1740 = vmul.f32 %v1738, %v1739
        %v1741 = vsub.f32 %v1735, %v1740
        %v1742 = vmul.f32 %v1741, %v1741
        %v1743 = vsel %vm512, %v1742, 0.0
        %1744 = vadd.xlane.f32.xlu0 %v1743
        %v1745 = vpop.xlane.xlu0 %1744
        %v1746 = vmul.f32 %v1745, %v1739
        %v1747 = vadd.f32 %v1746, 1e-05
        %v1748 = vrsqrt.pop %v1747
        %v1749 = vmul.f32 %v1741, %v1748
        %v1750 = vlaneseq
        %v1751 = vshrl.u32 %v1750, 7
        %v1752 = vsub.s32 3, %v1751
        %v1753 = vrot.slane %v449, %v1752
        %v1754 = vmul.f32 %v1749, %v1753
        %v1755 = vlaneseq
        %v1756 = vshrl.u32 %v1755, 7
        %v1757 = vsub.s32 4, %v1756
        %v1758 = vrot.slane %v449, %v1757
        %v1759 = vadd.f32 %v1754, %v1758
        %v1760 = vld [vmem:[#allocation8] sm:$0xf]
        %v1761 = vld [vmem:[#allocation8 + $0x4] sm:$0xf]
        %v1762 = vld [vmem:[#allocation8 + $0x8] sm:$0xf]
        %v1763 = vld [vmem:[#allocation8 + $0xc] sm:$0xf]
        %v1764 = vld [vmem:[#allocation8 + $0x10] sm:$0xf]
        %v1765 = vld [vmem:[#allocation8 + $0x14] sm:$0xf]
        %v1766 = vld [vmem:[#allocation8 + $0x18] sm:$0xf]
        %v1767 = vld [vmem:[#allocation8 + $0x1c] sm:$0xf]
        %v1768 = vld [vmem:[%s6] sm:$0x1]
        %v1769 = vpack.c.bf16 %v1759, %v1759
        %v1771 = vlaneseq
        %v1772 = vshrl.u32 %v1771, 7
        %v1773 = vsub.s32 0, %v1772
        %v1774 = vrot.slane %v1768, %v1773
        %v1784 = vunpack.c.l.b16 %v1760
        %v1785 = vunpack.c.l.b16 %v1761
        %v1786 = vunpack.c.l.b16 %v1762
        %v1787 = vunpack.c.l.b16 %v1763
        %v1788 = vunpack.c.l.b16 %v1764
        %v1789 = vunpack.c.l.b16 %v1765
        %v1790 = vunpack.c.l.b16 %v1766
        %v1791 = vunpack.c.l.b16 %v1767
        %v1792 = vpack.c.b16 %v1785, %v1784
        %v1793 = vpack.c.b16 %v1787, %v1786
        %v1794 = vpack.c.b16 %v1789, %v1788
        %v1795 = vpack.c.b16 %v1791, %v1790
        %v1801 = vsel %vm512, %v1769, 0
        %1803 = vmatprep.subr.bf16.mxu0 0
        %1804 = vmatpush1.bf16.msra.mxu0 %v1792
        %1805 = vmatprep.subr.bf16.mxu0 0
        %1806 = vmatpush1.bf16.msra.mxu0 %v1793
        %1807 = vmatprep.subr.bf16.mxu0 0
        %1808 = vmatpush1.bf16.msra.mxu0 %v1794
        %1809 = vmatprep.subr.bf16.mxu0 0
        %1810 = vmatpush1.bf16.msra.mxu0 %v1795
        %1811 = vmatprep.subr.bf16.mxu0 0
        %1812 = vmatpush1.bf16.msra.mxu0 0
        %1813 = vmatprep.subr.bf16.mxu0 0
        %1814 = vmatpush1.bf16.msra.mxu0 0
        %1815 = vmatprep.subr.bf16.mxu0 0
        %1816 = vmatpush1.bf16.msra.mxu0 0
        %1817 = vmatprep.subr.bf16.mxu0 0
        %1818 = vmatpush1.bf16.msra.mxu0 0
        %1819 = vmatprep.subr.bf16.mxu0 0
        %1820 = vmatpush1.bf16.msra.mxu0 0
        %1821 = vmatprep.subr.bf16.mxu0 0
        %1822 = vmatpush1.bf16.msra.mxu0 0
        %1823 = vmatprep.subr.bf16.mxu0 0
        %1824 = vmatpush1.bf16.msra.mxu0 0
        %1825 = vmatprep.subr.bf16.mxu0 0
        %1826 = vmatpush1.bf16.msra.mxu0 0
        %1827 = vmatprep.subr.bf16.mxu0 0
        %1828 = vmatpush1.bf16.msra.mxu0 0
        %1829 = vmatprep.subr.bf16.mxu0 0
        %1830 = vmatpush1.bf16.msra.mxu0 0
        %1831 = vmatprep.subr.bf16.mxu0 0
        %1832 = vmatpush1.bf16.msra.mxu0 0
        %1833 = vmatprep.subr.bf16.mxu0 0
        %1834 = vmatpush1.bf16.msra.mxu0 0
        %1835 = vmatprep.mubr.bf16.mxu0 0
        %1836 = vmatmul.mubr.bf16.gmra.mrb[0].mxu0 %v1801
        %v1837 = vpop.f32.mrb[0].mxu0
        %v1838 = vadd.f32 %v1774, %v1837
        %v1839 = vpop.f32.mrb[0].mxu0
        %v1840 = vpop.f32.mrb[0].mxu0
        %v1841 = vpop.f32.mrb[0].mxu0
        %1842 = vdwg.mxu0
        %v1843 = vmul.f32 %v1838, %v1838
        %v1844 = vmul.f32 %v1838, %v1843
        %v1845 = vmul.f32 %v1844, 0.044715
        %v1846 = vadd.f32 %v1838, %v1845
        %v1847 = vmul.f32 %v1846, 0.7978846
        %v1848 = vtanh.pop %v1847
        %v1849 = vadd.f32 %v1848, 1.0
        %v1850 = vmul.f32 %v1849, 0.5
        %v1851 = vmul.f32 %v1838, %v1850
        %v1852 = vld [vmem:[%s7] sm:$0xf]
        %v1853 = vld [vmem:[%s7 + $0x4] sm:$0xf]
        %v1854 = vld [vmem:[%s7 + $0x8] sm:$0xf]
        %v1855 = vld [vmem:[%s7 + $0xc] sm:$0xf]
        %v1856 = vld [vmem:[%s7 + $0x10] sm:$0xf]
        %v1857 = vld [vmem:[%s7 + $0x14] sm:$0xf]
        %v1858 = vld [vmem:[%s7 + $0x18] sm:$0xf]
        %v1859 = vld [vmem:[%s7 + $0x1c] sm:$0xf]
        %v1860 = vld [vmem:[%s7 + $0x20] sm:$0xf]
        %v1861 = vld [vmem:[%s7 + $0x24] sm:$0xf]
        %v1862 = vld [vmem:[%s7 + $0x28] sm:$0xf]
        %v1863 = vld [vmem:[%s7 + $0x2c] sm:$0xf]
        %v1864 = vld [vmem:[%s7 + $0x30] sm:$0xf]
        %v1865 = vld [vmem:[%s7 + $0x34] sm:$0xf]
        %v1866 = vld [vmem:[%s7 + $0x38] sm:$0xf]
        %v1867 = vld [vmem:[%s7 + $0x3c] sm:$0xf]
        %v1868 = vpack.c.bf16 %v1851, %v1851
        %v1869 = vlaneseq
        %v1870 = vshrl.u32 %v1869, 7
        %v1871 = vsub.s32 5, %v1870
        %v1872 = vrot.slane %v449, %v1871
        %v1889 = vunpack.c.l.b16 %v1852
        %v1890 = vunpack.c.l.b16 %v1853
        %v1891 = vunpack.c.l.b16 %v1854
        %v1892 = vunpack.c.l.b16 %v1855
        %v1893 = vunpack.c.l.b16 %v1856
        %v1894 = vunpack.c.l.b16 %v1857
        %v1895 = vunpack.c.l.b16 %v1858
        %v1896 = vunpack.c.l.b16 %v1859
        %v1897 = vunpack.c.l.b16 %v1860
        %v1898 = vunpack.c.l.b16 %v1861
        %v1899 = vunpack.c.l.b16 %v1862
        %v1900 = vunpack.c.l.b16 %v1863
        %v1901 = vunpack.c.l.b16 %v1864
        %v1902 = vunpack.c.l.b16 %v1865
        %v1903 = vunpack.c.l.b16 %v1866
        %v1904 = vunpack.c.l.b16 %v1867
        %v1905 = vpack.c.b16 %v1890, %v1889
        %v1906 = vpack.c.b16 %v1892, %v1891
        %v1907 = vpack.c.b16 %v1894, %v1893
        %v1908 = vpack.c.b16 %v1896, %v1895
        %v1909 = vpack.c.b16 %v1898, %v1897
        %v1910 = vpack.c.b16 %v1900, %v1899
        %v1911 = vpack.c.b16 %v1902, %v1901
        %v1912 = vpack.c.b16 %v1904, %v1903
        %1921 = vmatprep.subr.bf16.mxu0 0
        %1922 = vmatpush1.bf16.msra.mxu0 %v1905
        %1923 = vmatprep.subr.bf16.mxu0 0
        %1924 = vmatpush1.bf16.msra.mxu0 %v1906
        %1925 = vmatprep.subr.bf16.mxu0 0
        %1926 = vmatpush1.bf16.msra.mxu0 %v1907
        %1927 = vmatprep.subr.bf16.mxu0 0
        %1928 = vmatpush1.bf16.msra.mxu0 %v1908
        %1929 = vmatprep.subr.bf16.mxu0 0
        %1930 = vmatpush1.bf16.msra.mxu0 %v1909
        %1931 = vmatprep.subr.bf16.mxu0 0
        %1932 = vmatpush1.bf16.msra.mxu0 %v1910
        %1933 = vmatprep.subr.bf16.mxu0 0
        %1934 = vmatpush1.bf16.msra.mxu0 %v1911
        %1935 = vmatprep.subr.bf16.mxu0 0
        %1936 = vmatpush1.bf16.msra.mxu0 %v1912
        %1937 = vmatprep.subr.bf16.mxu0 0
        %1938 = vmatpush1.bf16.msra.mxu0 0
        %1939 = vmatprep.subr.bf16.mxu0 0
        %1940 = vmatpush1.bf16.msra.mxu0 0
        %1941 = vmatprep.subr.bf16.mxu0 0
        %1942 = vmatpush1.bf16.msra.mxu0 0
        %1943 = vmatprep.subr.bf16.mxu0 0
        %1944 = vmatpush1.bf16.msra.mxu0 0
        %1945 = vmatprep.subr.bf16.mxu0 0
        %1946 = vmatpush1.bf16.msra.mxu0 0
        %1947 = vmatprep.subr.bf16.mxu0 0
        %1948 = vmatpush1.bf16.msra.mxu0 0
        %1949 = vmatprep.subr.bf16.mxu0 0
        %1950 = vmatpush1.bf16.msra.mxu0 0
        %1951 = vmatprep.subr.bf16.mxu0 0
        %1952 = vmatpush1.bf16.msra.mxu0 0
        %1953 = vmatprep.mubr.bf16.mxu0 0
        %1954 = vmatmul.mubr.bf16.gmra.mrb[0].mxu0 %v1868
        %v1955 = vpop.f32.mrb[0].mxu0
        %v1956 = vadd.f32 %v1872, %v1955
        %v1957 = vpop.f32.mrb[0].mxu0
        %v1958 = vpop.f32.mrb[0].mxu0
        %v1959 = vpop.f32.mrb[0].mxu0
        %1960 = vdwg.mxu0
        %s1961 = scalar_lea.vmem [#allocation7], 96
        %v1962 = vld [vmem:[%s1961] sm:$0xf]
        %v1963 = vld [vmem:[%s1961 + $0x4] sm:$0xf]
        %v1964 = vld [vmem:[%s1961 + $0x8] sm:$0xf]
        %v1965 = vld [vmem:[%s1961 + $0xc] sm:$0xf]
        %v1966 = vld [vmem:[%s1961 + $0x10] sm:$0xf]
        %v1967 = vld [vmem:[%s1961 + $0x14] sm:$0xf]
        %v1968 = vld [vmem:[%s1961 + $0x18] sm:$0xf]
        %v1969 = vld [vmem:[%s1961 + $0x1c] sm:$0xf]
        %v1970 = vpack.c.bf16 %v1956, %v1956
        %v1971 = vlaneseq
        %v1972 = vshrl.u32 %v1971, 7
        %v1973 = vsub.s32 6, %v1972
        %v1974 = vrot.slane %v449, %v1973
        %v1983 = vunpack.c.l.b16 %v1962
        %v1984 = vunpack.c.l.b16 %v1963
        %v1985 = vunpack.c.l.b16 %v1964
        %v1986 = vunpack.c.l.b16 %v1965
        %v1987 = vunpack.c.l.b16 %v1966
        %v1988 = vunpack.c.l.b16 %v1967
        %v1989 = vunpack.c.l.b16 %v1968
        %v1990 = vunpack.c.l.b16 %v1969
        %v1991 = vpack.c.b16 %v1984, %v1983
        %v1992 = vpack.c.b16 %v1986, %v1985
        %v1993 = vpack.c.b16 %v1988, %v1987
        %v1994 = vpack.c.b16 %v1990, %v1989
        %v2000 = vsel %vm512, %v1970, 0
        %2002 = vmatprep.subr.bf16.mxu0 0
        %2003 = vmatpush1.bf16.msra.mxu0 %v1991
        %2004 = vmatprep.subr.bf16.mxu0 0
        %2005 = vmatpush1.bf16.msra.mxu0 %v1992
        %2006 = vmatprep.subr.bf16.mxu0 0
        %2007 = vmatpush1.bf16.msra.mxu0 %v1993
        %2008 = vmatprep.subr.bf16.mxu0 0
        %2009 = vmatpush1.bf16.msra.mxu0 %v1994
        %2010 = vmatprep.subr.bf16.mxu0 0
        %2011 = vmatpush1.bf16.msra.mxu0 0
        %2012 = vmatprep.subr.bf16.mxu0 0
        %2013 = vmatpush1.bf16.msra.mxu0 0
        %2014 = vmatprep.subr.bf16.mxu0 0
        %2015 = vmatpush1.bf16.msra.mxu0 0
        %2016 = vmatprep.subr.bf16.mxu0 0
        %2017 = vmatpush1.bf16.msra.mxu0 0
        %2018 = vmatprep.subr.bf16.mxu0 0
        %2019 = vmatpush1.bf16.msra.mxu0 0
        %2020 = vmatprep.subr.bf16.mxu0 0
        %2021 = vmatpush1.bf16.msra.mxu0 0
        %2022 = vmatprep.subr.bf16.mxu0 0
        %2023 = vmatpush1.bf16.msra.mxu0 0
        %2024 = vmatprep.subr.bf16.mxu0 0
        %2025 = vmatpush1.bf16.msra.mxu0 0
        %2026 = vmatprep.subr.bf16.mxu0 0
        %2027 = vmatpush1.bf16.msra.mxu0 0
        %2028 = vmatprep.subr.bf16.mxu0 0
        %2029 = vmatpush1.bf16.msra.mxu0 0
        %2030 = vmatprep.subr.bf16.mxu0 0
        %2031 = vmatpush1.bf16.msra.mxu0 0
        %2032 = vmatprep.subr.bf16.mxu0 0
        %2033 = vmatpush1.bf16.msra.mxu0 0
        %2034 = vmatprep.mubr.bf16.mxu0 0
        %2035 = vmatmul.mubr.bf16.gmra.mrb[0].mxu0 %v2000
        %v2036 = vpop.f32.mrb[0].mxu0
        %v2037 = vadd.f32 %v1974, %v2036
        %v2038 = vpop.f32.mrb[0].mxu0
        %v2039 = vpop.f32.mrb[0].mxu0
        %v2040 = vpop.f32.mrb[0].mxu0
        %2041 = vdwg.mxu0
        %v2042 = vmul.f32 %v2037, %v2037
        %v2043 = vmul.f32 %v2037, %v2042
        %v2044 = vmul.f32 %v2043, 0.044715
        %v2045 = vadd.f32 %v2037, %v2044
        %v2046 = vmul.f32 %v2045, 0.7978846
        %v2047 = vtanh.pop %v2046
        %v2048 = vadd.f32 %v2047, 1.0
        %v2049 = vmul.f32 %v2048, 0.5
        %v2050 = vmul.f32 %v2037, %v2049
        %s2051 = scalar_lea.vmem [#allocation7], 128
        %v2052 = vld [vmem:[%s2051] sm:$0xf]
        %v2053 = vld [vmem:[%s2051 + $0x4] sm:$0xf]
        %v2054 = vld [vmem:[%s2051 + $0x8] sm:$0xf]
        %v2055 = vld [vmem:[%s2051 + $0xc] sm:$0xf]
        %v2056 = vld [vmem:[%s2051 + $0x10] sm:$0xf]
        %v2057 = vld [vmem:[%s2051 + $0x14] sm:$0xf]
        %v2058 = vld [vmem:[%s2051 + $0x18] sm:$0xf]
        %v2059 = vld [vmem:[%s2051 + $0x1c] sm:$0xf]
        %v2060 = vpack.c.bf16 %v2050, %v2050
        %v2061 = vlaneseq
        %v2062 = vshrl.u32 %v2061, 7
        %v2063 = vsub.s32 7, %v2062
        %v2064 = vrot.slane %v449, %v2063
        %v2073 = vunpack.c.l.b16 %v2052
        %v2074 = vunpack.c.l.b16 %v2053
        %v2075 = vunpack.c.l.b16 %v2054
        %v2076 = vunpack.c.l.b16 %v2055
        %v2077 = vunpack.c.l.b16 %v2056
        %v2078 = vunpack.c.l.b16 %v2057
        %v2079 = vunpack.c.l.b16 %v2058
        %v2080 = vunpack.c.l.b16 %v2059
        %v2081 = vpack.c.b16 %v2074, %v2073
        %v2082 = vpack.c.b16 %v2076, %v2075
        %v2083 = vpack.c.b16 %v2078, %v2077
        %v2084 = vpack.c.b16 %v2080, %v2079
        %v2090 = vsel %vm512, %v2060, 0
        %2092 = vmatprep.subr.bf16.mxu0 0
        %2093 = vmatpush1.bf16.msra.mxu0 %v2081
        %2094 = vmatprep.subr.bf16.mxu0 0
        %2095 = vmatpush1.bf16.msra.mxu0 %v2082
        %2096 = vmatprep.subr.bf16.mxu0 0
        %2097 = vmatpush1.bf16.msra.mxu0 %v2083
        %2098 = vmatprep.subr.bf16.mxu0 0
        %2099 = vmatpush1.bf16.msra.mxu0 %v2084
        %2100 = vmatprep.subr.bf16.mxu0 0
        %2101 = vmatpush1.bf16.msra.mxu0 0
        %2102 = vmatprep.subr.bf16.mxu0 0
        %2103 = vmatpush1.bf16.msra.mxu0 0
        %2104 = vmatprep.subr.bf16.mxu0 0
        %2105 = vmatpush1.bf16.msra.mxu0 0
        %2106 = vmatprep.subr.bf16.mxu0 0
        %2107 = vmatpush1.bf16.msra.mxu0 0
        %2108 = vmatprep.subr.bf16.mxu0 0
        %2109 = vmatpush1.bf16.msra.mxu0 0
        %2110 = vmatprep.subr.bf16.mxu0 0
        %2111 = vmatpush1.bf16.msra.mxu0 0
        %2112 = vmatprep.subr.bf16.mxu0 0
        %2113 = vmatpush1.bf16.msra.mxu0 0
        %2114 = vmatprep.subr.bf16.mxu0 0
        %2115 = vmatpush1.bf16.msra.mxu0 0
        %2116 = vmatprep.subr.bf16.mxu0 0
        %2117 = vmatpush1.bf16.msra.mxu0 0
        %2118 = vmatprep.subr.bf16.mxu0 0
        %2119 = vmatpush1.bf16.msra.mxu0 0
        %2120 = vmatprep.subr.bf16.mxu0 0
        %2121 = vmatpush1.bf16.msra.mxu0 0
        %2122 = vmatprep.subr.bf16.mxu0 0
        %2123 = vmatpush1.bf16.msra.mxu0 0
        %2124 = vmatprep.mubr.bf16.mxu0 0
        %2125 = vmatmul.mubr.bf16.gmra.mrb[0].mxu0 %v2090
        %v2126 = vpop.f32.mrb[0].mxu0
        %v2127 = vadd.f32 %v2064, %v2126
        %v2128 = vpop.f32.mrb[0].mxu0
        %v2129 = vpop.f32.mrb[0].mxu0
        %v2130 = vpop.f32.mrb[0].mxu0
        %2131 = vdwg.mxu0
        %v2132 = vadd.f32 %v1956, %v2127
        %v2133 = vadd.f32 %v1759, %v2132
        %v2134 = vsel %vm512, %v2133, 0.0
        %2135 = vadd.xlane.f32.xlu0 %v2134
        %v2136 = vpop.xlane.xlu0 %2135
        %v2137 = vmul.f32 %v2136, %v1739
        %v2138 = vsub.f32 %v2133, %v2137
        %v2139 = vmul.f32 %v2138, %v2138
        %v2140 = vsel %vm512, %v2139, 0.0
        %2141 = vadd.xlane.f32.xlu0 %v2140
        %v2142 = vpop.xlane.xlu0 %2141
        %v2143 = vmul.f32 %v2142, %v1739
        %v2144 = vadd.f32 %v2143, 1e-05
        %v2145 = vrsqrt.pop %v2144
        %v2146 = vmul.f32 %v2138, %v2145
        %v2147 = vlaneseq
        %v2148 = vshrl.u32 %v2147, 7
        %v2149 = vsub.s32 0, %v2148
        %v2150 = vrot.slane %v450, %v2149
        %v2151 = vmul.f32 %v2146, %v2150
        %v2152 = vlaneseq
        %v2153 = vshrl.u32 %v2152, 7
        %v2154 = vsub.s32 1, %v2153
        %v2155 = vrot.slane %v450, %v2154
        %v2156 = vadd.f32 %v2151, %v2155
        %s2157 = scalar_lea.vmem %s8, 16
        %v2158 = vld [vmem:[%s2157] sm:$0xff]
        %v2159 = vld [vmem:[%s2157 + $0x8] sm:$0x3]
        %s2160 = scalar_lea.vmem %s2, 64
        %v2161 = vld [vmem:[%s2160] sm:$0xff]
        %v2162 = vld [vmem:[%s2160 + $0x8] sm:$0xff]
        %v2163 = vld [vmem:[%s2160 + $0x10] sm:$0xff]
        %v2164 = vld [vmem:[%s2160 + $0x18] sm:$0xff]
        %v2165 = vld [vmem:[%s2160 + $0x20] sm:$0xff]
        %v2166 = vld [vmem:[%s2160 + $0x28] sm:$0xff]
        %v2167 = vld [vmem:[%s2160 + $0x30] sm:$0xff]
        %v2168 = vld [vmem:[%s2160 + $0x38] sm:$0xff]
        %s2169 = scalar_lea.vmem [#allocation5], 2
        %v2170 = vld [vmem:[%s2169] sm:$0x3]
        %v2171 = vpack.c.bf16 %v2156, %v2156
        %v2173 = vlaneseq
        %v2174 = vshrl.u32 %v2173, 7
        %v2175 = vsub.s32 0, %v2174
        %v2176 = vrot.slane %v2170, %v2175
        %v2177 = vlaneseq
        %v2178 = vshrl.u32 %v2177, 7
        %v2179 = vsub.s32 1, %v2178
        %v2180 = vrot.slane %v2170, %v2179
        %v2191 = vunpack.c.l.b16 %v2161
        %v2192 = vunpack.c.h.b16 %v2161
        %v2193 = vunpack.c.l.b16 %v2162
        %v2194 = vunpack.c.h.b16 %v2162
        %v2195 = vunpack.c.l.b16 %v2163
        %v2196 = vunpack.c.h.b16 %v2163
        %v2197 = vunpack.c.l.b16 %v2164
        %v2198 = vunpack.c.h.b16 %v2164
        %v2199 = vunpack.c.l.b16 %v2165
        %v2200 = vunpack.c.h.b16 %v2165
        %v2201 = vunpack.c.l.b16 %v2166
        %v2202 = vunpack.c.h.b16 %v2166
        %v2203 = vunpack.c.l.b16 %v2167
        %v2204 = vunpack.c.h.b16 %v2167
        %v2205 = vunpack.c.l.b16 %v2168
        %v2206 = vunpack.c.h.b16 %v2168
        %v2207 = vpack.c.b16 %v2193, %v2191
        %v2208 = vpack.c.b16 %v2194, %v2192
        %v2209 = vpack.c.b16 %v2197, %v2195
        %v2210 = vpack.c.b16 %v2198, %v2196
        %v2211 = vpack.c.b16 %v2201, %v2199
        %v2212 = vpack.c.b16 %v2202, %v2200
        %v2213 = vpack.c.b16 %v2205, %v2203
        %v2214 = vpack.c.b16 %v2206, %v2204
        %v2224 = vsel %vm512, %v2171, 0
        %2226 = vmatprep.subr.bf16.mxu0 %v2208
        %2227 = vmatpush1.bf16.msra.mxu0 %v2207
        %2228 = vmatprep.subr.bf16.mxu0 %v2210
        %2229 = vmatpush1.bf16.msra.mxu0 %v2209
        %2230 = vmatprep.subr.bf16.mxu0 %v2212
        %2231 = vmatpush1.bf16.msra.mxu0 %v2211
        %2232 = vmatprep.subr.bf16.mxu0 %v2214
        %2233 = vmatpush1.bf16.msra.mxu0 %v2213
        %2234 = vmatprep.subr.bf16.mxu0 0
        %2235 = vmatpush1.bf16.msra.mxu0 0
        %2236 = vmatprep.subr.bf16.mxu0 0
        %2237 = vmatpush1.bf16.msra.mxu0 0
        %2238 = vmatprep.subr.bf16.mxu0 0
        %2239 = vmatpush1.bf16.msra.mxu0 0
        %2240 = vmatprep.subr.bf16.mxu0 0
        %2241 = vmatpush1.bf16.msra.mxu0 0
        %2242 = vmatprep.subr.bf16.mxu0 0
        %2243 = vmatpush1.bf16.msra.mxu0 0
        %2244 = vmatprep.subr.bf16.mxu0 0
        %2245 = vmatpush1.bf16.msra.mxu0 0
        %2246 = vmatprep.subr.bf16.mxu0 0
        %2247 = vmatpush1.bf16.msra.mxu0 0
        %2248 = vmatprep.subr.bf16.mxu0 0
        %2249 = vmatpush1.bf16.msra.mxu0 0
        %2250 = vmatprep.subr.bf16.mxu0 0
        %2251 = vmatpush1.bf16.msra.mxu0 0
        %2252 = vmatprep.subr.bf16.mxu0 0
        %2253 = vmatpush1.bf16.msra.mxu0 0
        %2254 = vmatprep.subr.bf16.mxu0 0
        %2255 = vmatpush1.bf16.msra.mxu0 0
        %2256 = vmatprep.subr.bf16.mxu0 0
        %2257 = vmatpush1.bf16.msra.mxu0 0
        %2258 = vmatprep.mubr.bf16.mxu0 0
        %2259 = vmatmul.mubr.bf16.gmra.mrb[0].mxu0 %v2224
        %v2260 = vpop.f32.mrb[0].mxu0
        %v2261 = vadd.f32 %v2176, %v2260
        %v2262 = vpop.f32.mrb[0].mxu0
        %v2263 = vadd.f32 %v2180, %v2262
        %v2264 = vpop.f32.mrb[0].mxu0
        %v2265 = vpop.f32.mrb[0].mxu0
        %2266 = vdwg.mxu0
        %v2267 = vmul.f32 %v2261, 0.35355338
        %v2268 = vpack.c.bf16 %v2267, %v2267
        %v2269 = vpack.c.bf16 %v2261, %v2261
        %2271 = vrot.lane.b32.xlu0 %v2269, 64
        %v2272 = vpop.permute.xlu0 %2271
        %v2274 = vsel %vm563, %v2268, 0
        %v2277 = vsel %vm563, %v2272, 0
        %2279 = vmatprep.subr.bf16.mxu0 0
        %2280 = vmatpush1.bf16.xpose.msra.mxu0 %v2277
        %2281 = vmatprep.subr.bf16.mxu0 0
        %2282 = vmatpush1.bf16.xpose.msra.mxu0 0
        %2283 = vmatprep.subr.bf16.mxu0 0
        %2284 = vmatpush1.bf16.xpose.msra.mxu0 0
        %2285 = vmatprep.subr.bf16.mxu0 0
        %2286 = vmatpush1.bf16.xpose.msra.mxu0 0
        %2287 = vmatprep.subr.bf16.mxu0 0
        %2288 = vmatpush1.bf16.xpose.msra.mxu0 0
        %2289 = vmatprep.subr.bf16.mxu0 0
        %2290 = vmatpush1.bf16.xpose.msra.mxu0 0
        %2291 = vmatprep.subr.bf16.mxu0 0
        %2292 = vmatpush1.bf16.xpose.msra.mxu0 0
        %2293 = vmatprep.subr.bf16.mxu0 0
        %2294 = vmatpush1.bf16.xpose.msra.mxu0 0
        %2295 = vmatprep.subr.bf16.mxu0 0
        %2296 = vmatpush1.bf16.xpose.msra.mxu0 0
        %2297 = vmatprep.subr.bf16.mxu0 0
        %2298 = vmatpush1.bf16.xpose.msra.mxu0 0
        %2299 = vmatprep.subr.bf16.mxu0 0
        %2300 = vmatpush1.bf16.xpose.msra.mxu0 0
        %2301 = vmatprep.subr.bf16.mxu0 0
        %2302 = vmatpush1.bf16.xpose.msra.mxu0 0
        %2303 = vmatprep.subr.bf16.mxu0 0
        %2304 = vmatpush1.bf16.xpose.msra.mxu0 0
        %2305 = vmatprep.subr.bf16.mxu0 0
        %2306 = vmatpush1.bf16.xpose.msra.mxu0 0
        %2307 = vmatprep.subr.bf16.mxu0 0
        %2308 = vmatpush1.bf16.xpose.msra.mxu0 0
        %2309 = vmatprep.subr.bf16.mxu0 0
        %2310 = vmatpush1.bf16.xpose.msra.mxu0 0
        %2311 = vmatprep.mubr.bf16.mxu0 0
        %2312 = vmatmul.mubr.bf16.gmra.mrb[0].mxu0 %v2274
        %v2313 = vpop.f32.mrb[0].mxu0
        %v2314 = vadd.f32 0.0, %v2313
        %v2315 = vpop.f32.mrb[0].mxu0
        %v2316 = vpop.f32.mrb[0].mxu0
        %v2317 = vpop.f32.mrb[0].mxu0
        %2318 = vdwg.mxu0
        %v2319 = vsel %vm563, %v2314, -inf
        %2320 = vmax.xlane.f32.xlu0 %v2319
        %v2321 = vpop.xlane.xlu0 %2320
        %v2322 = vsub.f32 %v2314, %v2321
        %v2323 = vmul.f32 %v2322, 1.442695
        %v2324 = vpow.pop %v2323
        %v2325 = vsel %vm563, %v2324, 0.0
        %2326 = vadd.xlane.f32.xlu0 %v2325
        %v2327 = vpop.xlane.xlu0 %2326
        %v2328 = vrcp.pop %v2327
        %v2329 = vmul.f32 %v2324, %v2328
        %v2330 = vpack.c.bf16 %v2329, %v2329
        %v2331 = vpack.c.bf16 %v2263, %v2263
        %v2333 = vsel %vm563, %v2330, 0
        %v2336 = vsel %vm626, %v2331, 0
        %2338 = vmatprep.subr.bf16.mxu0 0
        %2339 = vmatpush1.bf16.msra.mxu0 %v2336
        %2340 = vmatprep.subr.bf16.mxu0 0
        %2341 = vmatpush1.bf16.msra.mxu0 0
        %2342 = vmatprep.subr.bf16.mxu0 0
        %2343 = vmatpush1.bf16.msra.mxu0 0
        %2344 = vmatprep.subr.bf16.mxu0 0
        %2345 = vmatpush1.bf16.msra.mxu0 0
        %2346 = vmatprep.subr.bf16.mxu0 0
        %2347 = vmatpush1.bf16.msra.mxu0 0
        %2348 = vmatprep.subr.bf16.mxu0 0
        %2349 = vmatpush1.bf16.msra.mxu0 0
        %2350 = vmatprep.subr.bf16.mxu0 0
        %2351 = vmatpush1.bf16.msra.mxu0 0
        %2352 = vmatprep.subr.bf16.mxu0 0
        %2353 = vmatpush1.bf16.msra.mxu0 0
        %2354 = vmatprep.subr.bf16.mxu0 0
        %2355 = vmatpush1.bf16.msra.mxu0 0
        %2356 = vmatprep.subr.bf16.mxu0 0
        %2357 = vmatpush1.bf16.msra.mxu0 0
        %2358 = vmatprep.subr.bf16.mxu0 0
        %2359 = vmatpush1.bf16.msra.mxu0 0
        %2360 = vmatprep.subr.bf16.mxu0 0
        %2361 = vmatpush1.bf16.msra.mxu0 0
        %2362 = vmatprep.subr.bf16.mxu0 0
        %2363 = vmatpush1.bf16.msra.mxu0 0
        %2364 = vmatprep.subr.bf16.mxu0 0
        %2365 = vmatpush1.bf16.msra.mxu0 0
        %2366 = vmatprep.subr.bf16.mxu0 0
        %2367 = vmatpush1.bf16.msra.mxu0 0
        %2368 = vmatprep.subr.bf16.mxu0 0
        %2369 = vmatpush1.bf16.msra.mxu0 0
        %2370 = vmatprep.mubr.bf16.mxu0 0
        %2371 = vmatmul.mubr.bf16.gmra.mrb[0].mxu0 %v2333
        %v2372 = vpop.f32.mrb[0].mxu0
        %v2373 = vadd.f32 0.0, %v2372
        %v2374 = vpop.f32.mrb[0].mxu0
        %v2375 = vpop.f32.mrb[0].mxu0
        %v2376 = vpop.f32.mrb[0].mxu0
        %2377 = vdwg.mxu0
        %2379 = vrot.lane.b32.xlu0 %v2268, 120
        %v2380 = vpop.permute.xlu0 %2379
        %2381 = vrot.lane.b32.xlu0 %v2269, 56
        %v2382 = vpop.permute.xlu0 %2381
        %v2384 = vsel %vm563, %v2380, 0
        %v2387 = vsel %vm563, %v2382, 0
        %2389 = vmatprep.subr.bf16.mxu0 0
        %2390 = vmatpush1.bf16.xpose.msra.mxu0 %v2387
        %2391 = vmatprep.subr.bf16.mxu0 0
        %2392 = vmatpush1.bf16.xpose.msra.mxu0 0
        %2393 = vmatprep.subr.bf16.mxu0 0
        %2394 = vmatpush1.bf16.xpose.msra.mxu0 0
        %2395 = vmatprep.subr.bf16.mxu0 0
        %2396 = vmatpush1.bf16.xpose.msra.mxu0 0
        %2397 = vmatprep.subr.bf16.mxu0 0
        %2398 = vmatpush1.bf16.xpose.msra.mxu0 0
        %2399 = vmatprep.subr.bf16.mxu0 0
        %2400 = vmatpush1.bf16.xpose.msra.mxu0 0
        %2401 = vmatprep.subr.bf16.mxu0 0
        %2402 = vmatpush1.bf16.xpose.msra.mxu0 0
        %2403 = vmatprep.subr.bf16.mxu0 0
        %2404 = vmatpush1.bf16.xpose.msra.mxu0 0
        %2405 = vmatprep.subr.bf16.mxu0 0
        %2406 = vmatpush1.bf16.xpose.msra.mxu0 0
        %2407 = vmatprep.subr.bf16.mxu0 0
        %2408 = vmatpush1.bf16.xpose.msra.mxu0 0
        %2409 = vmatprep.subr.bf16.mxu0 0
        %2410 = vmatpush1.bf16.xpose.msra.mxu0 0
        %2411 = vmatprep.subr.bf16.mxu0 0
        %2412 = vmatpush1.bf16.xpose.msra.mxu0 0
        %2413 = vmatprep.subr.bf16.mxu0 0
        %2414 = vmatpush1.bf16.xpose.msra.mxu0 0
        %2415 = vmatprep.subr.bf16.mxu0 0
        %2416 = vmatpush1.bf16.xpose.msra.mxu0 0
        %2417 = vmatprep.subr.bf16.mxu0 0
        %2418 = vmatpush1.bf16.xpose.msra.mxu0 0
        %2419 = vmatprep.subr.bf16.mxu0 0
        %2420 = vmatpush1.bf16.xpose.msra.mxu0 0
        %2421 = vmatprep.mubr.bf16.mxu0 0
        %2422 = vmatmul.mubr.bf16.gmra.mrb[0].mxu0 %v2384
        %v2423 = vpop.f32.mrb[0].mxu0
        %v2424 = vadd.f32 0.0, %v2423
        %v2425 = vpop.f32.mrb[0].mxu0
        %v2426 = vpop.f32.mrb[0].mxu0
        %v2427 = vpop.f32.mrb[0].mxu0
        %2428 = vdwg.mxu0
        %v2429 = vsel %vm563, %v2424, -inf
        %2430 = vmax.xlane.f32.xlu0 %v2429
        %v2431 = vpop.xlane.xlu0 %2430
        %v2432 = vsub.f32 %v2424, %v2431
        %v2433 = vmul.f32 %v2432, 1.442695
        %v2434 = vpow.pop %v2433
        %v2435 = vsel %vm563, %v2434, 0.0
        %2436 = vadd.xlane.f32.xlu0 %v2435
        %v2437 = vpop.xlane.xlu0 %2436
        %v2438 = vrcp.pop %v2437
        %v2439 = vmul.f32 %v2434, %v2438
        %v2440 = vpack.c.bf16 %v2439, %v2439
        %2442 = vrot.lane.b32.xlu0 %v2331, 120
        %v2443 = vpop.permute.xlu0 %2442
        %v2445 = vsel %vm563, %v2440, 0
        %v2448 = vsel %vm626, %v2443, 0
        %2450 = vmatprep.subr.bf16.mxu0 0
        %2451 = vmatpush1.bf16.msra.mxu0 %v2448
        %2452 = vmatprep.subr.bf16.mxu0 0
        %2453 = vmatpush1.bf16.msra.mxu0 0
        %2454 = vmatprep.subr.bf16.mxu0 0
        %2455 = vmatpush1.bf16.msra.mxu0 0
        %2456 = vmatprep.subr.bf16.mxu0 0
        %2457 = vmatpush1.bf16.msra.mxu0 0
        %2458 = vmatprep.subr.bf16.mxu0 0
        %2459 = vmatpush1.bf16.msra.mxu0 0
        %2460 = vmatprep.subr.bf16.mxu0 0
        %2461 = vmatpush1.bf16.msra.mxu0 0
        %2462 = vmatprep.subr.bf16.mxu0 0
        %2463 = vmatpush1.bf16.msra.mxu0 0
        %2464 = vmatprep.subr.bf16.mxu0 0
        %2465 = vmatpush1.bf16.msra.mxu0 0
        %2466 = vmatprep.subr.bf16.mxu0 0
        %2467 = vmatpush1.bf16.msra.mxu0 0
        %2468 = vmatprep.subr.bf16.mxu0 0
        %2469 = vmatpush1.bf16.msra.mxu0 0
        %2470 = vmatprep.subr.bf16.mxu0 0
        %2471 = vmatpush1.bf16.msra.mxu0 0
        %2472 = vmatprep.subr.bf16.mxu0 0
        %2473 = vmatpush1.bf16.msra.mxu0 0
        %2474 = vmatprep.subr.bf16.mxu0 0
        %2475 = vmatpush1.bf16.msra.mxu0 0
        %2476 = vmatprep.subr.bf16.mxu0 0
        %2477 = vmatpush1.bf16.msra.mxu0 0
        %2478 = vmatprep.subr.bf16.mxu0 0
        %2479 = vmatpush1.bf16.msra.mxu0 0
        %2480 = vmatprep.subr.bf16.mxu0 0
        %2481 = vmatpush1.bf16.msra.mxu0 0
        %2482 = vmatprep.mubr.bf16.mxu0 0
        %2483 = vmatmul.mubr.bf16.gmra.mrb[0].mxu0 %v2445
        %v2484 = vpop.f32.mrb[0].mxu0
        %v2485 = vadd.f32 0.0, %v2484
        %v2486 = vpop.f32.mrb[0].mxu0
        %v2487 = vpop.f32.mrb[0].mxu0
        %v2488 = vpop.f32.mrb[0].mxu0
        %2489 = vdwg.mxu0
        %2490 = vrot.lane.b32.xlu0 %v2268, 112
        %v2491 = vpop.permute.xlu0 %2490
        %2492 = vrot.lane.b32.xlu0 %v2269, 48
        %v2493 = vpop.permute.xlu0 %2492
        %v2495 = vsel %vm563, %v2491, 0
        %v2498 = vsel %vm563, %v2493, 0
        %2500 = vmatprep.subr.bf16.mxu0 0
        %2501 = vmatpush1.bf16.xpose.msra.mxu0 %v2498
        %2502 = vmatprep.subr.bf16.mxu0 0
        %2503 = vmatpush1.bf16.xpose.msra.mxu0 0
        %2504 = vmatprep.subr.bf16.mxu0 0
        %2505 = vmatpush1.bf16.xpose.msra.mxu0 0
        %2506 = vmatprep.subr.bf16.mxu0 0
        %2507 = vmatpush1.bf16.xpose.msra.mxu0 0
        %2508 = vmatprep.subr.bf16.mxu0 0
        %2509 = vmatpush1.bf16.xpose.msra.mxu0 0
        %2510 = vmatprep.subr.bf16.mxu0 0
        %2511 = vmatpush1.bf16.xpose.msra.mxu0 0
        %2512 = vmatprep.subr.bf16.mxu0 0
        %2513 = vmatpush1.bf16.xpose.msra.mxu0 0
        %2514 = vmatprep.subr.bf16.mxu0 0
        %2515 = vmatpush1.bf16.xpose.msra.mxu0 0
        %2516 = vmatprep.subr.bf16.mxu0 0
        %2517 = vmatpush1.bf16.xpose.msra.mxu0 0
        %2518 = vmatprep.subr.bf16.mxu0 0
        %2519 = vmatpush1.bf16.xpose.msra.mxu0 0
        %2520 = vmatprep.subr.bf16.mxu0 0
        %2521 = vmatpush1.bf16.xpose.msra.mxu0 0
        %2522 = vmatprep.subr.bf16.mxu0 0
        %2523 = vmatpush1.bf16.xpose.msra.mxu0 0
        %2524 = vmatprep.subr.bf16.mxu0 0
        %2525 = vmatpush1.bf16.xpose.msra.mxu0 0
        %2526 = vmatprep.subr.bf16.mxu0 0
        %2527 = vmatpush1.bf16.xpose.msra.mxu0 0
        %2528 = vmatprep.subr.bf16.mxu0 0
        %2529 = vmatpush1.bf16.xpose.msra.mxu0 0
        %2530 = vmatprep.subr.bf16.mxu0 0
        %2531 = vmatpush1.bf16.xpose.msra.mxu0 0
        %2532 = vmatprep.mubr.bf16.mxu0 0
        %2533 = vmatmul.mubr.bf16.gmra.mrb[0].mxu0 %v2495
        %v2534 = vpop.f32.mrb[0].mxu0
        %v2535 = vadd.f32 0.0, %v2534
        %v2536 = vpop.f32.mrb[0].mxu0
        %v2537 = vpop.f32.mrb[0].mxu0
        %v2538 = vpop.f32.mrb[0].mxu0
        %2539 = vdwg.mxu0
        %v2540 = vsel %vm563, %v2535, -inf
        %2541 = vmax.xlane.f32.xlu0 %v2540
        %v2542 = vpop.xlane.xlu0 %2541
        %v2543 = vsub.f32 %v2535, %v2542
        %v2544 = vmul.f32 %v2543, 1.442695
        %v2545 = vpow.pop %v2544
        %v2546 = vsel %vm563, %v2545, 0.0
        %2547 = vadd.xlane.f32.xlu0 %v2546
        %v2548 = vpop.xlane.xlu0 %2547
        %v2549 = vrcp.pop %v2548
        %v2550 = vmul.f32 %v2545, %v2549
        %v2551 = vpack.c.bf16 %v2550, %v2550
        %2552 = vrot.lane.b32.xlu0 %v2331, 112
        %v2553 = vpop.permute.xlu0 %2552
        %v2555 = vsel %vm563, %v2551, 0
        %v2558 = vsel %vm626, %v2553, 0
        %2560 = vmatprep.subr.bf16.mxu0 0
        %2561 = vmatpush1.bf16.msra.mxu0 %v2558
        %2562 = vmatprep.subr.bf16.mxu0 0
        %2563 = vmatpush1.bf16.msra.mxu0 0
        %2564 = vmatprep.subr.bf16.mxu0 0
        %2565 = vmatpush1.bf16.msra.mxu0 0
        %2566 = vmatprep.subr.bf16.mxu0 0
        %2567 = vmatpush1.bf16.msra.mxu0 0
        %2568 = vmatprep.subr.bf16.mxu0 0
        %2569 = vmatpush1.bf16.msra.mxu0 0
        %2570 = vmatprep.subr.bf16.mxu0 0
        %2571 = vmatpush1.bf16.msra.mxu0 0
        %2572 = vmatprep.subr.bf16.mxu0 0
        %2573 = vmatpush1.bf16.msra.mxu0 0
        %2574 = vmatprep.subr.bf16.mxu0 0
        %2575 = vmatpush1.bf16.msra.mxu0 0
        %2576 = vmatprep.subr.bf16.mxu0 0
        %2577 = vmatpush1.bf16.msra.mxu0 0
        %2578 = vmatprep.subr.bf16.mxu0 0
        %2579 = vmatpush1.bf16.msra.mxu0 0
        %2580 = vmatprep.subr.bf16.mxu0 0
        %2581 = vmatpush1.bf16.msra.mxu0 0
        %2582 = vmatprep.subr.bf16.mxu0 0
        %2583 = vmatpush1.bf16.msra.mxu0 0
        %2584 = vmatprep.subr.bf16.mxu0 0
        %2585 = vmatpush1.bf16.msra.mxu0 0
        %2586 = vmatprep.subr.bf16.mxu0 0
        %2587 = vmatpush1.bf16.msra.mxu0 0
        %2588 = vmatprep.subr.bf16.mxu0 0
        %2589 = vmatpush1.bf16.msra.mxu0 0
        %2590 = vmatprep.subr.bf16.mxu0 0
        %2591 = vmatpush1.bf16.msra.mxu0 0
        %2592 = vmatprep.mubr.bf16.mxu0 0
        %2593 = vmatmul.mubr.bf16.gmra.mrb[0].mxu0 %v2555
        %v2594 = vpop.f32.mrb[0].mxu0
        %v2595 = vadd.f32 0.0, %v2594
        %v2596 = vpop.f32.mrb[0].mxu0
        %v2597 = vpop.f32.mrb[0].mxu0
        %v2598 = vpop.f32.mrb[0].mxu0
        %2599 = vdwg.mxu0
        %2600 = vrot.lane.b32.xlu0 %v2268, 104
        %v2601 = vpop.permute.xlu0 %2600
        %2602 = vrot.lane.b32.xlu0 %v2269, 40
        %v2603 = vpop.permute.xlu0 %2602
        %v2605 = vsel %vm563, %v2601, 0
        %v2608 = vsel %vm563, %v2603, 0
        %2610 = vmatprep.subr.bf16.mxu0 0
        %2611 = vmatpush1.bf16.xpose.msra.mxu0 %v2608
        %2612 = vmatprep.subr.bf16.mxu0 0
        %2613 = vmatpush1.bf16.xpose.msra.mxu0 0
        %2614 = vmatprep.subr.bf16.mxu0 0
        %2615 = vmatpush1.bf16.xpose.msra.mxu0 0
        %2616 = vmatprep.subr.bf16.mxu0 0
        %2617 = vmatpush1.bf16.xpose.msra.mxu0 0
        %2618 = vmatprep.subr.bf16.mxu0 0
        %2619 = vmatpush1.bf16.xpose.msra.mxu0 0
        %2620 = vmatprep.subr.bf16.mxu0 0
        %2621 = vmatpush1.bf16.xpose.msra.mxu0 0
        %2622 = vmatprep.subr.bf16.mxu0 0
        %2623 = vmatpush1.bf16.xpose.msra.mxu0 0
        %2624 = vmatprep.subr.bf16.mxu0 0
        %2625 = vmatpush1.bf16.xpose.msra.mxu0 0
        %2626 = vmatprep.subr.bf16.mxu0 0
        %2627 = vmatpush1.bf16.xpose.msra.mxu0 0
        %2628 = vmatprep.subr.bf16.mxu0 0
        %2629 = vmatpush1.bf16.xpose.msra.mxu0 0
        %2630 = vmatprep.subr.bf16.mxu0 0
        %2631 = vmatpush1.bf16.xpose.msra.mxu0 0
        %2632 = vmatprep.subr.bf16.mxu0 0
        %2633 = vmatpush1.bf16.xpose.msra.mxu0 0
        %2634 = vmatprep.subr.bf16.mxu0 0
        %2635 = vmatpush1.bf16.xpose.msra.mxu0 0
        %2636 = vmatprep.subr.bf16.mxu0 0
        %2637 = vmatpush1.bf16.xpose.msra.mxu0 0
        %2638 = vmatprep.subr.bf16.mxu0 0
        %2639 = vmatpush1.bf16.xpose.msra.mxu0 0
        %2640 = vmatprep.subr.bf16.mxu0 0
        %2641 = vmatpush1.bf16.xpose.msra.mxu0 0
        %2642 = vmatprep.mubr.bf16.mxu0 0
        %2643 = vmatmul.mubr.bf16.gmra.mrb[0].mxu0 %v2605
        %v2644 = vpop.f32.mrb[0].mxu0
        %v2645 = vadd.f32 0.0, %v2644
        %v2646 = vpop.f32.mrb[0].mxu0
        %v2647 = vpop.f32.mrb[0].mxu0
        %v2648 = vpop.f32.mrb[0].mxu0
        %2649 = vdwg.mxu0
        %v2650 = vsel %vm563, %v2645, -inf
        %2651 = vmax.xlane.f32.xlu0 %v2650
        %v2652 = vpop.xlane.xlu0 %2651
        %v2653 = vsub.f32 %v2645, %v2652
        %v2654 = vmul.f32 %v2653, 1.442695
        %v2655 = vpow.pop %v2654
        %v2656 = vsel %vm563, %v2655, 0.0
        %2657 = vadd.xlane.f32.xlu0 %v2656
        %v2658 = vpop.xlane.xlu0 %2657
        %v2659 = vrcp.pop %v2658
        %v2660 = vmul.f32 %v2655, %v2659
        %v2661 = vpack.c.bf16 %v2660, %v2660
        %2662 = vrot.lane.b32.xlu0 %v2331, 104
        %v2663 = vpop.permute.xlu0 %2662
        %v2665 = vsel %vm563, %v2661, 0
        %v2668 = vsel %vm626, %v2663, 0
        %2670 = vmatprep.subr.bf16.mxu0 0
        %2671 = vmatpush1.bf16.msra.mxu0 %v2668
        %2672 = vmatprep.subr.bf16.mxu0 0
        %2673 = vmatpush1.bf16.msra.mxu0 0
        %2674 = vmatprep.subr.bf16.mxu0 0
        %2675 = vmatpush1.bf16.msra.mxu0 0
        %2676 = vmatprep.subr.bf16.mxu0 0
        %2677 = vmatpush1.bf16.msra.mxu0 0
        %2678 = vmatprep.subr.bf16.mxu0 0
        %2679 = vmatpush1.bf16.msra.mxu0 0
        %2680 = vmatprep.subr.bf16.mxu0 0
        %2681 = vmatpush1.bf16.msra.mxu0 0
        %2682 = vmatprep.subr.bf16.mxu0 0
        %2683 = vmatpush1.bf16.msra.mxu0 0
        %2684 = vmatprep.subr.bf16.mxu0 0
        %2685 = vmatpush1.bf16.msra.mxu0 0
        %2686 = vmatprep.subr.bf16.mxu0 0
        %2687 = vmatpush1.bf16.msra.mxu0 0
        %2688 = vmatprep.subr.bf16.mxu0 0
        %2689 = vmatpush1.bf16.msra.mxu0 0
        %2690 = vmatprep.subr.bf16.mxu0 0
        %2691 = vmatpush1.bf16.msra.mxu0 0
        %2692 = vmatprep.subr.bf16.mxu0 0
        %2693 = vmatpush1.bf16.msra.mxu0 0
        %2694 = vmatprep.subr.bf16.mxu0 0
        %2695 = vmatpush1.bf16.msra.mxu0 0
        %2696 = vmatprep.subr.bf16.mxu0 0
        %2697 = vmatpush1.bf16.msra.mxu0 0
        %2698 = vmatprep.subr.bf16.mxu0 0
        %2699 = vmatpush1.bf16.msra.mxu0 0
        %2700 = vmatprep.subr.bf16.mxu0 0
        %2701 = vmatpush1.bf16.msra.mxu0 0
        %2702 = vmatprep.mubr.bf16.mxu0 0
        %2703 = vmatmul.mubr.bf16.gmra.mrb[0].mxu0 %v2665
        %v2704 = vpop.f32.mrb[0].mxu0
        %v2705 = vadd.f32 0.0, %v2704
        %v2706 = vpop.f32.mrb[0].mxu0
        %v2707 = vpop.f32.mrb[0].mxu0
        %v2708 = vpop.f32.mrb[0].mxu0
        %2709 = vdwg.mxu0
        %2710 = vrot.lane.b32.xlu0 %v2268, 96
        %v2711 = vpop.permute.xlu0 %2710
        %2712 = vrot.lane.b32.xlu0 %v2269, 32
        %v2713 = vpop.permute.xlu0 %2712
        %v2715 = vsel %vm563, %v2711, 0
        %v2718 = vsel %vm563, %v2713, 0
        %2720 = vmatprep.subr.bf16.mxu0 0
        %2721 = vmatpush1.bf16.xpose.msra.mxu0 %v2718
        %2722 = vmatprep.subr.bf16.mxu0 0
        %2723 = vmatpush1.bf16.xpose.msra.mxu0 0
        %2724 = vmatprep.subr.bf16.mxu0 0
        %2725 = vmatpush1.bf16.xpose.msra.mxu0 0
        %2726 = vmatprep.subr.bf16.mxu0 0
        %2727 = vmatpush1.bf16.xpose.msra.mxu0 0
        %2728 = vmatprep.subr.bf16.mxu0 0
        %2729 = vmatpush1.bf16.xpose.msra.mxu0 0
        %2730 = vmatprep.subr.bf16.mxu0 0
        %2731 = vmatpush1.bf16.xpose.msra.mxu0 0
        %2732 = vmatprep.subr.bf16.mxu0 0
        %2733 = vmatpush1.bf16.xpose.msra.mxu0 0
        %2734 = vmatprep.subr.bf16.mxu0 0
        %2735 = vmatpush1.bf16.xpose.msra.mxu0 0
        %2736 = vmatprep.subr.bf16.mxu0 0
        %2737 = vmatpush1.bf16.xpose.msra.mxu0 0
        %2738 = vmatprep.subr.bf16.mxu0 0
        %2739 = vmatpush1.bf16.xpose.msra.mxu0 0
        %2740 = vmatprep.subr.bf16.mxu0 0
        %2741 = vmatpush1.bf16.xpose.msra.mxu0 0
        %2742 = vmatprep.subr.bf16.mxu0 0
        %2743 = vmatpush1.bf16.xpose.msra.mxu0 0
        %2744 = vmatprep.subr.bf16.mxu0 0
        %2745 = vmatpush1.bf16.xpose.msra.mxu0 0
        %2746 = vmatprep.subr.bf16.mxu0 0
        %2747 = vmatpush1.bf16.xpose.msra.mxu0 0
        %2748 = vmatprep.subr.bf16.mxu0 0
        %2749 = vmatpush1.bf16.xpose.msra.mxu0 0
        %2750 = vmatprep.subr.bf16.mxu0 0
        %2751 = vmatpush1.bf16.xpose.msra.mxu0 0
        %2752 = vmatprep.mubr.bf16.mxu0 0
        %2753 = vmatmul.mubr.bf16.gmra.mrb[0].mxu0 %v2715
        %v2754 = vpop.f32.mrb[0].mxu0
        %v2755 = vadd.f32 0.0, %v2754
        %v2756 = vpop.f32.mrb[0].mxu0
        %v2757 = vpop.f32.mrb[0].mxu0
        %v2758 = vpop.f32.mrb[0].mxu0
        %2759 = vdwg.mxu0
        %v2760 = vsel %vm563, %v2755, -inf
        %2761 = vmax.xlane.f32.xlu0 %v2760
        %v2762 = vpop.xlane.xlu0 %2761
        %v2763 = vsub.f32 %v2755, %v2762
        %v2764 = vmul.f32 %v2763, 1.442695
        %v2765 = vpow.pop %v2764
        %v2766 = vsel %vm563, %v2765, 0.0
        %2767 = vadd.xlane.f32.xlu0 %v2766
        %v2768 = vpop.xlane.xlu0 %2767
        %v2769 = vrcp.pop %v2768
        %v2770 = vmul.f32 %v2765, %v2769
        %v2771 = vpack.c.bf16 %v2770, %v2770
        %2772 = vrot.lane.b32.xlu0 %v2331, 96
        %v2773 = vpop.permute.xlu0 %2772
        %v2775 = vsel %vm563, %v2771, 0
        %v2778 = vsel %vm626, %v2773, 0
        %2780 = vmatprep.subr.bf16.mxu0 0
        %2781 = vmatpush1.bf16.msra.mxu0 %v2778
        %2782 = vmatprep.subr.bf16.mxu0 0
        %2783 = vmatpush1.bf16.msra.mxu0 0
        %2784 = vmatprep.subr.bf16.mxu0 0
        %2785 = vmatpush1.bf16.msra.mxu0 0
        %2786 = vmatprep.subr.bf16.mxu0 0
        %2787 = vmatpush1.bf16.msra.mxu0 0
        %2788 = vmatprep.subr.bf16.mxu0 0
        %2789 = vmatpush1.bf16.msra.mxu0 0
        %2790 = vmatprep.subr.bf16.mxu0 0
        %2791 = vmatpush1.bf16.msra.mxu0 0
        %2792 = vmatprep.subr.bf16.mxu0 0
        %2793 = vmatpush1.bf16.msra.mxu0 0
        %2794 = vmatprep.subr.bf16.mxu0 0
        %2795 = vmatpush1.bf16.msra.mxu0 0
        %2796 = vmatprep.subr.bf16.mxu0 0
        %2797 = vmatpush1.bf16.msra.mxu0 0
        %2798 = vmatprep.subr.bf16.mxu0 0
        %2799 = vmatpush1.bf16.msra.mxu0 0
        %2800 = vmatprep.subr.bf16.mxu0 0
        %2801 = vmatpush1.bf16.msra.mxu0 0
        %2802 = vmatprep.subr.bf16.mxu0 0
        %2803 = vmatpush1.bf16.msra.mxu0 0
        %2804 = vmatprep.subr.bf16.mxu0 0
        %2805 = vmatpush1.bf16.msra.mxu0 0
        %2806 = vmatprep.subr.bf16.mxu0 0
        %2807 = vmatpush1.bf16.msra.mxu0 0
        %2808 = vmatprep.subr.bf16.mxu0 0
        %2809 = vmatpush1.bf16.msra.mxu0 0
        %2810 = vmatprep.subr.bf16.mxu0 0
        %2811 = vmatpush1.bf16.msra.mxu0 0
        %2812 = vmatprep.mubr.bf16.mxu0 0
        %2813 = vmatmul.mubr.bf16.gmra.mrb[0].mxu0 %v2775
        %v2814 = vpop.f32.mrb[0].mxu0
        %v2815 = vadd.f32 0.0, %v2814
        %v2816 = vpop.f32.mrb[0].mxu0
        %v2817 = vpop.f32.mrb[0].mxu0
        %v2818 = vpop.f32.mrb[0].mxu0
        %2819 = vdwg.mxu0
        %2820 = vrot.lane.b32.xlu0 %v2268, 88
        %v2821 = vpop.permute.xlu0 %2820
        %2822 = vrot.lane.b32.xlu0 %v2269, 24
        %v2823 = vpop.permute.xlu0 %2822
        %v2825 = vsel %vm563, %v2821, 0
        %v2828 = vsel %vm563, %v2823, 0
        %2830 = vmatprep.subr.bf16.mxu0 0
        %2831 = vmatpush1.bf16.xpose.msra.mxu0 %v2828
        %2832 = vmatprep.subr.bf16.mxu0 0
        %2833 = vmatpush1.bf16.xpose.msra.mxu0 0
        %2834 = vmatprep.subr.bf16.mxu0 0
        %2835 = vmatpush1.bf16.xpose.msra.mxu0 0
        %2836 = vmatprep.subr.bf16.mxu0 0
        %2837 = vmatpush1.bf16.xpose.msra.mxu0 0
        %2838 = vmatprep.subr.bf16.mxu0 0
        %2839 = vmatpush1.bf16.xpose.msra.mxu0 0
        %2840 = vmatprep.subr.bf16.mxu0 0
        %2841 = vmatpush1.bf16.xpose.msra.mxu0 0
        %2842 = vmatprep.subr.bf16.mxu0 0
        %2843 = vmatpush1.bf16.xpose.msra.mxu0 0
        %2844 = vmatprep.subr.bf16.mxu0 0
        %2845 = vmatpush1.bf16.xpose.msra.mxu0 0
        %2846 = vmatprep.subr.bf16.mxu0 0
        %2847 = vmatpush1.bf16.xpose.msra.mxu0 0
        %2848 = vmatprep.subr.bf16.mxu0 0
        %2849 = vmatpush1.bf16.xpose.msra.mxu0 0
        %2850 = vmatprep.subr.bf16.mxu0 0
        %2851 = vmatpush1.bf16.xpose.msra.mxu0 0
        %2852 = vmatprep.subr.bf16.mxu0 0
        %2853 = vmatpush1.bf16.xpose.msra.mxu0 0
        %2854 = vmatprep.subr.bf16.mxu0 0
        %2855 = vmatpush1.bf16.xpose.msra.mxu0 0
        %2856 = vmatprep.subr.bf16.mxu0 0
        %2857 = vmatpush1.bf16.xpose.msra.mxu0 0
        %2858 = vmatprep.subr.bf16.mxu0 0
        %2859 = vmatpush1.bf16.xpose.msra.mxu0 0
        %2860 = vmatprep.subr.bf16.mxu0 0
        %2861 = vmatpush1.bf16.xpose.msra.mxu0 0
        %2862 = vmatprep.mubr.bf16.mxu0 0
        %2863 = vmatmul.mubr.bf16.gmra.mrb[0].mxu0 %v2825
        %v2864 = vpop.f32.mrb[0].mxu0
        %v2865 = vadd.f32 0.0, %v2864
        %v2866 = vpop.f32.mrb[0].mxu0
        %v2867 = vpop.f32.mrb[0].mxu0
        %v2868 = vpop.f32.mrb[0].mxu0
        %2869 = vdwg.mxu0
        %v2870 = vsel %vm563, %v2865, -inf
        %2871 = vmax.xlane.f32.xlu0 %v2870
        %v2872 = vpop.xlane.xlu0 %2871
        %v2873 = vsub.f32 %v2865, %v2872
        %v2874 = vmul.f32 %v2873, 1.442695
        %v2875 = vpow.pop %v2874
        %v2876 = vsel %vm563, %v2875, 0.0
        %2877 = vadd.xlane.f32.xlu0 %v2876
        %v2878 = vpop.xlane.xlu0 %2877
        %v2879 = vrcp.pop %v2878
        %v2880 = vmul.f32 %v2875, %v2879
        %v2881 = vpack.c.bf16 %v2880, %v2880
        %2882 = vrot.lane.b32.xlu0 %v2331, 88
        %v2883 = vpop.permute.xlu0 %2882
        %v2885 = vsel %vm563, %v2881, 0
        %v2888 = vsel %vm626, %v2883, 0
        %2890 = vmatprep.subr.bf16.mxu0 0
        %2891 = vmatpush1.bf16.msra.mxu0 %v2888
        %2892 = vmatprep.subr.bf16.mxu0 0
        %2893 = vmatpush1.bf16.msra.mxu0 0
        %2894 = vmatprep.subr.bf16.mxu0 0
        %2895 = vmatpush1.bf16.msra.mxu0 0
        %2896 = vmatprep.subr.bf16.mxu0 0
        %2897 = vmatpush1.bf16.msra.mxu0 0
        %2898 = vmatprep.subr.bf16.mxu0 0
        %2899 = vmatpush1.bf16.msra.mxu0 0
        %2900 = vmatprep.subr.bf16.mxu0 0
        %2901 = vmatpush1.bf16.msra.mxu0 0
        %2902 = vmatprep.subr.bf16.mxu0 0
        %2903 = vmatpush1.bf16.msra.mxu0 0
        %2904 = vmatprep.subr.bf16.mxu0 0
        %2905 = vmatpush1.bf16.msra.mxu0 0
        %2906 = vmatprep.subr.bf16.mxu0 0
        %2907 = vmatpush1.bf16.msra.mxu0 0
        %2908 = vmatprep.subr.bf16.mxu0 0
        %2909 = vmatpush1.bf16.msra.mxu0 0
        %2910 = vmatprep.subr.bf16.mxu0 0
        %2911 = vmatpush1.bf16.msra.mxu0 0
        %2912 = vmatprep.subr.bf16.mxu0 0
        %2913 = vmatpush1.bf16.msra.mxu0 0
        %2914 = vmatprep.subr.bf16.mxu0 0
        %2915 = vmatpush1.bf16.msra.mxu0 0
        %2916 = vmatprep.subr.bf16.mxu0 0
        %2917 = vmatpush1.bf16.msra.mxu0 0
        %2918 = vmatprep.subr.bf16.mxu0 0
        %2919 = vmatpush1.bf16.msra.mxu0 0
        %2920 = vmatprep.subr.bf16.mxu0 0
        %2921 = vmatpush1.bf16.msra.mxu0 0
        %2922 = vmatprep.mubr.bf16.mxu0 0
        %2923 = vmatmul.mubr.bf16.gmra.mrb[0].mxu0 %v2885
        %v2924 = vpop.f32.mrb[0].mxu0
        %v2925 = vadd.f32 0.0, %v2924
        %v2926 = vpop.f32.mrb[0].mxu0
        %v2927 = vpop.f32.mrb[0].mxu0
        %v2928 = vpop.f32.mrb[0].mxu0
        %2929 = vdwg.mxu0
        %2930 = vrot.lane.b32.xlu0 %v2268, 80
        %v2931 = vpop.permute.xlu0 %2930
        %2932 = vrot.lane.b32.xlu0 %v2269, 16
        %v2933 = vpop.permute.xlu0 %2932
        %v2935 = vsel %vm563, %v2931, 0
        %v2938 = vsel %vm563, %v2933, 0
        %2940 = vmatprep.subr.bf16.mxu0 0
        %2941 = vmatpush1.bf16.xpose.msra.mxu0 %v2938
        %2942 = vmatprep.subr.bf16.mxu0 0
        %2943 = vmatpush1.bf16.xpose.msra.mxu0 0
        %2944 = vmatprep.subr.bf16.mxu0 0
        %2945 = vmatpush1.bf16.xpose.msra.mxu0 0
        %2946 = vmatprep.subr.bf16.mxu0 0
        %2947 = vmatpush1.bf16.xpose.msra.mxu0 0
        %2948 = vmatprep.subr.bf16.mxu0 0
        %2949 = vmatpush1.bf16.xpose.msra.mxu0 0
        %2950 = vmatprep.subr.bf16.mxu0 0
        %2951 = vmatpush1.bf16.xpose.msra.mxu0 0
        %2952 = vmatprep.subr.bf16.mxu0 0
        %2953 = vmatpush1.bf16.xpose.msra.mxu0 0
        %2954 = vmatprep.subr.bf16.mxu0 0
        %2955 = vmatpush1.bf16.xpose.msra.mxu0 0
        %2956 = vmatprep.subr.bf16.mxu0 0
        %2957 = vmatpush1.bf16.xpose.msra.mxu0 0
        %2958 = vmatprep.subr.bf16.mxu0 0
        %2959 = vmatpush1.bf16.xpose.msra.mxu0 0
        %2960 = vmatprep.subr.bf16.mxu0 0
        %2961 = vmatpush1.bf16.xpose.msra.mxu0 0
        %2962 = vmatprep.subr.bf16.mxu0 0
        %2963 = vmatpush1.bf16.xpose.msra.mxu0 0
        %2964 = vmatprep.subr.bf16.mxu0 0
        %2965 = vmatpush1.bf16.xpose.msra.mxu0 0
        %2966 = vmatprep.subr.bf16.mxu0 0
        %2967 = vmatpush1.bf16.xpose.msra.mxu0 0
        %2968 = vmatprep.subr.bf16.mxu0 0
        %2969 = vmatpush1.bf16.xpose.msra.mxu0 0
        %2970 = vmatprep.subr.bf16.mxu0 0
        %2971 = vmatpush1.bf16.xpose.msra.mxu0 0
        %2972 = vmatprep.mubr.bf16.mxu0 0
        %2973 = vmatmul.mubr.bf16.gmra.mrb[0].mxu0 %v2935
        %v2974 = vpop.f32.mrb[0].mxu0
        %v2975 = vadd.f32 0.0, %v2974
        %v2976 = vpop.f32.mrb[0].mxu0
        %v2977 = vpop.f32.mrb[0].mxu0
        %v2978 = vpop.f32.mrb[0].mxu0
        %2979 = vdwg.mxu0
        %v2980 = vsel %vm563, %v2975, -inf
        %2981 = vmax.xlane.f32.xlu0 %v2980
        %v2982 = vpop.xlane.xlu0 %2981
        %v2983 = vsub.f32 %v2975, %v2982
        %v2984 = vmul.f32 %v2983, 1.442695
        %v2985 = vpow.pop %v2984
        %v2986 = vsel %vm563, %v2985, 0.0
        %2987 = vadd.xlane.f32.xlu0 %v2986
        %v2988 = vpop.xlane.xlu0 %2987
        %v2989 = vrcp.pop %v2988
        %v2990 = vmul.f32 %v2985, %v2989
        %v2991 = vpack.c.bf16 %v2990, %v2990
        %2992 = vrot.lane.b32.xlu0 %v2331, 80
        %v2993 = vpop.permute.xlu0 %2992
        %v2995 = vsel %vm563, %v2991, 0
        %v2998 = vsel %vm626, %v2993, 0
        %3000 = vmatprep.subr.bf16.mxu0 0
        %3001 = vmatpush1.bf16.msra.mxu0 %v2998
        %3002 = vmatprep.subr.bf16.mxu0 0
        %3003 = vmatpush1.bf16.msra.mxu0 0
        %3004 = vmatprep.subr.bf16.mxu0 0
        %3005 = vmatpush1.bf16.msra.mxu0 0
        %3006 = vmatprep.subr.bf16.mxu0 0
        %3007 = vmatpush1.bf16.msra.mxu0 0
        %3008 = vmatprep.subr.bf16.mxu0 0
        %3009 = vmatpush1.bf16.msra.mxu0 0
        %3010 = vmatprep.subr.bf16.mxu0 0
        %3011 = vmatpush1.bf16.msra.mxu0 0
        %3012 = vmatprep.subr.bf16.mxu0 0
        %3013 = vmatpush1.bf16.msra.mxu0 0
        %3014 = vmatprep.subr.bf16.mxu0 0
        %3015 = vmatpush1.bf16.msra.mxu0 0
        %3016 = vmatprep.subr.bf16.mxu0 0
        %3017 = vmatpush1.bf16.msra.mxu0 0
        %3018 = vmatprep.subr.bf16.mxu0 0
        %3019 = vmatpush1.bf16.msra.mxu0 0
        %3020 = vmatprep.subr.bf16.mxu0 0
        %3021 = vmatpush1.bf16.msra.mxu0 0
        %3022 = vmatprep.subr.bf16.mxu0 0
        %3023 = vmatpush1.bf16.msra.mxu0 0
        %3024 = vmatprep.subr.bf16.mxu0 0
        %3025 = vmatpush1.bf16.msra.mxu0 0
        %3026 = vmatprep.subr.bf16.mxu0 0
        %3027 = vmatpush1.bf16.msra.mxu0 0
        %3028 = vmatprep.subr.bf16.mxu0 0
        %3029 = vmatpush1.bf16.msra.mxu0 0
        %3030 = vmatprep.subr.bf16.mxu0 0
        %3031 = vmatpush1.bf16.msra.mxu0 0
        %3032 = vmatprep.mubr.bf16.mxu0 0
        %3033 = vmatmul.mubr.bf16.gmra.mrb[0].mxu0 %v2995
        %v3034 = vpop.f32.mrb[0].mxu0
        %v3035 = vadd.f32 0.0, %v3034
        %v3036 = vpop.f32.mrb[0].mxu0
        %v3037 = vpop.f32.mrb[0].mxu0
        %v3038 = vpop.f32.mrb[0].mxu0
        %3039 = vdwg.mxu0
        %3040 = vrot.lane.b32.xlu0 %v2268, 72
        %v3041 = vpop.permute.xlu0 %3040
        %3042 = vrot.lane.b32.xlu0 %v2269, 8
        %v3043 = vpop.permute.xlu0 %3042
        %v3045 = vsel %vm563, %v3041, 0
        %v3048 = vsel %vm563, %v3043, 0
        %3050 = vmatprep.subr.bf16.mxu0 0
        %3051 = vmatpush1.bf16.xpose.msra.mxu0 %v3048
        %3052 = vmatprep.subr.bf16.mxu0 0
        %3053 = vmatpush1.bf16.xpose.msra.mxu0 0
        %3054 = vmatprep.subr.bf16.mxu0 0
        %3055 = vmatpush1.bf16.xpose.msra.mxu0 0
        %3056 = vmatprep.subr.bf16.mxu0 0
        %3057 = vmatpush1.bf16.xpose.msra.mxu0 0
        %3058 = vmatprep.subr.bf16.mxu0 0
        %3059 = vmatpush1.bf16.xpose.msra.mxu0 0
        %3060 = vmatprep.subr.bf16.mxu0 0
        %3061 = vmatpush1.bf16.xpose.msra.mxu0 0
        %3062 = vmatprep.subr.bf16.mxu0 0
        %3063 = vmatpush1.bf16.xpose.msra.mxu0 0
        %3064 = vmatprep.subr.bf16.mxu0 0
        %3065 = vmatpush1.bf16.xpose.msra.mxu0 0
        %3066 = vmatprep.subr.bf16.mxu0 0
        %3067 = vmatpush1.bf16.xpose.msra.mxu0 0
        %3068 = vmatprep.subr.bf16.mxu0 0
        %3069 = vmatpush1.bf16.xpose.msra.mxu0 0
        %3070 = vmatprep.subr.bf16.mxu0 0
        %3071 = vmatpush1.bf16.xpose.msra.mxu0 0
        %3072 = vmatprep.subr.bf16.mxu0 0
        %3073 = vmatpush1.bf16.xpose.msra.mxu0 0
        %3074 = vmatprep.subr.bf16.mxu0 0
        %3075 = vmatpush1.bf16.xpose.msra.mxu0 0
        %3076 = vmatprep.subr.bf16.mxu0 0
        %3077 = vmatpush1.bf16.xpose.msra.mxu0 0
        %3078 = vmatprep.subr.bf16.mxu0 0
        %3079 = vmatpush1.bf16.xpose.msra.mxu0 0
        %3080 = vmatprep.subr.bf16.mxu0 0
        %3081 = vmatpush1.bf16.xpose.msra.mxu0 0
        %3082 = vmatprep.mubr.bf16.mxu0 0
        %3083 = vmatmul.mubr.bf16.gmra.mrb[0].mxu0 %v3045
        %v3084 = vpop.f32.mrb[0].mxu0
        %v3085 = vadd.f32 0.0, %v3084
        %v3086 = vpop.f32.mrb[0].mxu0
        %v3087 = vpop.f32.mrb[0].mxu0
        %v3088 = vpop.f32.mrb[0].mxu0
        %3089 = vdwg.mxu0
        %v3090 = vsel %vm563, %v3085, -inf
        %3091 = vmax.xlane.f32.xlu0 %v3090
        %v3092 = vpop.xlane.xlu0 %3091
        %v3093 = vsub.f32 %v3085, %v3092
        %v3094 = vmul.f32 %v3093, 1.442695
        %v3095 = vpow.pop %v3094
        %v3096 = vsel %vm563, %v3095, 0.0
        %3097 = vadd.xlane.f32.xlu0 %v3096
        %v3098 = vpop.xlane.xlu0 %3097
        %v3099 = vrcp.pop %v3098
        %v3100 = vmul.f32 %v3095, %v3099
        %v3101 = vpack.c.bf16 %v3100, %v3100
        %3102 = vrot.lane.b32.xlu0 %v2331, 72
        %v3103 = vpop.permute.xlu0 %3102
        %v3105 = vsel %vm563, %v3101, 0
        %v3108 = vsel %vm626, %v3103, 0
        %3110 = vmatprep.subr.bf16.mxu0 0
        %3111 = vmatpush1.bf16.msra.mxu0 %v3108
        %3112 = vmatprep.subr.bf16.mxu0 0
        %3113 = vmatpush1.bf16.msra.mxu0 0
        %3114 = vmatprep.subr.bf16.mxu0 0
        %3115 = vmatpush1.bf16.msra.mxu0 0
        %3116 = vmatprep.subr.bf16.mxu0 0
        %3117 = vmatpush1.bf16.msra.mxu0 0
        %3118 = vmatprep.subr.bf16.mxu0 0
        %3119 = vmatpush1.bf16.msra.mxu0 0
        %3120 = vmatprep.subr.bf16.mxu0 0
        %3121 = vmatpush1.bf16.msra.mxu0 0
        %3122 = vmatprep.subr.bf16.mxu0 0
        %3123 = vmatpush1.bf16.msra.mxu0 0
        %3124 = vmatprep.subr.bf16.mxu0 0
        %3125 = vmatpush1.bf16.msra.mxu0 0
        %3126 = vmatprep.subr.bf16.mxu0 0
        %3127 = vmatpush1.bf16.msra.mxu0 0
        %3128 = vmatprep.subr.bf16.mxu0 0
        %3129 = vmatpush1.bf16.msra.mxu0 0
        %3130 = vmatprep.subr.bf16.mxu0 0
        %3131 = vmatpush1.bf16.msra.mxu0 0
        %3132 = vmatprep.subr.bf16.mxu0 0
        %3133 = vmatpush1.bf16.msra.mxu0 0
        %3134 = vmatprep.subr.bf16.mxu0 0
        %3135 = vmatpush1.bf16.msra.mxu0 0
        %3136 = vmatprep.subr.bf16.mxu0 0
        %3137 = vmatpush1.bf16.msra.mxu0 0
        %3138 = vmatprep.subr.bf16.mxu0 0
        %3139 = vmatpush1.bf16.msra.mxu0 0
        %3140 = vmatprep.subr.bf16.mxu0 0
        %3141 = vmatpush1.bf16.msra.mxu0 0
        %3142 = vmatprep.mubr.bf16.mxu0 0
        %3143 = vmatmul.mubr.bf16.gmra.mrb[0].mxu0 %v3105
        %v3144 = vpop.f32.mrb[0].mxu0
        %v3145 = vadd.f32 0.0, %v3144
        %v3146 = vpop.f32.mrb[0].mxu0
        %v3147 = vpop.f32.mrb[0].mxu0
        %v3148 = vpop.f32.mrb[0].mxu0
        %3149 = vdwg.mxu0
        %3151 = vrot.lane.b32.xlu0 %v2485, 8
        %v3152 = vpop.permute.xlu0 %3151
        %3155 = vrot.lane.b32.xlu0 %v2595, 16
        %v3156 = vpop.permute.xlu0 %3155
        %3159 = vrot.lane.b32.xlu0 %v2705, 24
        %v3160 = vpop.permute.xlu0 %3159
        %3163 = vrot.lane.b32.xlu0 %v2815, 32
        %v3164 = vpop.permute.xlu0 %3163
        %3167 = vrot.lane.b32.xlu0 %v2925, 40
        %v3168 = vpop.permute.xlu0 %3167
        %3171 = vrot.lane.b32.xlu0 %v3035, 48
        %v3172 = vpop.permute.xlu0 %3171
        %3175 = vrot.lane.b32.xlu0 %v3145, 56
        %v3176 = vpop.permute.xlu0 %3175
        %v3178 = vsel %vm563, %v2373, %v3152
        %v3179 = vsel %vm1471, %v3178, %v3156
        %v3180 = vsel %vm1473, %v3179, %v3160
        %v3181 = vsel %vm1475, %v3180, %v3164
        %v3182 = vsel %vm1477, %v3181, %v3168
        %v3183 = vsel %vm1479, %v3182, %v3172
        %v3184 = vsel %vm1481, %v3183, %v3176
        %s3185 = scalar_lea.vmem [#allocation7], 160
        %v3186 = vld [vmem:[%s3185] sm:$0xf]
        %v3187 = vld [vmem:[%s3185 + $0x4] sm:$0xf]
        %v3188 = vld [vmem:[%s3185 + $0x8] sm:$0xf]
        %v3189 = vld [vmem:[%s3185 + $0xc] sm:$0xf]
        %v3190 = vld [vmem:[%s3185 + $0x10] sm:$0xf]
        %v3191 = vld [vmem:[%s3185 + $0x14] sm:$0xf]
        %v3192 = vld [vmem:[%s3185 + $0x18] sm:$0xf]
        %v3193 = vld [vmem:[%s3185 + $0x1c] sm:$0xf]
        %v3194 = vpack.c.bf16 %v3184, %v3184
        %v3195 = vlaneseq
        %v3196 = vshrl.u32 %v3195, 7
        %v3197 = vsub.s32 0, %v3196
        %v3198 = vrot.slane %v2158, %v3197
        %v3207 = vunpack.c.l.b16 %v3186
        %v3208 = vunpack.c.l.b16 %v3187
        %v3209 = vunpack.c.l.b16 %v3188
        %v3210 = vunpack.c.l.b16 %v3189
        %v3211 = vunpack.c.l.b16 %v3190
        %v3212 = vunpack.c.l.b16 %v3191
        %v3213 = vunpack.c.l.b16 %v3192
        %v3214 = vunpack.c.l.b16 %v3193
        %v3215 = vpack.c.b16 %v3208, %v3207
        %v3216 = vpack.c.b16 %v3210, %v3209
        %v3217 = vpack.c.b16 %v3212, %v3211
        %v3218 = vpack.c.b16 %v3214, %v3213
        %v3224 = vsel %vm512, %v3194, 0
        %3226 = vmatprep.subr.bf16.mxu0 0
        %3227 = vmatpush1.bf16.msra.mxu0 %v3215
        %3228 = vmatprep.subr.bf16.mxu0 0
        %3229 = vmatpush1.bf16.msra.mxu0 %v3216
        %3230 = vmatprep.subr.bf16.mxu0 0
        %3231 = vmatpush1.bf16.msra.mxu0 %v3217
        %3232 = vmatprep.subr.bf16.mxu0 0
        %3233 = vmatpush1.bf16.msra.mxu0 %v3218
        %3234 = vmatprep.subr.bf16.mxu0 0
        %3235 = vmatpush1.bf16.msra.mxu0 0
        %3236 = vmatprep.subr.bf16.mxu0 0
        %3237 = vmatpush1.bf16.msra.mxu0 0
        %3238 = vmatprep.subr.bf16.mxu0 0
        %3239 = vmatpush1.bf16.msra.mxu0 0
        %3240 = vmatprep.subr.bf16.mxu0 0
        %3241 = vmatpush1.bf16.msra.mxu0 0
        %3242 = vmatprep.subr.bf16.mxu0 0
        %3243 = vmatpush1.bf16.msra.mxu0 0
        %3244 = vmatprep.subr.bf16.mxu0 0
        %3245 = vmatpush1.bf16.msra.mxu0 0
        %3246 = vmatprep.subr.bf16.mxu0 0
        %3247 = vmatpush1.bf16.msra.mxu0 0
        %3248 = vmatprep.subr.bf16.mxu0 0
        %3249 = vmatpush1.bf16.msra.mxu0 0
        %3250 = vmatprep.subr.bf16.mxu0 0
        %3251 = vmatpush1.bf16.msra.mxu0 0
        %3252 = vmatprep.subr.bf16.mxu0 0
        %3253 = vmatpush1.bf16.msra.mxu0 0
        %3254 = vmatprep.subr.bf16.mxu0 0
        %3255 = vmatpush1.bf16.msra.mxu0 0
        %3256 = vmatprep.subr.bf16.mxu0 0
        %3257 = vmatpush1.bf16.msra.mxu0 0
        %3258 = vmatprep.mubr.bf16.mxu0 0
        %3259 = vmatmul.mubr.bf16.gmra.mrb[0].mxu0 %v3224
        %v3260 = vpop.f32.mrb[0].mxu0
        %v3261 = vadd.f32 %v3198, %v3260
        %v3262 = vpop.f32.mrb[0].mxu0
        %v3263 = vpop.f32.mrb[0].mxu0
        %v3264 = vpop.f32.mrb[0].mxu0
        %3265 = vdwg.mxu0
        %s3266 = scalar_lea.vmem [#allocation7], 192
        %v3267 = vld [vmem:[%s3266] sm:$0xf]
        %v3268 = vld [vmem:[%s3266 + $0x4] sm:$0xf]
        %v3269 = vld [vmem:[%s3266 + $0x8] sm:$0xf]
        %v3270 = vld [vmem:[%s3266 + $0xc] sm:$0xf]
        %v3271 = vld [vmem:[%s3266 + $0x10] sm:$0xf]
        %v3272 = vld [vmem:[%s3266 + $0x14] sm:$0xf]
        %v3273 = vld [vmem:[%s3266 + $0x18] sm:$0xf]
        %v3274 = vld [vmem:[%s3266 + $0x1c] sm:$0xf]
        %v3275 = vpack.c.bf16 %v3261, %v3261
        %v3276 = vlaneseq
        %v3277 = vshrl.u32 %v3276, 7
        %v3278 = vsub.s32 1, %v3277
        %v3279 = vrot.slane %v2158, %v3278
        %v3288 = vunpack.c.l.b16 %v3267
        %v3289 = vunpack.c.l.b16 %v3268
        %v3290 = vunpack.c.l.b16 %v3269
        %v3291 = vunpack.c.l.b16 %v3270
        %v3292 = vunpack.c.l.b16 %v3271
        %v3293 = vunpack.c.l.b16 %v3272
        %v3294 = vunpack.c.l.b16 %v3273
        %v3295 = vunpack.c.l.b16 %v3274
        %v3296 = vpack.c.b16 %v3289, %v3288
        %v3297 = vpack.c.b16 %v3291, %v3290
        %v3298 = vpack.c.b16 %v3293, %v3292
        %v3299 = vpack.c.b16 %v3295, %v3294
        %v3305 = vsel %vm512, %v3275, 0
        %3307 = vmatprep.subr.bf16.mxu0 0
        %3308 = vmatpush1.bf16.msra.mxu0 %v3296
        %3309 = vmatprep.subr.bf16.mxu0 0
        %3310 = vmatpush1.bf16.msra.mxu0 %v3297
        %3311 = vmatprep.subr.bf16.mxu0 0
        %3312 = vmatpush1.bf16.msra.mxu0 %v3298
        %3313 = vmatprep.subr.bf16.mxu0 0
        %3314 = vmatpush1.bf16.msra.mxu0 %v3299
        %3315 = vmatprep.subr.bf16.mxu0 0
        %3316 = vmatpush1.bf16.msra.mxu0 0
        %3317 = vmatprep.subr.bf16.mxu0 0
        %3318 = vmatpush1.bf16.msra.mxu0 0
        %3319 = vmatprep.subr.bf16.mxu0 0
        %3320 = vmatpush1.bf16.msra.mxu0 0
        %3321 = vmatprep.subr.bf16.mxu0 0
        %3322 = vmatpush1.bf16.msra.mxu0 0
        %3323 = vmatprep.subr.bf16.mxu0 0
        %3324 = vmatpush1.bf16.msra.mxu0 0
        %3325 = vmatprep.subr.bf16.mxu0 0
        %3326 = vmatpush1.bf16.msra.mxu0 0
        %3327 = vmatprep.subr.bf16.mxu0 0
        %3328 = vmatpush1.bf16.msra.mxu0 0
        %3329 = vmatprep.subr.bf16.mxu0 0
        %3330 = vmatpush1.bf16.msra.mxu0 0
        %3331 = vmatprep.subr.bf16.mxu0 0
        %3332 = vmatpush1.bf16.msra.mxu0 0
        %3333 = vmatprep.subr.bf16.mxu0 0
        %3334 = vmatpush1.bf16.msra.mxu0 0
        %3335 = vmatprep.subr.bf16.mxu0 0
        %3336 = vmatpush1.bf16.msra.mxu0 0
        %3337 = vmatprep.subr.bf16.mxu0 0
        %3338 = vmatpush1.bf16.msra.mxu0 0
        %3339 = vmatprep.mubr.bf16.mxu0 0
        %3340 = vmatmul.mubr.bf16.gmra.mrb[0].mxu0 %v3305
        %v3341 = vpop.f32.mrb[0].mxu0
        %v3342 = vadd.f32 %v3279, %v3341
        %v3343 = vpop.f32.mrb[0].mxu0
        %v3344 = vpop.f32.mrb[0].mxu0
        %v3345 = vpop.f32.mrb[0].mxu0
        %3346 = vdwg.mxu0
        %v3347 = vmul.f32 %v3342, %v3342
        %v3348 = vmul.f32 %v3342, %v3347
        %v3349 = vmul.f32 %v3348, 0.044715
        %v3350 = vadd.f32 %v3342, %v3349
        %v3351 = vmul.f32 %v3350, 0.7978846
        %v3352 = vtanh.pop %v3351
        %v3353 = vadd.f32 %v3352, 1.0
        %v3354 = vmul.f32 %v3353, 0.5
        %v3355 = vmul.f32 %v3342, %v3354
        %s3356 = scalar_lea.vmem [#allocation7], 224
        %v3357 = vld [vmem:[%s3356] sm:$0xf]
        %v3358 = vld [vmem:[%s3356 + $0x4] sm:$0xf]
        %v3359 = vld [vmem:[%s3356 + $0x8] sm:$0xf]
        %v3360 = vld [vmem:[%s3356 + $0xc] sm:$0xf]
        %v3361 = vld [vmem:[%s3356 + $0x10] sm:$0xf]
        %v3362 = vld [vmem:[%s3356 + $0x14] sm:$0xf]
        %v3363 = vld [vmem:[%s3356 + $0x18] sm:$0xf]
        %v3364 = vld [vmem:[%s3356 + $0x1c] sm:$0xf]
        %v3365 = vpack.c.bf16 %v3355, %v3355
        %v3366 = vlaneseq
        %v3367 = vshrl.u32 %v3366, 7
        %v3368 = vsub.s32 2, %v3367
        %v3369 = vrot.slane %v2158, %v3368
        %v3378 = vunpack.c.l.b16 %v3357
        %v3379 = vunpack.c.l.b16 %v3358
        %v3380 = vunpack.c.l.b16 %v3359
        %v3381 = vunpack.c.l.b16 %v3360
        %v3382 = vunpack.c.l.b16 %v3361
        %v3383 = vunpack.c.l.b16 %v3362
        %v3384 = vunpack.c.l.b16 %v3363
        %v3385 = vunpack.c.l.b16 %v3364
        %v3386 = vpack.c.b16 %v3379, %v3378
        %v3387 = vpack.c.b16 %v3381, %v3380
        %v3388 = vpack.c.b16 %v3383, %v3382
        %v3389 = vpack.c.b16 %v3385, %v3384
        %v3395 = vsel %vm512, %v3365, 0
        %3397 = vmatprep.subr.bf16.mxu0 0
        %3398 = vmatpush1.bf16.msra.mxu0 %v3386
        %3399 = vmatprep.subr.bf16.mxu0 0
        %3400 = vmatpush1.bf16.msra.mxu0 %v3387
        %3401 = vmatprep.subr.bf16.mxu0 0
        %3402 = vmatpush1.bf16.msra.mxu0 %v3388
        %3403 = vmatprep.subr.bf16.mxu0 0
        %3404 = vmatpush1.bf16.msra.mxu0 %v3389
        %3405 = vmatprep.subr.bf16.mxu0 0
        %3406 = vmatpush1.bf16.msra.mxu0 0
        %3407 = vmatprep.subr.bf16.mxu0 0
        %3408 = vmatpush1.bf16.msra.mxu0 0
        %3409 = vmatprep.subr.bf16.mxu0 0
        %3410 = vmatpush1.bf16.msra.mxu0 0
        %3411 = vmatprep.subr.bf16.mxu0 0
        %3412 = vmatpush1.bf16.msra.mxu0 0
        %3413 = vmatprep.subr.bf16.mxu0 0
        %3414 = vmatpush1.bf16.msra.mxu0 0
        %3415 = vmatprep.subr.bf16.mxu0 0
        %3416 = vmatpush1.bf16.msra.mxu0 0
        %3417 = vmatprep.subr.bf16.mxu0 0
        %3418 = vmatpush1.bf16.msra.mxu0 0
        %3419 = vmatprep.subr.bf16.mxu0 0
        %3420 = vmatpush1.bf16.msra.mxu0 0
        %3421 = vmatprep.subr.bf16.mxu0 0
        %3422 = vmatpush1.bf16.msra.mxu0 0
        %3423 = vmatprep.subr.bf16.mxu0 0
        %3424 = vmatpush1.bf16.msra.mxu0 0
        %3425 = vmatprep.subr.bf16.mxu0 0
        %3426 = vmatpush1.bf16.msra.mxu0 0
        %3427 = vmatprep.subr.bf16.mxu0 0
        %3428 = vmatpush1.bf16.msra.mxu0 0
        %3429 = vmatprep.mubr.bf16.mxu0 0
        %3430 = vmatmul.mubr.bf16.gmra.mrb[0].mxu0 %v3395
        %v3431 = vpop.f32.mrb[0].mxu0
        %v3432 = vadd.f32 %v3369, %v3431
        %v3433 = vpop.f32.mrb[0].mxu0
        %v3434 = vpop.f32.mrb[0].mxu0
        %v3435 = vpop.f32.mrb[0].mxu0
        %3436 = vdwg.mxu0
        %v3437 = vadd.f32 %v3261, %v3432
        %v3438 = vadd.f32 %v2156, %v3437
        %v3439 = vsel %vm512, %v3438, 0.0
        %3440 = vadd.xlane.f32.xlu0 %v3439
        %v3441 = vpop.xlane.xlu0 %3440
        %v3442 = vmul.f32 %v3441, %v1739
        %v3443 = vsub.f32 %v3438, %v3442
        %v3444 = vmul.f32 %v3443, %v3443
        %v3445 = vsel %vm512, %v3444, 0.0
        %3446 = vadd.xlane.f32.xlu0 %v3445
        %v3447 = vpop.xlane.xlu0 %3446
        %v3448 = vmul.f32 %v3447, %v1739
        %v3449 = vadd.f32 %v3448, 1e-05
        %v3450 = vrsqrt.pop %v3449
        %v3451 = vmul.f32 %v3443, %v3450
        %v3452 = vlaneseq
        %v3453 = vshrl.u32 %v3452, 7
        %v3454 = vsub.s32 3, %v3453
        %v3455 = vrot.slane %v2158, %v3454
        %v3456 = vmul.f32 %v3451, %v3455
        %v3457 = vlaneseq
        %v3458 = vshrl.u32 %v3457, 7
        %v3459 = vsub.s32 4, %v3458
        %v3460 = vrot.slane %v2158, %v3459
        %v3461 = vadd.f32 %v3456, %v3460
        %s3462 = scalar_lea.vmem [#allocation8], 32
        %v3463 = vld [vmem:[%s3462] sm:$0xf]
        %v3464 = vld [vmem:[%s3462 + $0x4] sm:$0xf]
        %v3465 = vld [vmem:[%s3462 + $0x8] sm:$0xf]
        %v3466 = vld [vmem:[%s3462 + $0xc] sm:$0xf]
        %v3467 = vld [vmem:[%s3462 + $0x10] sm:$0xf]
        %v3468 = vld [vmem:[%s3462 + $0x14] sm:$0xf]
        %v3469 = vld [vmem:[%s3462 + $0x18] sm:$0xf]
        %v3470 = vld [vmem:[%s3462 + $0x1c] sm:$0xf]
        %s3471 = scalar_lea.vmem %s6, 1
        %v3472 = vld [vmem:[%s3471] sm:$0x1]
        %v3473 = vpack.c.bf16 %v3461, %v3461
        %v3475 = vlaneseq
        %v3476 = vshrl.u32 %v3475, 7
        %v3477 = vsub.s32 0, %v3476
        %v3478 = vrot.slane %v3472, %v3477
        %v3488 = vunpack.c.l.b16 %v3463
        %v3489 = vunpack.c.l.b16 %v3464
        %v3490 = vunpack.c.l.b16 %v3465
        %v3491 = vunpack.c.l.b16 %v3466
        %v3492 = vunpack.c.l.b16 %v3467
        %v3493 = vunpack.c.l.b16 %v3468
        %v3494 = vunpack.c.l.b16 %v3469
        %v3495 = vunpack.c.l.b16 %v3470
        %v3496 = vpack.c.b16 %v3489, %v3488
        %v3497 = vpack.c.b16 %v3491, %v3490
        %v3498 = vpack.c.b16 %v3493, %v3492
        %v3499 = vpack.c.b16 %v3495, %v3494
        %v3505 = vsel %vm512, %v3473, 0
        %3507 = vmatprep.subr.bf16.mxu0 0
        %3508 = vmatpush1.bf16.msra.mxu0 %v3496
        %3509 = vmatprep.subr.bf16.mxu0 0
        %3510 = vmatpush1.bf16.msra.mxu0 %v3497
        %3511 = vmatprep.subr.bf16.mxu0 0
        %3512 = vmatpush1.bf16.msra.mxu0 %v3498
        %3513 = vmatprep.subr.bf16.mxu0 0
        %3514 = vmatpush1.bf16.msra.mxu0 %v3499
        %3515 = vmatprep.subr.bf16.mxu0 0
        %3516 = vmatpush1.bf16.msra.mxu0 0
        %3517 = vmatprep.subr.bf16.mxu0 0
        %3518 = vmatpush1.bf16.msra.mxu0 0
        %3519 = vmatprep.subr.bf16.mxu0 0
        %3520 = vmatpush1.bf16.msra.mxu0 0
        %3521 = vmatprep.subr.bf16.mxu0 0
        %3522 = vmatpush1.bf16.msra.mxu0 0
        %3523 = vmatprep.subr.bf16.mxu0 0
        %3524 = vmatpush1.bf16.msra.mxu0 0
        %3525 = vmatprep.subr.bf16.mxu0 0
        %3526 = vmatpush1.bf16.msra.mxu0 0
        %3527 = vmatprep.subr.bf16.mxu0 0
        %3528 = vmatpush1.bf16.msra.mxu0 0
        %3529 = vmatprep.subr.bf16.mxu0 0
        %3530 = vmatpush1.bf16.msra.mxu0 0
        %3531 = vmatprep.subr.bf16.mxu0 0
        %3532 = vmatpush1.bf16.msra.mxu0 0
        %3533 = vmatprep.subr.bf16.mxu0 0
        %3534 = vmatpush1.bf16.msra.mxu0 0
        %3535 = vmatprep.subr.bf16.mxu0 0
        %3536 = vmatpush1.bf16.msra.mxu0 0
        %3537 = vmatprep.subr.bf16.mxu0 0
        %3538 = vmatpush1.bf16.msra.mxu0 0
        %3539 = vmatprep.mubr.bf16.mxu0 0
        %3540 = vmatmul.mubr.bf16.gmra.mrb[0].mxu0 %v3505
        %v3541 = vpop.f32.mrb[0].mxu0
        %v3542 = vadd.f32 %v3478, %v3541
        %v3543 = vpop.f32.mrb[0].mxu0
        %v3544 = vpop.f32.mrb[0].mxu0
        %v3545 = vpop.f32.mrb[0].mxu0
        %3546 = vdwg.mxu0
        %v3547 = vmul.f32 %v3542, %v3542
        %v3548 = vmul.f32 %v3542, %v3547
        %v3549 = vmul.f32 %v3548, 0.044715
        %v3550 = vadd.f32 %v3542, %v3549
        %v3551 = vmul.f32 %v3550, 0.7978846
        %v3552 = vtanh.pop %v3551
        %v3553 = vadd.f32 %v3552, 1.0
        %v3554 = vmul.f32 %v3553, 0.5
        %v3555 = vmul.f32 %v3542, %v3554
        %s3556 = scalar_lea.vmem %s7, 64
        %v3557 = vld [vmem:[%s3556] sm:$0xf]
        %v3558 = vld [vmem:[%s3556 + $0x4] sm:$0xf]
        %v3559 = vld [vmem:[%s3556 + $0x8] sm:$0xf]
        %v3560 = vld [vmem:[%s3556 + $0xc] sm:$0xf]
        %v3561 = vld [vmem:[%s3556 + $0x10] sm:$0xf]
        %v3562 = vld [vmem:[%s3556 + $0x14] sm:$0xf]
        %v3563 = vld [vmem:[%s3556 + $0x18] sm:$0xf]
        %v3564 = vld [vmem:[%s3556 + $0x1c] sm:$0xf]
        %v3565 = vld [vmem:[%s3556 + $0x20] sm:$0xf]
        %v3566 = vld [vmem:[%s3556 + $0x24] sm:$0xf]
        %v3567 = vld [vmem:[%s3556 + $0x28] sm:$0xf]
        %v3568 = vld [vmem:[%s3556 + $0x2c] sm:$0xf]
        %v3569 = vld [vmem:[%s3556 + $0x30] sm:$0xf]
        %v3570 = vld [vmem:[%s3556 + $0x34] sm:$0xf]
        %v3571 = vld [vmem:[%s3556 + $0x38] sm:$0xf]
        %v3572 = vld [vmem:[%s3556 + $0x3c] sm:$0xf]
        %v3573 = vpack.c.bf16 %v3555, %v3555
        %v3574 = vlaneseq
        %v3575 = vshrl.u32 %v3574, 7
        %v3576 = vsub.s32 5, %v3575
        %v3577 = vrot.slane %v2158, %v3576
        %v3594 = vunpack.c.l.b16 %v3557
        %v3595 = vunpack.c.l.b16 %v3558
        %v3596 = vunpack.c.l.b16 %v3559
        %v3597 = vunpack.c.l.b16 %v3560
        %v3598 = vunpack.c.l.b16 %v3561
        %v3599 = vunpack.c.l.b16 %v3562
        %v3600 = vunpack.c.l.b16 %v3563
        %v3601 = vunpack.c.l.b16 %v3564
        %v3602 = vunpack.c.l.b16 %v3565
        %v3603 = vunpack.c.l.b16 %v3566
        %v3604 = vunpack.c.l.b16 %v3567
        %v3605 = vunpack.c.l.b16 %v3568
        %v3606 = vunpack.c.l.b16 %v3569
        %v3607 = vunpack.c.l.b16 %v3570
        %v3608 = vunpack.c.l.b16 %v3571
        %v3609 = vunpack.c.l.b16 %v3572
        %v3610 = vpack.c.b16 %v3595, %v3594
        %v3611 = vpack.c.b16 %v3597, %v3596
        %v3612 = vpack.c.b16 %v3599, %v3598
        %v3613 = vpack.c.b16 %v3601, %v3600
        %v3614 = vpack.c.b16 %v3603, %v3602
        %v3615 = vpack.c.b16 %v3605, %v3604
        %v3616 = vpack.c.b16 %v3607, %v3606
        %v3617 = vpack.c.b16 %v3609, %v3608
        %3626 = vmatprep.subr.bf16.mxu0 0
        %3627 = vmatpush1.bf16.msra.mxu0 %v3610
        %3628 = vmatprep.subr.bf16.mxu0 0
        %3629 = vmatpush1.bf16.msra.mxu0 %v3611
        %3630 = vmatprep.subr.bf16.mxu0 0
        %3631 = vmatpush1.bf16.msra.mxu0 %v3612
        %3632 = vmatprep.subr.bf16.mxu0 0
        %3633 = vmatpush1.bf16.msra.mxu0 %v3613
        %3634 = vmatprep.subr.bf16.mxu0 0
        %3635 = vmatpush1.bf16.msra.mxu0 %v3614
        %3636 = vmatprep.subr.bf16.mxu0 0
        %3637 = vmatpush1.bf16.msra.mxu0 %v3615
        %3638 = vmatprep.subr.bf16.mxu0 0
        %3639 = vmatpush1.bf16.msra.mxu0 %v3616
        %3640 = vmatprep.subr.bf16.mxu0 0
        %3641 = vmatpush1.bf16.msra.mxu0 %v3617
        %3642 = vmatprep.subr.bf16.mxu0 0
        %3643 = vmatpush1.bf16.msra.mxu0 0
        %3644 = vmatprep.subr.bf16.mxu0 0
        %3645 = vmatpush1.bf16.msra.mxu0 0
        %3646 = vmatprep.subr.bf16.mxu0 0
        %3647 = vmatpush1.bf16.msra.mxu0 0
        %3648 = vmatprep.subr.bf16.mxu0 0
        %3649 = vmatpush1.bf16.msra.mxu0 0
        %3650 = vmatprep.subr.bf16.mxu0 0
        %3651 = vmatpush1.bf16.msra.mxu0 0
        %3652 = vmatprep.subr.bf16.mxu0 0
        %3653 = vmatpush1.bf16.msra.mxu0 0
        %3654 = vmatprep.subr.bf16.mxu0 0
        %3655 = vmatpush1.bf16.msra.mxu0 0
        %3656 = vmatprep.subr.bf16.mxu0 0
        %3657 = vmatpush1.bf16.msra.mxu0 0
        %3658 = vmatprep.mubr.bf16.mxu0 0
        %3659 = vmatmul.mubr.bf16.gmra.mrb[0].mxu0 %v3573
        %v3660 = vpop.f32.mrb[0].mxu0
        %v3661 = vadd.f32 %v3577, %v3660
        %v3662 = vpop.f32.mrb[0].mxu0
        %v3663 = vpop.f32.mrb[0].mxu0
        %v3664 = vpop.f32.mrb[0].mxu0
        %3665 = vdwg.mxu0
        %s3666 = scalar_lea.vmem [#allocation7], 256
        %v3667 = vld [vmem:[%s3666] sm:$0xf]
        %v3668 = vld [vmem:[%s3666 + $0x4] sm:$0xf]
        %v3669 = vld [vmem:[%s3666 + $0x8] sm:$0xf]
        %v3670 = vld [vmem:[%s3666 + $0xc] sm:$0xf]
        %v3671 = vld [vmem:[%s3666 + $0x10] sm:$0xf]
        %v3672 = vld [vmem:[%s3666 + $0x14] sm:$0xf]
        %v3673 = vld [vmem:[%s3666 + $0x18] sm:$0xf]
        %v3674 = vld [vmem:[%s3666 + $0x1c] sm:$0xf]
        %v3675 = vpack.c.bf16 %v3661, %v3661
        %v3676 = vlaneseq
        %v3677 = vshrl.u32 %v3676, 7
        %v3678 = vsub.s32 6, %v3677
        %v3679 = vrot.slane %v2158, %v3678
        %v3688 = vunpack.c.l.b16 %v3667
        %v3689 = vunpack.c.l.b16 %v3668
        %v3690 = vunpack.c.l.b16 %v3669
        %v3691 = vunpack.c.l.b16 %v3670
        %v3692 = vunpack.c.l.b16 %v3671
        %v3693 = vunpack.c.l.b16 %v3672
        %v3694 = vunpack.c.l.b16 %v3673
        %v3695 = vunpack.c.l.b16 %v3674
        %v3696 = vpack.c.b16 %v3689, %v3688
        %v3697 = vpack.c.b16 %v3691, %v3690
        %v3698 = vpack.c.b16 %v3693, %v3692
        %v3699 = vpack.c.b16 %v3695, %v3694
        %v3705 = vsel %vm512, %v3675, 0
        %3707 = vmatprep.subr.bf16.mxu0 0
        %3708 = vmatpush1.bf16.msra.mxu0 %v3696
        %3709 = vmatprep.subr.bf16.mxu0 0
        %3710 = vmatpush1.bf16.msra.mxu0 %v3697
        %3711 = vmatprep.subr.bf16.mxu0 0
        %3712 = vmatpush1.bf16.msra.mxu0 %v3698
        %3713 = vmatprep.subr.bf16.mxu0 0
        %3714 = vmatpush1.bf16.msra.mxu0 %v3699
        %3715 = vmatprep.subr.bf16.mxu0 0
        %3716 = vmatpush1.bf16.msra.mxu0 0
        %3717 = vmatprep.subr.bf16.mxu0 0
        %3718 = vmatpush1.bf16.msra.mxu0 0
        %3719 = vmatprep.subr.bf16.mxu0 0
        %3720 = vmatpush1.bf16.msra.mxu0 0
        %3721 = vmatprep.subr.bf16.mxu0 0
        %3722 = vmatpush1.bf16.msra.mxu0 0
        %3723 = vmatprep.subr.bf16.mxu0 0
        %3724 = vmatpush1.bf16.msra.mxu0 0
        %3725 = vmatprep.subr.bf16.mxu0 0
        %3726 = vmatpush1.bf16.msra.mxu0 0
        %3727 = vmatprep.subr.bf16.mxu0 0
        %3728 = vmatpush1.bf16.msra.mxu0 0
        %3729 = vmatprep.subr.bf16.mxu0 0
        %3730 = vmatpush1.bf16.msra.mxu0 0
        %3731 = vmatprep.subr.bf16.mxu0 0
        %3732 = vmatpush1.bf16.msra.mxu0 0
        %3733 = vmatprep.subr.bf16.mxu0 0
        %3734 = vmatpush1.bf16.msra.mxu0 0
        %3735 = vmatprep.subr.bf16.mxu0 0
        %3736 = vmatpush1.bf16.msra.mxu0 0
        %3737 = vmatprep.subr.bf16.mxu0 0
        %3738 = vmatpush1.bf16.msra.mxu0 0
        %3739 = vmatprep.mubr.bf16.mxu0 0
        %3740 = vmatmul.mubr.bf16.gmra.mrb[0].mxu0 %v3705
        %v3741 = vpop.f32.mrb[0].mxu0
        %v3742 = vadd.f32 %v3679, %v3741
        %v3743 = vpop.f32.mrb[0].mxu0
        %v3744 = vpop.f32.mrb[0].mxu0
        %v3745 = vpop.f32.mrb[0].mxu0
        %3746 = vdwg.mxu0
        %v3747 = vmul.f32 %v3742, %v3742
        %v3748 = vmul.f32 %v3742, %v3747
        %v3749 = vmul.f32 %v3748, 0.044715
        %v3750 = vadd.f32 %v3742, %v3749
        %v3751 = vmul.f32 %v3750, 0.7978846
        %v3752 = vtanh.pop %v3751
        %v3753 = vadd.f32 %v3752, 1.0
        %v3754 = vmul.f32 %v3753, 0.5
        %v3755 = vmul.f32 %v3742, %v3754
        %s3756 = scalar_lea.vmem [#allocation7], 288
        %v3757 = vld [vmem:[%s3756] sm:$0xf]
        %v3758 = vld [vmem:[%s3756 + $0x4] sm:$0xf]
        %v3759 = vld [vmem:[%s3756 + $0x8] sm:$0xf]
        %v3760 = vld [vmem:[%s3756 + $0xc] sm:$0xf]
        %v3761 = vld [vmem:[%s3756 + $0x10] sm:$0xf]
        %v3762 = vld [vmem:[%s3756 + $0x14] sm:$0xf]
        %v3763 = vld [vmem:[%s3756 + $0x18] sm:$0xf]
        %v3764 = vld [vmem:[%s3756 + $0x1c] sm:$0xf]
        %v3765 = vpack.c.bf16 %v3755, %v3755
        %v3766 = vlaneseq
        %v3767 = vshrl.u32 %v3766, 7
        %v3768 = vsub.s32 7, %v3767
        %v3769 = vrot.slane %v2158, %v3768
        %v3778 = vunpack.c.l.b16 %v3757
        %v3779 = vunpack.c.l.b16 %v3758
        %v3780 = vunpack.c.l.b16 %v3759
        %v3781 = vunpack.c.l.b16 %v3760
        %v3782 = vunpack.c.l.b16 %v3761
        %v3783 = vunpack.c.l.b16 %v3762
        %v3784 = vunpack.c.l.b16 %v3763
        %v3785 = vunpack.c.l.b16 %v3764
        %v3786 = vpack.c.b16 %v3779, %v3778
        %v3787 = vpack.c.b16 %v3781, %v3780
        %v3788 = vpack.c.b16 %v3783, %v3782
        %v3789 = vpack.c.b16 %v3785, %v3784
        %v3795 = vsel %vm512, %v3765, 0
        %3797 = vmatprep.subr.bf16.mxu0 0
        %3798 = vmatpush1.bf16.msra.mxu0 %v3786
        %3799 = vmatprep.subr.bf16.mxu0 0
        %3800 = vmatpush1.bf16.msra.mxu0 %v3787
        %3801 = vmatprep.subr.bf16.mxu0 0
        %3802 = vmatpush1.bf16.msra.mxu0 %v3788
        %3803 = vmatprep.subr.bf16.mxu0 0
        %3804 = vmatpush1.bf16.msra.mxu0 %v3789
        %3805 = vmatprep.subr.bf16.mxu0 0
        %3806 = vmatpush1.bf16.msra.mxu0 0
        %3807 = vmatprep.subr.bf16.mxu0 0
        %3808 = vmatpush1.bf16.msra.mxu0 0
        %3809 = vmatprep.subr.bf16.mxu0 0
        %3810 = vmatpush1.bf16.msra.mxu0 0
        %3811 = vmatprep.subr.bf16.mxu0 0
        %3812 = vmatpush1.bf16.msra.mxu0 0
        %3813 = vmatprep.subr.bf16.mxu0 0
        %3814 = vmatpush1.bf16.msra.mxu0 0
        %3815 = vmatprep.subr.bf16.mxu0 0
        %3816 = vmatpush1.bf16.msra.mxu0 0
        %3817 = vmatprep.subr.bf16.mxu0 0
        %3818 = vmatpush1.bf16.msra.mxu0 0
        %3819 = vmatprep.subr.bf16.mxu0 0
        %3820 = vmatpush1.bf16.msra.mxu0 0
        %3821 = vmatprep.subr.bf16.mxu0 0
        %3822 = vmatpush1.bf16.msra.mxu0 0
        %3823 = vmatprep.subr.bf16.mxu0 0
        %3824 = vmatpush1.bf16.msra.mxu0 0
        %3825 = vmatprep.subr.bf16.mxu0 0
        %3826 = vmatpush1.bf16.msra.mxu0 0
        %3827 = vmatprep.subr.bf16.mxu0 0
        %3828 = vmatpush1.bf16.msra.mxu0 0
        %3829 = vmatprep.mubr.bf16.mxu0 0
        %3830 = vmatmul.mubr.bf16.gmra.mrb[0].mxu0 %v3795
        %v3831 = vpop.f32.mrb[0].mxu0
        %v3832 = vadd.f32 %v3769, %v3831
        %v3833 = vpop.f32.mrb[0].mxu0
        %v3834 = vpop.f32.mrb[0].mxu0
        %v3835 = vpop.f32.mrb[0].mxu0
        %3836 = vdwg.mxu0
        %v3837 = vadd.f32 %v3661, %v3832
        %v3838 = vadd.f32 %v3461, %v3837
        %v3839 = vsel %vm512, %v3838, 0.0
        %3840 = vadd.xlane.f32.xlu0 %v3839
        %v3841 = vpop.xlane.xlu0 %3840
        %v3842 = vmul.f32 %v3841, %v1739
        %v3843 = vsub.f32 %v3838, %v3842
        %v3844 = vmul.f32 %v3843, %v3843
        %v3845 = vsel %vm512, %v3844, 0.0
        %3846 = vadd.xlane.f32.xlu0 %v3845
        %v3847 = vpop.xlane.xlu0 %3846
        %v3848 = vmul.f32 %v3847, %v1739
        %v3849 = vadd.f32 %v3848, 1e-05
        %v3850 = vrsqrt.pop %v3849
        %v3851 = vmul.f32 %v3843, %v3850
        %v3852 = vlaneseq
        %v3853 = vshrl.u32 %v3852, 7
        %v3854 = vsub.s32 0, %v3853
        %v3855 = vrot.slane %v2159, %v3854
        %v3856 = vmul.f32 %v3851, %v3855
        %v3857 = vlaneseq
        %v3858 = vshrl.u32 %v3857, 7
        %v3859 = vsub.s32 1, %v3858
        %v3860 = vrot.slane %v2159, %v3859
        %v3861 = vadd.f32 %v3856, %v3860
        %v3862 = vld [vmem:[%s10] sm:$0x1]
        %v3863 = vld [vmem:[%s9] sm:$0xff]
        %v3864 = vmul.f32 %v3861, %v3863
        %v3865 = vsel %vm512, %v3864, 0.0
        %3866 = vadd.xlane.f32.xlu0 %v3865
        %v3867 = vpop.xlane.xlu0 %3866
        %v3868 = vrot.slane %v3867, 4
        %v3869 = vadd.f32 %v3867, %v3868
        %v3870 = vrot.slane %v3869, 2
        %v3871 = vadd.f32 %v3869, %v3870
        %v3872 = vrot.slane %v3871, 1
        %v3873 = vadd.f32 %v3871, %v3872
        %s3874 = scalar_lea.vmem %s9, 8
        %v3875 = vld [vmem:[%s3874] sm:$0xff]
        %v3876 = vmul.f32 %v3861, %v3875
        %v3877 = vsel %vm512, %v3876, 0.0
        %3878 = vadd.xlane.f32.xlu0 %v3877
        %v3879 = vpop.xlane.xlu0 %3878
        %v3880 = vrot.slane %v3879, 4
        %v3881 = vadd.f32 %v3879, %v3880
        %v3882 = vrot.slane %v3881, 2
        %v3883 = vadd.f32 %v3881, %v3882
        %v3884 = vrot.slane %v3883, 1
        %v3885 = vadd.f32 %v3883, %v3884
        %vm3886 = vcmask 7168
        %v3887 = vsel %vm3886, %v3873, %v3885
        %v3888 = vadd.f32 %v3862, %v3887
        %vm3889 = vcmask 8192
        %3890 = vst.msk [vmem:[%s444] sm:$0x1] %vm3889, %v3888
        %s3891 = sand.u32 %s274, 1
        %s3892 = scalar_lea.sflag [#allocation4], %s3891
        %s3893 = sand.u32 %s274, 1
        %s3894 = scalar_lea.vmem [#allocation10], %s3893
        // Predicated region
        $region81: #{tpu_custom_call.1} parent=63 // pred_check
          %p3895 = pneg %p284
        $region82: #{tpu_custom_call.1} parent=63 // pred_check_branch
          %3897 = sbr.rel (%p3895) target = $region84
        $region83: #{tpu_custom_call.1} parent=63 // pred_region
          %s3899 = ssub.s32 16, 16
          %3900 = vsyncadd %s3892, %s3899
          %s3901 = smul.addr %s30, 16
          %s3902 = scalar_lea.hbm %s11, %s3901
          %s3904 = sshll.u32 %s3894, 4
          %s3905 = int_to_ptr.vmem [resolvable:$true] %s3904
          %3907 = dma.vmem_to_hbm [thread:$0]  %s3905, 16, %s3902, %s3892
        $region84: #{tpu_custom_call.1} parent=63 // pred_fallthru
          _
      $region64: #{tpu_custom_call.1} parent=5 // pred_fallthru
        _
      %p3908 = scmp.le.s32.totalorder 2, %s25
      // Predicated region
      $region85: #{tpu_custom_call.1} parent=5 // pred_check
        %p3909 = pneg %p3908
      $region86: #{tpu_custom_call.1} parent=5 // pred_check_branch
        %3911 = sbr.rel (%p3909) target = $region88
      $region87: #{tpu_custom_call.1} parent=5 // pred_region
        %s3912 = ssub.s32 %s25, 2
        // Predicated region
        $region89: #{tpu_custom_call.1} parent=87 // pred_check
          %p3913 = pneg %p290
        $region90: #{tpu_custom_call.1} parent=87 // pred_check_branch
          %3915 = sbr.rel (%p3913) target = $region92
        $region91: #{tpu_custom_call.1} parent=87 // pred_region
          %s3916 = sand.u32 %s275, 1
          %s3917 = scalar_lea.sflag [#allocation4], %s3916
          %s3918 = sand.u32 %s275, 1
          %s3919 = scalar_lea.vmem [#allocation10], %s3918
          %3920 = dma.done %s3917, 16
        $region92: #{tpu_custom_call.1} parent=87 // pred_fallthru
          _
      $region88: #{tpu_custom_call.1} parent=5 // pred_fallthru
        _
    $region6: #{tpu_custom_call.1} parent=1 // loop_footer
      %s29 = sadd.s32 1, %s25
    $region7: #{tpu_custom_call.1} parent=1 // loop_footer_branch
      %24 = sbr.rel target = $region3
    $region8: #{tpu_custom_call.1} parent=1 // loop_exit
      _
    %3921 = vsyncpa [#allocation3], 1
    %s3922 = scalar_lea.sflag [#allocation3], 1
    %3923 = vsyncpa %s3922, 1
    %3924 = vsyncpa [#allocation6], 1
    %3925 = vsyncpa [#allocation9], 1
    %3926 = vsyncpa [#allocation4], 1
    %s3927 = scalar_lea.sflag [#allocation4], 1
    %3928 = vsyncpa %s3927, 1

</llo_original>
